<compile_context>
chip_gen: v6e
topology: v6e:2x2x1
jax: 0.10.0
libtpu: 0.0.40
codegen_flags: <defaults>
</compile_context>

<pallas_src>
import numpy as np

import jax
import jax.numpy as jnp
from jax.experimental import pallas as pl
from jax.experimental.pallas import tpu as pltpu


# -----------------------------------------------------------------------------
# Fused LeNet-5 kernel (one image per grid step)
# -----------------------------------------------------------------------------
def _lenet5_kernel(x_ref,                               # [1, 32, 96]  f32 (NHWC, W*C flattened)
                   kb1_ref, cb1_ref, hp1_ref,           # conv1 banded wts / tiled bias / H-pool
                   kb2_ref, cb2_ref, hp2_ref,           # conv2 banded wts / tiled bias / H-pool
                   w1h_ref, fb1_ref,                    # fc1 (split per pooled row) + bias
                   w2_ref, fb2_ref, w3_ref, fb3_ref,    # fc2 / fc3 (+128-lane padded) + biases
                   o_ref):                              # [1, 1, 128]  f32 logits (cols >=10 are 0)

    def conv_stage(lhs_rows, kb_ref, bias_ref, hp_ref):
        # lhs_rows[di]: [Ho, W*C] bf16 row-slice for kernel row di.
        # kb_ref[di*2 + tj]: [W*C, W2*OC] banded weight (width-conv + width-pool tap tj).
        # bias_ref: [1, W2*OC] f32 (bias tiled over w2).
        # hp_ref:   [H2, Ho] f32 0/1 matrix summing the two height-pool taps.
        taps = []
        for tj in range(2):
            acc = None
            for di in range(5):
                m = jnp.dot(lhs_rows[di], kb_ref[di * 2 + tj],
                            preferred_element_type=jnp.float32)
                acc = m if acc is None else acc + m
            # ReLU before pooling (matches pool(relu(conv + b))).
            taps.append(jnp.maximum(acc + bias_ref[...], 0.0))
        s = (taps[0] + taps[1]) * 0.25                       # [Ho, W2*OC] f32
        return jnp.dot(hp_ref[...], s, preferred_element_type=jnp.float32)  # [H2, W2*OC]

    # ---- conv1 + ReLU + 2x2 avg-pool ----------------------------------------
    lhs1 = [x_ref[0, di:di + 28, :].astype(jnp.bfloat16) for di in range(5)]   # 5 x [28, 96]
    pooled1 = conv_stage(lhs1, kb1_ref, cb1_ref, hp1_ref)                      # [14, 84] f32

    # ---- conv2 + ReLU + 2x2 avg-pool (consumes VMEM-resident pooled1) -------
    lhs2 = [pooled1[di:di + 10, :].astype(jnp.bfloat16) for di in range(5)]    # 5 x [10, 84]
    pooled2 = conv_stage(lhs2, kb2_ref, cb2_ref, hp2_ref)                      # [5, 80] f32

    # ---- fc1 (+ReLU): flatten handled by per-row weight slices ---------------
    h = None
    for hh in range(5):
        m = jnp.dot(pooled2[hh:hh + 1, :].astype(jnp.bfloat16), w1h_ref[hh],
                    preferred_element_type=jnp.float32)
        h = m if h is None else h + m
    h = jnp.maximum(h + fb1_ref[...], 0.0).astype(jnp.bfloat16)                # [1, 120]

    # ---- fc2 (+ReLU), fc3 -----------------------------------------------------
    h = jnp.dot(h, w2_ref[...], preferred_element_type=jnp.float32) + fb2_ref[...]
    h = jnp.maximum(h, 0.0).astype(jnp.bfloat16)                               # [1, 84]
    logits = jnp.dot(h, w3_ref[...], preferred_element_type=jnp.float32) + fb3_ref[...]
    o_ref[...] = logits.reshape(o_ref.shape)                                   # [1, 1, 128]


# -----------------------------------------------------------------------------
# Forward wrapper: one pallas_call for the whole network, grid over images
# -----------------------------------------------------------------------------
def lenet5_forward(x_nchw, prep):
    B = x_nchw.shape[0]
    assert x_nchw.shape[1:] == (3, 32, 32), "LeNet-5 fc1 requires 3x32x32 inputs"
    # NCHW -> NHWC, flatten (W, C) into 96 lanes.  Input stays f32 (12 KB/img).
    x = jnp.transpose(x_nchw, (0, 2, 3, 1)).reshape(B, 32, 32 * 3).astype(jnp.float32)

    const = lambda *blk: pl.BlockSpec(blk, lambda b: (0,) * len(blk))

    out = pl.pallas_call(
        _lenet5_kernel,
        out_shape=jax.ShapeDtypeStruct((B, 1, 128), jnp.float32),
        grid=(B,),
        in_specs=[
            pl.BlockSpec((1, 32, 96), lambda b: (b, 0, 0)),   # image
            const(10, 96, 84),                                # conv1 banded weights (bf16)
            const(1, 84),                                     # conv1 bias tiled over w2 (f32)
            const(14, 28),                                    # conv1 height-pool matrix (f32)
            const(10, 84, 80),                                # conv2 banded weights (bf16)
            const(1, 80),                                     # conv2 bias tiled over w2 (f32)
            const(5, 10),                                     # conv2 height-pool matrix (f32)
            const(5, 80, 120),                                # fc1 weights split per pooled row
            const(1, 120),                                    # fc1 bias
            const(120, 84),                                   # fc2 weights
            const(1, 84),                                     # fc2 bias
            const(84, 128),                                   # fc3 weights (lane-padded to 128)
            const(1, 128),                                    # fc3 bias (lane-padded)
        ],
        out_specs=pl.BlockSpec((1, 1, 128), lambda b: (b, 0, 0)),
        compiler_params=pltpu.CompilerParams(dimension_semantics=("parallel",)),
    )(x, prep["kb1"], prep["cb1"], prep["hp1"],
      prep["kb2"], prep["cb2"], prep["hp2"],
      prep["w1h"], prep["fb1"], prep["w2"], prep["fb2"], prep["w3"], prep["fb3"])
    return out[:, 0, :10]


# -----------------------------------------------------------------------------
# One-time parameter preparation (banded conv matrices, fc permutation, padding)
# -----------------------------------------------------------------------------
def prepare_params(params):
    def banded(w, W_in, W2):
        # w: [OC, IC, KH, KW] (PyTorch layout).  Build, for each (kernel row di,
        # width-pool tap tj), a [W_in*IC, W2*OC] matrix so that
        #   conv_out[h, 2*w2+tj, oc] = sum_di  X2[h+di, :] @ Kb[di, tj]
        # with X2 = NHWC image rows flattened to W_in*IC lanes.
        w = np.asarray(w, np.float32)
        oc, ic, kh, kw = w.shape
        WC = W_in * ic
        mats = np.zeros((kh, 2, WC, W2 * oc), np.float32)
        for di in range(kh):
            for tj in range(2):
                for w2 in range(W2):
                    for dj in range(kw):
                        r0 = (2 * w2 + tj + dj) * ic
                        c0 = w2 * oc
                        mats[di, tj, r0:r0 + ic, c0:c0 + oc] = w[:, :, di, dj].T
        return jnp.asarray(mats.reshape(kh * 2, WC, W2 * oc), jnp.bfloat16)

    def hpool(H2):
        # [H2, 2*H2] 0/1 matrix summing the two height-pool taps.
        return jnp.asarray(np.kron(np.eye(H2, dtype=np.float32),
                                   np.ones((1, 2), np.float32)), jnp.float32)

    def tiled_bias(b, reps):
        return jnp.asarray(np.tile(np.asarray(b, np.float32), reps)[None, :], jnp.float32)

    kb1 = banded(params["conv1_w"], 32, 14)                 # [10, 96, 84]
    cb1 = tiled_bias(params["conv1_b"], 14)                 # [1, 84]
    kb2 = banded(params["conv2_w"], 14, 5)                  # [10, 84, 80]
    cb2 = tiled_bias(params["conv2_b"], 5)                  # [1, 80]

    # fc1 consumes torch.flatten of NCHW [B,16,5,5] (index c*25 + h*5 + w); our
    # pooled2 activation is [5 rows(h), 80 lanes(w*16+c)], so split fc1 per h
    # and permute its input columns once, here.
    w1 = np.asarray(params["fc1_w"], np.float32).reshape(120, 16, 5, 5)   # [o,c,h,w]
    w1h = np.transpose(w1, (2, 3, 1, 0)).reshape(5, 80, 120)              # [h, w*16+c, o]
    fb1 = jnp.asarray(np.asarray(params["fc1_b"], np.float32)[None, :], jnp.float32)

    w2 = jnp.asarray(np.asarray(params["fc2_w"], np.float32).T, jnp.bfloat16)   # [120, 84]
    fb2 = jnp.asarray(np.asarray(params["fc2_b"], np.float32)[None, :], jnp.float32)

    w3 = np.zeros((84, 128), np.float32)
    w3[:, :10] = np.asarray(params["fc3_w"], np.float32).T
    fb3 = np.zeros((1, 128), np.float32)
    fb3[0, :10] = np.asarray(params["fc3_b"], np.float32)

    return {
        "kb1": kb1, "cb1": cb1, "hp1": hpool(14),
        "kb2": kb2, "cb2": cb2, "hp2": hpool(5),
        "w1h": jnp.asarray(w1h, jnp.bfloat16), "fb1": fb1,
        "w2": w2, "fb2": fb2,
        "w3": jnp.asarray(w3, jnp.bfloat16), "fb3": jnp.asarray(fb3, jnp.float32),
    }


# -----------------------------------------------------------------------------
# Pure-JAX f32 reference (loose numerical self-check)
# -----------------------------------------------------------------------------
def lenet5_reference(x_nchw, params):
    dn = ("NCHW", "OIHW", "NCHW")

    def block(x, w, b):
        y = jax.lax.conv_general_dilated(x, w, (1, 1), "VALID", dimension_numbers=dn)
        y = jnp.maximum(y + b[None, :, None, None], 0.0)
        B, C, H, W = y.shape
        return y.reshape(B, C, H // 2, 2, W // 2, 2).mean(axis=(3, 5))

    y = block(x_nchw, params["conv1_w"], params["conv1_b"])
    y = block(y, params["conv2_w"], params["conv2_b"])
    y = y.reshape(y.shape[0], -1)
    y = jnp.maximum(y @ params["fc1_w"].T + params["fc1_b"], 0.0)
    y = jnp.maximum(y @ params["fc2_w"].T + params["fc2_b"], 0.0)
    return y @ params["fc3_w"].T + params["fc3_b"]


# -----------------------------------------------------------------------------
# Deterministic parameter init.  The module's __init__ explicitly calls
# kaiming_uniform_(nonlinearity='relu') on the weights (bound = sqrt(6/fan_in));
# biases keep the nn.Conv2d/nn.Linear default U(-1/sqrt(fan_in), 1/sqrt(fan_in)).
# -----------------------------------------------------------------------------
def _kaiming_uniform(key, shape, fan_in):
    bound = jnp.sqrt(6.0 / fan_in)
    return jax.random.uniform(key, shape, jnp.float32, -bound, bound)


def _bias_uniform(key, shape, fan_in):
    bound = 1.0 / jnp.sqrt(fan_in)
    return jax.random.uniform(key, shape, jnp.float32, -bound, bound)


def init_params(key):
    ks = jax.random.split(key, 10)
    return {
        "conv1_w": _kaiming_uniform(ks[0], (6, 3, 5, 5), 3 * 5 * 5),
        "conv1_b": _bias_uniform(ks[1], (6,), 3 * 5 * 5),
        "conv2_w": _kaiming_uniform(ks[2], (16, 6, 5, 5), 6 * 5 * 5),
        "conv2_b": _bias_uniform(ks[3], (16,), 6 * 5 * 5),
        "fc1_w": _kaiming_uniform(ks[4], (120, 400), 400),
        "fc1_b": _bias_uniform(ks[5], (120,), 400),
        "fc2_w": _kaiming_uniform(ks[6], (84, 120), 120),
        "fc2_b": _bias_uniform(ks[7], (84,), 120),
        "fc3_w": _kaiming_uniform(ks[8], (10, 84), 84),
        "fc3_b": _bias_uniform(ks[9], (10,), 84),
    }


if __name__ == "__main__":
    key = jax.random.PRNGKey(0)
    k_param, k_x = jax.random.split(key)
    params = init_params(k_param)
    prep = prepare_params(params)
    # CIFAR-10 shaped input (32x32 is required by fc1's 16*5*5 input size).
    x = jax.random.normal(k_x, (2, 3, 32, 32), jnp.float32)

    fwd = jax.jit(lenet5_forward)
    out = jax.block_until_ready(fwd(x, prep))
    assert out.shape == (2, 10) and out.dtype == jnp.float32

    # Loose check vs. f32 reference (bf16 MXU operands => small expected drift).
    ref = lenet5_reference(x, params)
    err = float(jnp.max(jnp.abs(out - ref)))
    scale = float(jnp.max(jnp.abs(ref))) + 1e-6
    assert err <= 0.05 * scale + 0.1, f"mismatch: max|diff|={err}, ref scale={scale}"

    print("KERNEL_OK")
</pallas_src>

<mosaic_0001>
module attributes {stable_mosaic.version = 11 : i64} {
  func.func @_lenet5_kernel(%arg0: i32, %arg1: memref<1x32x96xf32, #tpu.memory_space<vmem>>, %arg2: memref<10x96x84xbf16, #tpu.memory_space<vmem>>, %arg3: memref<1x84xf32, #tpu.memory_space<vmem>>, %arg4: memref<14x28xf32, #tpu.memory_space<vmem>>, %arg5: memref<10x84x80xbf16, #tpu.memory_space<vmem>>, %arg6: memref<1x80xf32, #tpu.memory_space<vmem>>, %arg7: memref<5x10xf32, #tpu.memory_space<vmem>>, %arg8: memref<5x80x120xbf16, #tpu.memory_space<vmem>>, %arg9: memref<1x120xf32, #tpu.memory_space<vmem>>, %arg10: memref<120x84xbf16, #tpu.memory_space<vmem>>, %arg11: memref<1x84xf32, #tpu.memory_space<vmem>>, %arg12: memref<84x128xbf16, #tpu.memory_space<vmem>>, %arg13: memref<1x128xf32, #tpu.memory_space<vmem>>, %arg14: memref<1x1x128xf32, #tpu.memory_space<vmem>>) attributes {dimension_semantics = [#tpu.dimension_semantics<parallel>], iteration_bounds = array<i64: 2>, scalar_prefetch = 0 : i64, scratch_operands = 0 : i64, tpu.core_type = #tpu.core_type<tc>, window_params = [{transform_indices = @transform_0, window_bounds = array<i64: 1, 32, 96>}, {pipeline_mode = #tpu.pipeline_mode<synchronous>, transform_indices = @transform_1, window_bounds = array<i64: 10, 96, 84>}, {pipeline_mode = #tpu.pipeline_mode<synchronous>, transform_indices = @transform_2, window_bounds = array<i64: 1, 84>}, {pipeline_mode = #tpu.pipeline_mode<synchronous>, transform_indices = @transform_3, window_bounds = array<i64: 14, 28>}, {pipeline_mode = #tpu.pipeline_mode<synchronous>, transform_indices = @transform_4, window_bounds = array<i64: 10, 84, 80>}, {pipeline_mode = #tpu.pipeline_mode<synchronous>, transform_indices = @transform_5, window_bounds = array<i64: 1, 80>}, {pipeline_mode = #tpu.pipeline_mode<synchronous>, transform_indices = @transform_6, window_bounds = array<i64: 5, 10>}, {pipeline_mode = #tpu.pipeline_mode<synchronous>, transform_indices = @transform_7, window_bounds = array<i64: 5, 80, 120>}, {pipeline_mode = #tpu.pipeline_mode<synchronous>, transform_indices = @transform_8, window_bounds = array<i64: 1, 120>}, {pipeline_mode = #tpu.pipeline_mode<synchronous>, transform_indices = @transform_9, window_bounds = array<i64: 120, 84>}, {pipeline_mode = #tpu.pipeline_mode<synchronous>, transform_indices = @transform_10, window_bounds = array<i64: 1, 84>}, {pipeline_mode = #tpu.pipeline_mode<synchronous>, transform_indices = @transform_11, window_bounds = array<i64: 84, 128>}, {pipeline_mode = #tpu.pipeline_mode<synchronous>, transform_indices = @transform_12, window_bounds = array<i64: 1, 128>}, {transform_indices = @transform_13, window_bounds = array<i64: 1, 1, 128>}]} {
    %c0 = arith.constant 0 : index
    %c0_0 = arith.constant 0 : index
    %c0_1 = arith.constant 0 : index
    %0 = vector.load %arg1[%c0, %c0_0, %c0_1] : memref<1x32x96xf32, #tpu.memory_space<vmem>>, vector<1x28x96xf32>
    %1 = vector.shape_cast %0 : vector<1x28x96xf32> to vector<28x96xf32>
    %2 = arith.truncf %1 : vector<28x96xf32> to vector<28x96xbf16>
    %c0_2 = arith.constant 0 : index
    %c1 = arith.constant 1 : index
    %c0_3 = arith.constant 0 : index
    %3 = vector.load %arg1[%c0_2, %c1, %c0_3] : memref<1x32x96xf32, #tpu.memory_space<vmem>>, vector<1x28x96xf32>
    %4 = vector.shape_cast %3 : vector<1x28x96xf32> to vector<28x96xf32>
    %5 = arith.truncf %4 : vector<28x96xf32> to vector<28x96xbf16>
    %c0_4 = arith.constant 0 : index
    %c2 = arith.constant 2 : index
    %c0_5 = arith.constant 0 : index
    %6 = vector.load %arg1[%c0_4, %c2, %c0_5] : memref<1x32x96xf32, #tpu.memory_space<vmem>>, vector<1x28x96xf32>
    %7 = vector.shape_cast %6 : vector<1x28x96xf32> to vector<28x96xf32>
    %8 = arith.truncf %7 : vector<28x96xf32> to vector<28x96xbf16>
    %c0_6 = arith.constant 0 : index
    %c3 = arith.constant 3 : index
    %c0_7 = arith.constant 0 : index
    %9 = vector.load %arg1[%c0_6, %c3, %c0_7] : memref<1x32x96xf32, #tpu.memory_space<vmem>>, vector<1x28x96xf32>
    %10 = vector.shape_cast %9 : vector<1x28x96xf32> to vector<28x96xf32>
    %11 = arith.truncf %10 : vector<28x96xf32> to vector<28x96xbf16>
    %c0_8 = arith.constant 0 : index
    %c4 = arith.constant 4 : index
    %c0_9 = arith.constant 0 : index
    %12 = vector.load %arg1[%c0_8, %c4, %c0_9] : memref<1x32x96xf32, #tpu.memory_space<vmem>>, vector<1x28x96xf32>
    %13 = vector.shape_cast %12 : vector<1x28x96xf32> to vector<28x96xf32>
    %14 = arith.truncf %13 : vector<28x96xf32> to vector<28x96xbf16>
    %c0_10 = arith.constant 0 : index
    %c0_11 = arith.constant 0 : index
    %c0_12 = arith.constant 0 : index
    %15 = vector.load %arg2[%c0_10, %c0_11, %c0_12] : memref<10x96x84xbf16, #tpu.memory_space<vmem>>, vector<1x96x84xbf16>
    %16 = vector.shape_cast %15 : vector<1x96x84xbf16> to vector<96x84xbf16>
    %cst = arith.constant dense<0.000000e+00> : vector<28x84xf32>
    %17 = tpu.matmul %2, %16, %cst {dimension_numbers = #tpu.dot_dimension_numbers<[1], [0], [0], [1], [0, 0, 1, 1], [], []>} : vector<28x96xbf16>, vector<96x84xbf16>, vector<28x84xf32> -> vector<28x84xf32>
    %c2_13 = arith.constant 2 : index
    %c0_14 = arith.constant 0 : index
    %c0_15 = arith.constant 0 : index
    %18 = vector.load %arg2[%c2_13, %c0_14, %c0_15] : memref<10x96x84xbf16, #tpu.memory_space<vmem>>, vector<1x96x84xbf16>
    %19 = vector.shape_cast %18 : vector<1x96x84xbf16> to vector<96x84xbf16>
    %cst_16 = arith.constant dense<0.000000e+00> : vector<28x84xf32>
    %20 = tpu.matmul %5, %19, %cst_16 {dimension_numbers = #tpu.dot_dimension_numbers<[1], [0], [0], [1], [0, 0, 1, 1], [], []>} : vector<28x96xbf16>, vector<96x84xbf16>, vector<28x84xf32> -> vector<28x84xf32>
    %21 = arith.addf %17, %20 : vector<28x84xf32>
    %c4_17 = arith.constant 4 : index
    %c0_18 = arith.constant 0 : index
    %c0_19 = arith.constant 0 : index
    %22 = vector.load %arg2[%c4_17, %c0_18, %c0_19] : memref<10x96x84xbf16, #tpu.memory_space<vmem>>, vector<1x96x84xbf16>
    %23 = vector.shape_cast %22 : vector<1x96x84xbf16> to vector<96x84xbf16>
    %cst_20 = arith.constant dense<0.000000e+00> : vector<28x84xf32>
    %24 = tpu.matmul %8, %23, %cst_20 {dimension_numbers = #tpu.dot_dimension_numbers<[1], [0], [0], [1], [0, 0, 1, 1], [], []>} : vector<28x96xbf16>, vector<96x84xbf16>, vector<28x84xf32> -> vector<28x84xf32>
    %25 = arith.addf %21, %24 : vector<28x84xf32>
    %c6 = arith.constant 6 : index
    %c0_21 = arith.constant 0 : index
    %c0_22 = arith.constant 0 : index
    %26 = vector.load %arg2[%c6, %c0_21, %c0_22] : memref<10x96x84xbf16, #tpu.memory_space<vmem>>, vector<1x96x84xbf16>
    %27 = vector.shape_cast %26 : vector<1x96x84xbf16> to vector<96x84xbf16>
    %cst_23 = arith.constant dense<0.000000e+00> : vector<28x84xf32>
    %28 = tpu.matmul %11, %27, %cst_23 {dimension_numbers = #tpu.dot_dimension_numbers<[1], [0], [0], [1], [0, 0, 1, 1], [], []>} : vector<28x96xbf16>, vector<96x84xbf16>, vector<28x84xf32> -> vector<28x84xf32>
    %29 = arith.addf %25, %28 : vector<28x84xf32>
    %c8 = arith.constant 8 : index
    %c0_24 = arith.constant 0 : index
    %c0_25 = arith.constant 0 : index
    %30 = vector.load %arg2[%c8, %c0_24, %c0_25] : memref<10x96x84xbf16, #tpu.memory_space<vmem>>, vector<1x96x84xbf16>
    %31 = vector.shape_cast %30 : vector<1x96x84xbf16> to vector<96x84xbf16>
    %cst_26 = arith.constant dense<0.000000e+00> : vector<28x84xf32>
    %32 = tpu.matmul %14, %31, %cst_26 {dimension_numbers = #tpu.dot_dimension_numbers<[1], [0], [0], [1], [0, 0, 1, 1], [], []>} : vector<28x96xbf16>, vector<96x84xbf16>, vector<28x84xf32> -> vector<28x84xf32>
    %33 = arith.addf %29, %32 : vector<28x84xf32>
    %c0_27 = arith.constant 0 : index
    %c0_28 = arith.constant 0 : index
    %34 = vector.load %arg3[%c0_27, %c0_28] : memref<1x84xf32, #tpu.memory_space<vmem>>, vector<1x84xf32>
    %35 = vector.broadcast %34 : vector<1x84xf32> to vector<28x84xf32>
    %36 = arith.addf %33, %35 : vector<28x84xf32>
    %cst_29 = arith.constant 0.000000e+00 : f32
    %37 = vector.broadcast %cst_29 : f32 to vector<28x84xf32>
    %38 = arith.maximumf %36, %37 : vector<28x84xf32>
    %c1_30 = arith.constant 1 : index
    %c0_31 = arith.constant 0 : index
    %c0_32 = arith.constant 0 : index
    %39 = vector.load %arg2[%c1_30, %c0_31, %c0_32] : memref<10x96x84xbf16, #tpu.memory_space<vmem>>, vector<1x96x84xbf16>
    %40 = vector.shape_cast %39 : vector<1x96x84xbf16> to vector<96x84xbf16>
    %cst_33 = arith.constant dense<0.000000e+00> : vector<28x84xf32>
    %41 = tpu.matmul %2, %40, %cst_33 {dimension_numbers = #tpu.dot_dimension_numbers<[1], [0], [0], [1], [0, 0, 1, 1], [], []>} : vector<28x96xbf16>, vector<96x84xbf16>, vector<28x84xf32> -> vector<28x84xf32>
    %c3_34 = arith.constant 3 : index
    %c0_35 = arith.constant 0 : index
    %c0_36 = arith.constant 0 : index
    %42 = vector.load %arg2[%c3_34, %c0_35, %c0_36] : memref<10x96x84xbf16, #tpu.memory_space<vmem>>, vector<1x96x84xbf16>
    %43 = vector.shape_cast %42 : vector<1x96x84xbf16> to vector<96x84xbf16>
    %cst_37 = arith.constant dense<0.000000e+00> : vector<28x84xf32>
    %44 = tpu.matmul %5, %43, %cst_37 {dimension_numbers = #tpu.dot_dimension_numbers<[1], [0], [0], [1], [0, 0, 1, 1], [], []>} : vector<28x96xbf16>, vector<96x84xbf16>, vector<28x84xf32> -> vector<28x84xf32>
    %45 = arith.addf %41, %44 : vector<28x84xf32>
    %c5 = arith.constant 5 : index
    %c0_38 = arith.constant 0 : index
    %c0_39 = arith.constant 0 : index
    %46 = vector.load %arg2[%c5, %c0_38, %c0_39] : memref<10x96x84xbf16, #tpu.memory_space<vmem>>, vector<1x96x84xbf16>
    %47 = vector.shape_cast %46 : vector<1x96x84xbf16> to vector<96x84xbf16>
    %cst_40 = arith.constant dense<0.000000e+00> : vector<28x84xf32>
    %48 = tpu.matmul %8, %47, %cst_40 {dimension_numbers = #tpu.dot_dimension_numbers<[1], [0], [0], [1], [0, 0, 1, 1], [], []>} : vector<28x96xbf16>, vector<96x84xbf16>, vector<28x84xf32> -> vector<28x84xf32>
    %49 = arith.addf %45, %48 : vector<28x84xf32>
    %c7 = arith.constant 7 : index
    %c0_41 = arith.constant 0 : index
    %c0_42 = arith.constant 0 : index
    %50 = vector.load %arg2[%c7, %c0_41, %c0_42] : memref<10x96x84xbf16, #tpu.memory_space<vmem>>, vector<1x96x84xbf16>
    %51 = vector.shape_cast %50 : vector<1x96x84xbf16> to vector<96x84xbf16>
    %cst_43 = arith.constant dense<0.000000e+00> : vector<28x84xf32>
    %52 = tpu.matmul %11, %51, %cst_43 {dimension_numbers = #tpu.dot_dimension_numbers<[1], [0], [0], [1], [0, 0, 1, 1], [], []>} : vector<28x96xbf16>, vector<96x84xbf16>, vector<28x84xf32> -> vector<28x84xf32>
    %53 = arith.addf %49, %52 : vector<28x84xf32>
    %c9 = arith.constant 9 : index
    %c0_44 = arith.constant 0 : index
    %c0_45 = arith.constant 0 : index
    %54 = vector.load %arg2[%c9, %c0_44, %c0_45] : memref<10x96x84xbf16, #tpu.memory_space<vmem>>, vector<1x96x84xbf16>
    %55 = vector.shape_cast %54 : vector<1x96x84xbf16> to vector<96x84xbf16>
    %cst_46 = arith.constant dense<0.000000e+00> : vector<28x84xf32>
    %56 = tpu.matmul %14, %55, %cst_46 {dimension_numbers = #tpu.dot_dimension_numbers<[1], [0], [0], [1], [0, 0, 1, 1], [], []>} : vector<28x96xbf16>, vector<96x84xbf16>, vector<28x84xf32> -> vector<28x84xf32>
    %57 = arith.addf %53, %56 : vector<28x84xf32>
    %c0_47 = arith.constant 0 : index
    %c0_48 = arith.constant 0 : index
    %58 = vector.load %arg3[%c0_47, %c0_48] : memref<1x84xf32, #tpu.memory_space<vmem>>, vector<1x84xf32>
    %59 = vector.broadcast %58 : vector<1x84xf32> to vector<28x84xf32>
    %60 = arith.addf %57, %59 : vector<28x84xf32>
    %cst_49 = arith.constant 0.000000e+00 : f32
    %61 = vector.broadcast %cst_49 : f32 to vector<28x84xf32>
    %62 = arith.maximumf %60, %61 : vector<28x84xf32>
    %63 = arith.addf %38, %62 : vector<28x84xf32>
    %cst_50 = arith.constant 2.500000e-01 : f32
    %64 = vector.broadcast %cst_50 : f32 to vector<28x84xf32>
    %65 = arith.mulf %63, %64 : vector<28x84xf32>
    %c0_51 = arith.constant 0 : index
    %c0_52 = arith.constant 0 : index
    %66 = vector.load %arg4[%c0_51, %c0_52] : memref<14x28xf32, #tpu.memory_space<vmem>>, vector<14x28xf32>
    %cst_53 = arith.constant dense<0.000000e+00> : vector<14x84xf32>
    %67 = tpu.matmul %66, %65, %cst_53 {dimension_numbers = #tpu.dot_dimension_numbers<[1], [0], [0], [1], [0, 0, 1, 1], [], []>} : vector<14x28xf32>, vector<28x84xf32>, vector<14x84xf32> -> vector<14x84xf32>
    %68 = vector.extract_strided_slice %67 {offsets = [0, 0], sizes = [10, 84], strides = [1, 1]} : vector<14x84xf32> to vector<10x84xf32>
    %69 = arith.truncf %68 : vector<10x84xf32> to vector<10x84xbf16>
    %70 = vector.extract_strided_slice %67 {offsets = [1, 0], sizes = [10, 84], strides = [1, 1]} : vector<14x84xf32> to vector<10x84xf32>
    %71 = arith.truncf %70 : vector<10x84xf32> to vector<10x84xbf16>
    %72 = vector.extract_strided_slice %67 {offsets = [2, 0], sizes = [10, 84], strides = [1, 1]} : vector<14x84xf32> to vector<10x84xf32>
    %73 = arith.truncf %72 : vector<10x84xf32> to vector<10x84xbf16>
    %74 = vector.extract_strided_slice %67 {offsets = [3, 0], sizes = [10, 84], strides = [1, 1]} : vector<14x84xf32> to vector<10x84xf32>
    %75 = arith.truncf %74 : vector<10x84xf32> to vector<10x84xbf16>
    %76 = vector.extract_strided_slice %67 {offsets = [4, 0], sizes = [10, 84], strides = [1, 1]} : vector<14x84xf32> to vector<10x84xf32>
    %77 = arith.truncf %76 : vector<10x84xf32> to vector<10x84xbf16>
    %c0_54 = arith.constant 0 : index
    %c0_55 = arith.constant 0 : index
    %c0_56 = arith.constant 0 : index
    %78 = vector.load %arg5[%c0_54, %c0_55, %c0_56] : memref<10x84x80xbf16, #tpu.memory_space<vmem>>, vector<1x84x80xbf16>
    %79 = vector.shape_cast %78 : vector<1x84x80xbf16> to vector<84x80xbf16>
    %cst_57 = arith.constant dense<0.000000e+00> : vector<10x80xf32>
    %80 = tpu.matmul %69, %79, %cst_57 {dimension_numbers = #tpu.dot_dimension_numbers<[1], [0], [0], [1], [0, 0, 1, 1], [], []>} : vector<10x84xbf16>, vector<84x80xbf16>, vector<10x80xf32> -> vector<10x80xf32>
    %c2_58 = arith.constant 2 : index
    %c0_59 = arith.constant 0 : index
    %c0_60 = arith.constant 0 : index
    %81 = vector.load %arg5[%c2_58, %c0_59, %c0_60] : memref<10x84x80xbf16, #tpu.memory_space<vmem>>, vector<1x84x80xbf16>
    %82 = vector.shape_cast %81 : vector<1x84x80xbf16> to vector<84x80xbf16>
    %cst_61 = arith.constant dense<0.000000e+00> : vector<10x80xf32>
    %83 = tpu.matmul %71, %82, %cst_61 {dimension_numbers = #tpu.dot_dimension_numbers<[1], [0], [0], [1], [0, 0, 1, 1], [], []>} : vector<10x84xbf16>, vector<84x80xbf16>, vector<10x80xf32> -> vector<10x80xf32>
    %84 = arith.addf %80, %83 : vector<10x80xf32>
    %c4_62 = arith.constant 4 : index
    %c0_63 = arith.constant 0 : index
    %c0_64 = arith.constant 0 : index
    %85 = vector.load %arg5[%c4_62, %c0_63, %c0_64] : memref<10x84x80xbf16, #tpu.memory_space<vmem>>, vector<1x84x80xbf16>
    %86 = vector.shape_cast %85 : vector<1x84x80xbf16> to vector<84x80xbf16>
    %cst_65 = arith.constant dense<0.000000e+00> : vector<10x80xf32>
    %87 = tpu.matmul %73, %86, %cst_65 {dimension_numbers = #tpu.dot_dimension_numbers<[1], [0], [0], [1], [0, 0, 1, 1], [], []>} : vector<10x84xbf16>, vector<84x80xbf16>, vector<10x80xf32> -> vector<10x80xf32>
    %88 = arith.addf %84, %87 : vector<10x80xf32>
    %c6_66 = arith.constant 6 : index
    %c0_67 = arith.constant 0 : index
    %c0_68 = arith.constant 0 : index
    %89 = vector.load %arg5[%c6_66, %c0_67, %c0_68] : memref<10x84x80xbf16, #tpu.memory_space<vmem>>, vector<1x84x80xbf16>
    %90 = vector.shape_cast %89 : vector<1x84x80xbf16> to vector<84x80xbf16>
    %cst_69 = arith.constant dense<0.000000e+00> : vector<10x80xf32>
    %91 = tpu.matmul %75, %90, %cst_69 {dimension_numbers = #tpu.dot_dimension_numbers<[1], [0], [0], [1], [0, 0, 1, 1], [], []>} : vector<10x84xbf16>, vector<84x80xbf16>, vector<10x80xf32> -> vector<10x80xf32>
    %92 = arith.addf %88, %91 : vector<10x80xf32>
    %c8_70 = arith.constant 8 : index
    %c0_71 = arith.constant 0 : index
    %c0_72 = arith.constant 0 : index
    %93 = vector.load %arg5[%c8_70, %c0_71, %c0_72] : memref<10x84x80xbf16, #tpu.memory_space<vmem>>, vector<1x84x80xbf16>
    %94 = vector.shape_cast %93 : vector<1x84x80xbf16> to vector<84x80xbf16>
    %cst_73 = arith.constant dense<0.000000e+00> : vector<10x80xf32>
    %95 = tpu.matmul %77, %94, %cst_73 {dimension_numbers = #tpu.dot_dimension_numbers<[1], [0], [0], [1], [0, 0, 1, 1], [], []>} : vector<10x84xbf16>, vector<84x80xbf16>, vector<10x80xf32> -> vector<10x80xf32>
    %96 = arith.addf %92, %95 : vector<10x80xf32>
    %c0_74 = arith.constant 0 : index
    %c0_75 = arith.constant 0 : index
    %97 = vector.load %arg6[%c0_74, %c0_75] : memref<1x80xf32, #tpu.memory_space<vmem>>, vector<1x80xf32>
    %98 = vector.broadcast %97 : vector<1x80xf32> to vector<10x80xf32>
    %99 = arith.addf %96, %98 : vector<10x80xf32>
    %cst_76 = arith.constant 0.000000e+00 : f32
    %100 = vector.broadcast %cst_76 : f32 to vector<10x80xf32>
    %101 = arith.maximumf %99, %100 : vector<10x80xf32>
    %c1_77 = arith.constant 1 : index
    %c0_78 = arith.constant 0 : index
    %c0_79 = arith.constant 0 : index
    %102 = vector.load %arg5[%c1_77, %c0_78, %c0_79] : memref<10x84x80xbf16, #tpu.memory_space<vmem>>, vector<1x84x80xbf16>
    %103 = vector.shape_cast %102 : vector<1x84x80xbf16> to vector<84x80xbf16>
    %cst_80 = arith.constant dense<0.000000e+00> : vector<10x80xf32>
    %104 = tpu.matmul %69, %103, %cst_80 {dimension_numbers = #tpu.dot_dimension_numbers<[1], [0], [0], [1], [0, 0, 1, 1], [], []>} : vector<10x84xbf16>, vector<84x80xbf16>, vector<10x80xf32> -> vector<10x80xf32>
    %c3_81 = arith.constant 3 : index
    %c0_82 = arith.constant 0 : index
    %c0_83 = arith.constant 0 : index
    %105 = vector.load %arg5[%c3_81, %c0_82, %c0_83] : memref<10x84x80xbf16, #tpu.memory_space<vmem>>, vector<1x84x80xbf16>
    %106 = vector.shape_cast %105 : vector<1x84x80xbf16> to vector<84x80xbf16>
    %cst_84 = arith.constant dense<0.000000e+00> : vector<10x80xf32>
    %107 = tpu.matmul %71, %106, %cst_84 {dimension_numbers = #tpu.dot_dimension_numbers<[1], [0], [0], [1], [0, 0, 1, 1], [], []>} : vector<10x84xbf16>, vector<84x80xbf16>, vector<10x80xf32> -> vector<10x80xf32>
    %108 = arith.addf %104, %107 : vector<10x80xf32>
    %c5_85 = arith.constant 5 : index
    %c0_86 = arith.constant 0 : index
    %c0_87 = arith.constant 0 : index
    %109 = vector.load %arg5[%c5_85, %c0_86, %c0_87] : memref<10x84x80xbf16, #tpu.memory_space<vmem>>, vector<1x84x80xbf16>
    %110 = vector.shape_cast %109 : vector<1x84x80xbf16> to vector<84x80xbf16>
    %cst_88 = arith.constant dense<0.000000e+00> : vector<10x80xf32>
    %111 = tpu.matmul %73, %110, %cst_88 {dimension_numbers = #tpu.dot_dimension_numbers<[1], [0], [0], [1], [0, 0, 1, 1], [], []>} : vector<10x84xbf16>, vector<84x80xbf16>, vector<10x80xf32> -> vector<10x80xf32>
    %112 = arith.addf %108, %111 : vector<10x80xf32>
    %c7_89 = arith.constant 7 : index
    %c0_90 = arith.constant 0 : index
    %c0_91 = arith.constant 0 : index
    %113 = vector.load %arg5[%c7_89, %c0_90, %c0_91] : memref<10x84x80xbf16, #tpu.memory_space<vmem>>, vector<1x84x80xbf16>
    %114 = vector.shape_cast %113 : vector<1x84x80xbf16> to vector<84x80xbf16>
    %cst_92 = arith.constant dense<0.000000e+00> : vector<10x80xf32>
    %115 = tpu.matmul %75, %114, %cst_92 {dimension_numbers = #tpu.dot_dimension_numbers<[1], [0], [0], [1], [0, 0, 1, 1], [], []>} : vector<10x84xbf16>, vector<84x80xbf16>, vector<10x80xf32> -> vector<10x80xf32>
    %116 = arith.addf %112, %115 : vector<10x80xf32>
    %c9_93 = arith.constant 9 : index
    %c0_94 = arith.constant 0 : index
    %c0_95 = arith.constant 0 : index
    %117 = vector.load %arg5[%c9_93, %c0_94, %c0_95] : memref<10x84x80xbf16, #tpu.memory_space<vmem>>, vector<1x84x80xbf16>
    %118 = vector.shape_cast %117 : vector<1x84x80xbf16> to vector<84x80xbf16>
    %cst_96 = arith.constant dense<0.000000e+00> : vector<10x80xf32>
    %119 = tpu.matmul %77, %118, %cst_96 {dimension_numbers = #tpu.dot_dimension_numbers<[1], [0], [0], [1], [0, 0, 1, 1], [], []>} : vector<10x84xbf16>, vector<84x80xbf16>, vector<10x80xf32> -> vector<10x80xf32>
    %120 = arith.addf %116, %119 : vector<10x80xf32>
    %c0_97 = arith.constant 0 : index
    %c0_98 = arith.constant 0 : index
    %121 = vector.load %arg6[%c0_97, %c0_98] : memref<1x80xf32, #tpu.memory_space<vmem>>, vector<1x80xf32>
    %122 = vector.broadcast %121 : vector<1x80xf32> to vector<10x80xf32>
    %123 = arith.addf %120, %122 : vector<10x80xf32>
    %cst_99 = arith.constant 0.000000e+00 : f32
    %124 = vector.broadcast %cst_99 : f32 to vector<10x80xf32>
    %125 = arith.maximumf %123, %124 : vector<10x80xf32>
    %126 = arith.addf %101, %125 : vector<10x80xf32>
    %cst_100 = arith.constant 2.500000e-01 : f32
    %127 = vector.broadcast %cst_100 : f32 to vector<10x80xf32>
    %128 = arith.mulf %126, %127 : vector<10x80xf32>
    %c0_101 = arith.constant 0 : index
    %c0_102 = arith.constant 0 : index
    %129 = vector.load %arg7[%c0_101, %c0_102] : memref<5x10xf32, #tpu.memory_space<vmem>>, vector<5x10xf32>
    %cst_103 = arith.constant dense<0.000000e+00> : vector<5x80xf32>
    %130 = tpu.matmul %129, %128, %cst_103 {dimension_numbers = #tpu.dot_dimension_numbers<[1], [0], [0], [1], [0, 0, 1, 1], [], []>} : vector<5x10xf32>, vector<10x80xf32>, vector<5x80xf32> -> vector<5x80xf32>
    %131 = vector.extract_strided_slice %130 {offsets = [0, 0], sizes = [1, 80], strides = [1, 1]} : vector<5x80xf32> to vector<1x80xf32>
    %132 = arith.truncf %131 : vector<1x80xf32> to vector<1x80xbf16>
    %c0_104 = arith.constant 0 : index
    %c0_105 = arith.constant 0 : index
    %c0_106 = arith.constant 0 : index
    %133 = vector.load %arg8[%c0_104, %c0_105, %c0_106] : memref<5x80x120xbf16, #tpu.memory_space<vmem>>, vector<1x80x120xbf16>
    %134 = vector.shape_cast %133 : vector<1x80x120xbf16> to vector<80x120xbf16>
    %cst_107 = arith.constant dense<0.000000e+00> : vector<1x120xf32>
    %135 = tpu.matmul %132, %134, %cst_107 {dimension_numbers = #tpu.dot_dimension_numbers<[1], [0], [0], [1], [0, 0, 1, 1], [], []>} : vector<1x80xbf16>, vector<80x120xbf16>, vector<1x120xf32> -> vector<1x120xf32>
    %136 = vector.extract_strided_slice %130 {offsets = [1, 0], sizes = [1, 80], strides = [1, 1]} : vector<5x80xf32> to vector<1x80xf32>
    %137 = arith.truncf %136 : vector<1x80xf32> to vector<1x80xbf16>
    %c1_108 = arith.constant 1 : index
    %c0_109 = arith.constant 0 : index
    %c0_110 = arith.constant 0 : index
    %138 = vector.load %arg8[%c1_108, %c0_109, %c0_110] : memref<5x80x120xbf16, #tpu.memory_space<vmem>>, vector<1x80x120xbf16>
    %139 = vector.shape_cast %138 : vector<1x80x120xbf16> to vector<80x120xbf16>
    %cst_111 = arith.constant dense<0.000000e+00> : vector<1x120xf32>
    %140 = tpu.matmul %137, %139, %cst_111 {dimension_numbers = #tpu.dot_dimension_numbers<[1], [0], [0], [1], [0, 0, 1, 1], [], []>} : vector<1x80xbf16>, vector<80x120xbf16>, vector<1x120xf32> -> vector<1x120xf32>
    %141 = arith.addf %135, %140 : vector<1x120xf32>
    %142 = vector.extract_strided_slice %130 {offsets = [2, 0], sizes = [1, 80], strides = [1, 1]} : vector<5x80xf32> to vector<1x80xf32>
    %143 = arith.truncf %142 : vector<1x80xf32> to vector<1x80xbf16>
    %c2_112 = arith.constant 2 : index
    %c0_113 = arith.constant 0 : index
    %c0_114 = arith.constant 0 : index
    %144 = vector.load %arg8[%c2_112, %c0_113, %c0_114] : memref<5x80x120xbf16, #tpu.memory_space<vmem>>, vector<1x80x120xbf16>
    %145 = vector.shape_cast %144 : vector<1x80x120xbf16> to vector<80x120xbf16>
    %cst_115 = arith.constant dense<0.000000e+00> : vector<1x120xf32>
    %146 = tpu.matmul %143, %145, %cst_115 {dimension_numbers = #tpu.dot_dimension_numbers<[1], [0], [0], [1], [0, 0, 1, 1], [], []>} : vector<1x80xbf16>, vector<80x120xbf16>, vector<1x120xf32> -> vector<1x120xf32>
    %147 = arith.addf %141, %146 : vector<1x120xf32>
    %148 = vector.extract_strided_slice %130 {offsets = [3, 0], sizes = [1, 80], strides = [1, 1]} : vector<5x80xf32> to vector<1x80xf32>
    %149 = arith.truncf %148 : vector<1x80xf32> to vector<1x80xbf16>
    %c3_116 = arith.constant 3 : index
    %c0_117 = arith.constant 0 : index
    %c0_118 = arith.constant 0 : index
    %150 = vector.load %arg8[%c3_116, %c0_117, %c0_118] : memref<5x80x120xbf16, #tpu.memory_space<vmem>>, vector<1x80x120xbf16>
    %151 = vector.shape_cast %150 : vector<1x80x120xbf16> to vector<80x120xbf16>
    %cst_119 = arith.constant dense<0.000000e+00> : vector<1x120xf32>
    %152 = tpu.matmul %149, %151, %cst_119 {dimension_numbers = #tpu.dot_dimension_numbers<[1], [0], [0], [1], [0, 0, 1, 1], [], []>} : vector<1x80xbf16>, vector<80x120xbf16>, vector<1x120xf32> -> vector<1x120xf32>
    %153 = arith.addf %147, %152 : vector<1x120xf32>
    %154 = vector.extract_strided_slice %130 {offsets = [4, 0], sizes = [1, 80], strides = [1, 1]} : vector<5x80xf32> to vector<1x80xf32>
    %155 = arith.truncf %154 : vector<1x80xf32> to vector<1x80xbf16>
    %c4_120 = arith.constant 4 : index
    %c0_121 = arith.constant 0 : index
    %c0_122 = arith.constant 0 : index
    %156 = vector.load %arg8[%c4_120, %c0_121, %c0_122] : memref<5x80x120xbf16, #tpu.memory_space<vmem>>, vector<1x80x120xbf16>
    %157 = vector.shape_cast %156 : vector<1x80x120xbf16> to vector<80x120xbf16>
    %cst_123 = arith.constant dense<0.000000e+00> : vector<1x120xf32>
    %158 = tpu.matmul %155, %157, %cst_123 {dimension_numbers = #tpu.dot_dimension_numbers<[1], [0], [0], [1], [0, 0, 1, 1], [], []>} : vector<1x80xbf16>, vector<80x120xbf16>, vector<1x120xf32> -> vector<1x120xf32>
    %159 = arith.addf %153, %158 : vector<1x120xf32>
    %c0_124 = arith.constant 0 : index
    %c0_125 = arith.constant 0 : index
    %160 = vector.load %arg9[%c0_124, %c0_125] : memref<1x120xf32, #tpu.memory_space<vmem>>, vector<1x120xf32>
    %161 = arith.addf %159, %160 : vector<1x120xf32>
    %cst_126 = arith.constant 0.000000e+00 : f32
    %162 = vector.broadcast %cst_126 : f32 to vector<1x120xf32>
    %163 = arith.maximumf %161, %162 : vector<1x120xf32>
    %164 = arith.truncf %163 : vector<1x120xf32> to vector<1x120xbf16>
    %c0_127 = arith.constant 0 : index
    %c0_128 = arith.constant 0 : index
    %165 = vector.load %arg10[%c0_127, %c0_128] : memref<120x84xbf16, #tpu.memory_space<vmem>>, vector<120x84xbf16>
    %cst_129 = arith.constant dense<0.000000e+00> : vector<1x84xf32>
    %166 = tpu.matmul %164, %165, %cst_129 {dimension_numbers = #tpu.dot_dimension_numbers<[1], [0], [0], [1], [0, 0, 1, 1], [], []>} : vector<1x120xbf16>, vector<120x84xbf16>, vector<1x84xf32> -> vector<1x84xf32>
    %c0_130 = arith.constant 0 : index
    %c0_131 = arith.constant 0 : index
    %167 = vector.load %arg11[%c0_130, %c0_131] : memref<1x84xf32, #tpu.memory_space<vmem>>, vector<1x84xf32>
    %168 = arith.addf %166, %167 : vector<1x84xf32>
    %cst_132 = arith.constant 0.000000e+00 : f32
    %169 = vector.broadcast %cst_132 : f32 to vector<1x84xf32>
    %170 = arith.maximumf %168, %169 : vector<1x84xf32>
    %171 = arith.truncf %170 : vector<1x84xf32> to vector<1x84xbf16>
    %c0_133 = arith.constant 0 : index
    %c0_134 = arith.constant 0 : index
    %172 = vector.load %arg12[%c0_133, %c0_134] : memref<84x128xbf16, #tpu.memory_space<vmem>>, vector<84x128xbf16>
    %cst_135 = arith.constant dense<0.000000e+00> : vector<1x128xf32>
    %173 = tpu.matmul %171, %172, %cst_135 {dimension_numbers = #tpu.dot_dimension_numbers<[1], [0], [0], [1], [0, 0, 1, 1], [], []>} : vector<1x84xbf16>, vector<84x128xbf16>, vector<1x128xf32> -> vector<1x128xf32>
    %c0_136 = arith.constant 0 : index
    %c0_137 = arith.constant 0 : index
    %174 = vector.load %arg13[%c0_136, %c0_137] : memref<1x128xf32, #tpu.memory_space<vmem>>, vector<1x128xf32>
    %175 = arith.addf %173, %174 : vector<1x128xf32>
    %176 = vector.shape_cast %175 : vector<1x128xf32> to vector<1x1x128xf32>
    %c0_138 = arith.constant 0 : index
    %c0_139 = arith.constant 0 : index
    %c0_140 = arith.constant 0 : index
    %177 = vector.load %arg14[%c0_138, %c0_139, %c0_140] : memref<1x1x128xf32, #tpu.memory_space<vmem>>, vector<1x1x128xf32>
    tpu.vector_store %arg14[%c0_138, %c0_139, %c0_140], %176 {strides = array<i32>} : memref<1x1x128xf32, #tpu.memory_space<vmem>>, vector<1x1x128xf32>,
    return
  }
  func.func @transform_0(%arg0: i32) -> (i32, i32, i32) {
    %c0_i32 = arith.constant 0 : i32
    %c0_i32_0 = arith.constant 0 : i32
    %c0_i32_1 = arith.constant 0 : i32
    return %arg0, %c0_i32, %c0_i32_0 : i32, i32, i32
  }
  func.func @transform_1(%arg0: i32) -> (i32, i32, i32) {
    %c0_i32 = arith.constant 0 : i32
    %c0_i32_0 = arith.constant 0 : i32
    %c0_i32_1 = arith.constant 0 : i32
    %c0_i32_2 = arith.constant 0 : i32
    return %c0_i32, %c0_i32_0, %c0_i32_1 : i32, i32, i32
  }
  func.func @transform_2(%arg0: i32) -> (i32, i32) {
    %c0_i32 = arith.constant 0 : i32
    %c0_i32_0 = arith.constant 0 : i32
    %c0_i32_1 = arith.constant 0 : i32
    return %c0_i32, %c0_i32_0 : i32, i32
  }
  func.func @transform_3(%arg0: i32) -> (i32, i32) {
    %c0_i32 = arith.constant 0 : i32
    %c0_i32_0 = arith.constant 0 : i32
    %c0_i32_1 = arith.constant 0 : i32
    return %c0_i32, %c0_i32_0 : i32, i32
  }
  func.func @transform_4(%arg0: i32) -> (i32, i32, i32) {
    %c0_i32 = arith.constant 0 : i32
    %c0_i32_0 = arith.constant 0 : i32
    %c0_i32_1 = arith.constant 0 : i32
    %c0_i32_2 = arith.constant 0 : i32
    return %c0_i32, %c0_i32_0, %c0_i32_1 : i32, i32, i32
  }
  func.func @transform_5(%arg0: i32) -> (i32, i32) {
    %c0_i32 = arith.constant 0 : i32
    %c0_i32_0 = arith.constant 0 : i32
    %c0_i32_1 = arith.constant 0 : i32
    return %c0_i32, %c0_i32_0 : i32, i32
  }
  func.func @transform_6(%arg0: i32) -> (i32, i32) {
    %c0_i32 = arith.constant 0 : i32
    %c0_i32_0 = arith.constant 0 : i32
    %c0_i32_1 = arith.constant 0 : i32
    return %c0_i32, %c0_i32_0 : i32, i32
  }
  func.func @transform_7(%arg0: i32) -> (i32, i32, i32) {
    %c0_i32 = arith.constant 0 : i32
    %c0_i32_0 = arith.constant 0 : i32
    %c0_i32_1 = arith.constant 0 : i32
    %c0_i32_2 = arith.constant 0 : i32
    return %c0_i32, %c0_i32_0, %c0_i32_1 : i32, i32, i32
  }
  func.func @transform_8(%arg0: i32) -> (i32, i32) {
    %c0_i32 = arith.constant 0 : i32
    %c0_i32_0 = arith.constant 0 : i32
    %c0_i32_1 = arith.constant 0 : i32
    return %c0_i32, %c0_i32_0 : i32, i32
  }
  func.func @transform_9(%arg0: i32) -> (i32, i32) {
    %c0_i32 = arith.constant 0 : i32
    %c0_i32_0 = arith.constant 0 : i32
    %c0_i32_1 = arith.constant 0 : i32
    return %c0_i32, %c0_i32_0 : i32, i32
  }
  func.func @transform_10(%arg0: i32) -> (i32, i32) {
    %c0_i32 = arith.constant 0 : i32
    %c0_i32_0 = arith.constant 0 : i32
    %c0_i32_1 = arith.constant 0 : i32
    return %c0_i32, %c0_i32_0 : i32, i32
  }
  func.func @transform_11(%arg0: i32) -> (i32, i32) {
    %c0_i32 = arith.constant 0 : i32
    %c0_i32_0 = arith.constant 0 : i32
    %c0_i32_1 = arith.constant 0 : i32
    return %c0_i32, %c0_i32_0 : i32, i32
  }
  func.func @transform_12(%arg0: i32) -> (i32, i32) {
    %c0_i32 = arith.constant 0 : i32
    %c0_i32_0 = arith.constant 0 : i32
    %c0_i32_1 = arith.constant 0 : i32
    return %c0_i32, %c0_i32_0 : i32, i32
  }
  func.func @transform_13(%arg0: i32) -> (i32, i32, i32) {
    %c0_i32 = arith.constant 0 : i32
    %c0_i32_0 = arith.constant 0 : i32
    %c0_i32_1 = arith.constant 0 : i32
    return %arg0, %c0_i32, %c0_i32_0 : i32, i32, i32
  }
}

</mosaic_0001>

<llo_original>
// kernel: lenet5_forward.1
$region0: #{lenet5_forward.1}
  #allocation0 [shape = 'u32[]', space=smem, size = 0x4, offset = 0x4, fixed_abs, tag = 'smem constant byte address 0x4 - core index']
  #allocation1 [shape = 'u32[144,128]{1,0:T(1,128)}', space=vmem, size = 0x12000, scoped, tag = 'internal scratch']
  %s0 = inlined_call_operand.vmem [shape: f32[2,32,96], index: 0, kind: input, shape index: {}]
  %s1 = inlined_call_operand.vmem [shape: bf16[10,96,84], index: 1, kind: input, shape index: {}]
  %s2 = inlined_call_operand.vmem [shape: f32[1,84], index: 2, kind: input, shape index: {}]
  %s3 = inlined_call_operand.vmem [shape: f32[14,28], index: 3, kind: input, shape index: {}]
  %s4 = inlined_call_operand.vmem [shape: bf16[10,84,80], index: 4, kind: input, shape index: {}]
  %s5 = inlined_call_operand.vmem [shape: f32[1,80], index: 5, kind: input, shape index: {}]
  %s6 = inlined_call_operand.vmem [shape: f32[5,10], index: 6, kind: input, shape index: {}]
  %s7 = inlined_call_operand.vmem [shape: bf16[5,80,120], index: 7, kind: input, shape index: {}]
  %s8 = inlined_call_operand.vmem [shape: f32[1,120], index: 8, kind: input, shape index: {}]
  %s9 = inlined_call_operand.vmem [shape: bf16[120,84], index: 9, kind: input, shape index: {}]
  %s10 = inlined_call_operand.vmem [shape: f32[1,84], index: 10, kind: input, shape index: {}]
  %s11 = inlined_call_operand.vmem [shape: bf16[84,128], index: 11, kind: input, shape index: {}]
  %s12 = inlined_call_operand.vmem [shape: f32[1,128], index: 12, kind: input, shape index: {}]
  %s13 = inlined_call_operand.hbm [shape: f32[2,1,128], index: 13, kind: output, shape index: {}]
  %s14 = sld [smem:[#allocation0]]
  $region85: #{lenet5_forward.1} parent=0
    _
  %s16 = ssub.s32 1, %s14
  %s17 = scalar_select 0, %s16, %s14
  $region1: #{lenet5_forward.1} parent=0
    #allocation2 [shape = 'u8[1024]{0}', space=vmem, size = 0x400, scoped, tag = 'output window, operand 0']
    #allocation3 [shape = 's32[2]{0}', space=sflag, size = 0x8, scoped, tag = 'scoped memory for lenet5_forward.1']
    %18 = vsyncpa [#allocation3], 0
    %s19 = scalar_lea.sflag [#allocation3], 1
    %20 = vsyncpa %s19, 0
    loop: start=0, step=1, limit=4
    $region2: #{lenet5_forward.1} parent=1 // loop_pre_header
      _
    $region3: #{lenet5_forward.1} parent=1 // loop_header
      %s22 = sphi 0, %s26
      %p23 = scmp.ge.s32.totalorder %s22, 4
      %s32 = sphi 0, %s34
      %s35 = sphi 0, %s32
      %s36 = sphi 0, %s35
      %s52 = sphi 0, %s36
      %s56 = sphi 0, %s56
      %s58 = sphi 0, %s56
      %s59 = sphi 0, %s58
      %s73 = sphi 0, %s59
      %s77 = sphi 0, %s77
      %s79 = sphi 0, %s77
      %s80 = sphi 0, %s79
      %s94 = sphi 0, %s80
      %s98 = sphi 0, %s98
      %s100 = sphi 0, %s98
      %s101 = sphi 0, %s100
      %s115 = sphi 0, %s101
      %s119 = sphi 0, %s119
      %s121 = sphi 0, %s119
      %s122 = sphi 0, %s121
      %s136 = sphi 0, %s122
      %s140 = sphi 0, %s140
      %s142 = sphi 0, %s140
      %s143 = sphi 0, %s142
      %s157 = sphi 0, %s143
      %s161 = sphi 0, %s161
      %s163 = sphi 0, %s161
      %s164 = sphi 0, %s163
      %s178 = sphi 0, %s164
      %s182 = sphi 0, %s182
      %s184 = sphi 0, %s182
      %s185 = sphi 0, %s184
      %s199 = sphi 0, %s185
      %s203 = sphi 0, %s203
      %s205 = sphi 0, %s203
      %s206 = sphi 0, %s205
      %s220 = sphi 0, %s206
      %s224 = sphi 0, %s224
      %s226 = sphi 0, %s224
      %s227 = sphi 0, %s226
      %s241 = sphi 0, %s227
      %s245 = sphi 0, %s245
      %s247 = sphi 0, %s245
      %s248 = sphi 0, %s247
      %s262 = sphi 0, %s248
      %s266 = sphi 0, %s266
      %s268 = sphi 0, %s266
      %s269 = sphi 0, %s268
      %s283 = sphi 0, %s269
      %s287 = sphi 0, %s287
      %s289 = sphi 0, %s287
      %s290 = sphi 0, %s289
      %s304 = sphi 0, %s290
      %s310 = sphi 0, %s312
      %s313 = sphi 0, %s310
      %s314 = sphi 0, %s313
      %s330 = sphi 0, %s314
    $region4: #{lenet5_forward.1} parent=1 // loop_header_branch
      %25 = sbr.rel (%p23) target = $region8
    $region5: #{lenet5_forward.1} parent=1 // loop_body
      %s27 = ssub.s32 %s22, 1
      %s28 = ssub.s32 %s22, 2
      %s29 = sadd.s32 %s22, 1
      %s30 = ssub.s32 %s22, %s29
      %p31 = scmp.eq.s32.totalorder %s30, 0
      %s33 = sadd.s32 %s32, 1
      %s34 = scalar_select %p31, %s32, %s33
      %p37 = pneg %p31
      %p38 = scmp.eq.s32.totalorder %s22, 1
      %p39 = por %p37, %p38
      %p40 = scmp.ne.s32.totalorder %s32, %s35
      %p41 = scmp.eq.s32.totalorder %s22, 0
      %p42 = por %p40, %p41
      %p43 = scmp.ne.s32.totalorder %s32, %s35
      %p44 = scmp.eq.s32.totalorder %s27, 1
      %p45 = por %p43, %p44
      %p46 = scmp.ne.s32.totalorder %s35, %s36
      %p47 = scmp.eq.s32.totalorder %s27, 0
      %p48 = por %p46, %p47
      %p49 = scmp.ne.s32.totalorder %s35, %s36
      %p50 = scmp.eq.s32.totalorder %s28, 1
      %p51 = por %p49, %p50
      %p53 = scmp.ne.s32.totalorder %s36, %s52
      %p54 = scmp.eq.s32.totalorder %s28, 0
      %p55 = por %p53, %p54
      %s57 = sadd.s32 %s56, 1
      %p60 = scmp.eq.s32.totalorder %s22, 1
      %p61 = scmp.ne.s32.totalorder %s56, %s58
      %p62 = scmp.eq.s32.totalorder %s22, 0
      %p63 = por %p61, %p62
      %p64 = scmp.ne.s32.totalorder %s56, %s58
      %p65 = scmp.eq.s32.totalorder %s27, 1
      %p66 = por %p64, %p65
      %p67 = scmp.ne.s32.totalorder %s58, %s59
      %p68 = scmp.eq.s32.totalorder %s27, 0
      %p69 = por %p67, %p68
      %p70 = scmp.ne.s32.totalorder %s58, %s59
      %p71 = scmp.eq.s32.totalorder %s28, 1
      %p72 = por %p70, %p71
      %p74 = scmp.ne.s32.totalorder %s59, %s73
      %p75 = scmp.eq.s32.totalorder %s28, 0
      %p76 = por %p74, %p75
      %s78 = sadd.s32 %s77, 1
      %p81 = scmp.eq.s32.totalorder %s22, 1
      %p82 = scmp.ne.s32.totalorder %s77, %s79
      %p83 = scmp.eq.s32.totalorder %s22, 0
      %p84 = por %p82, %p83
      %p85 = scmp.ne.s32.totalorder %s77, %s79
      %p86 = scmp.eq.s32.totalorder %s27, 1
      %p87 = por %p85, %p86
      %p88 = scmp.ne.s32.totalorder %s79, %s80
      %p89 = scmp.eq.s32.totalorder %s27, 0
      %p90 = por %p88, %p89
      %p91 = scmp.ne.s32.totalorder %s79, %s80
      %p92 = scmp.eq.s32.totalorder %s28, 1
      %p93 = por %p91, %p92
      %p95 = scmp.ne.s32.totalorder %s80, %s94
      %p96 = scmp.eq.s32.totalorder %s28, 0
      %p97 = por %p95, %p96
      %s99 = sadd.s32 %s98, 1
      %p102 = scmp.eq.s32.totalorder %s22, 1
      %p103 = scmp.ne.s32.totalorder %s98, %s100
      %p104 = scmp.eq.s32.totalorder %s22, 0
      %p105 = por %p103, %p104
      %p106 = scmp.ne.s32.totalorder %s98, %s100
      %p107 = scmp.eq.s32.totalorder %s27, 1
      %p108 = por %p106, %p107
      %p109 = scmp.ne.s32.totalorder %s100, %s101
      %p110 = scmp.eq.s32.totalorder %s27, 0
      %p111 = por %p109, %p110
      %p112 = scmp.ne.s32.totalorder %s100, %s101
      %p113 = scmp.eq.s32.totalorder %s28, 1
      %p114 = por %p112, %p113
      %p116 = scmp.ne.s32.totalorder %s101, %s115
      %p117 = scmp.eq.s32.totalorder %s28, 0
      %p118 = por %p116, %p117
      %s120 = sadd.s32 %s119, 1
      %p123 = scmp.eq.s32.totalorder %s22, 1
      %p124 = scmp.ne.s32.totalorder %s119, %s121
      %p125 = scmp.eq.s32.totalorder %s22, 0
      %p126 = por %p124, %p125
      %p127 = scmp.ne.s32.totalorder %s119, %s121
      %p128 = scmp.eq.s32.totalorder %s27, 1
      %p129 = por %p127, %p128
      %p130 = scmp.ne.s32.totalorder %s121, %s122
      %p131 = scmp.eq.s32.totalorder %s27, 0
      %p132 = por %p130, %p131
      %p133 = scmp.ne.s32.totalorder %s121, %s122
      %p134 = scmp.eq.s32.totalorder %s28, 1
      %p135 = por %p133, %p134
      %p137 = scmp.ne.s32.totalorder %s122, %s136
      %p138 = scmp.eq.s32.totalorder %s28, 0
      %p139 = por %p137, %p138
      %s141 = sadd.s32 %s140, 1
      %p144 = scmp.eq.s32.totalorder %s22, 1
      %p145 = scmp.ne.s32.totalorder %s140, %s142
      %p146 = scmp.eq.s32.totalorder %s22, 0
      %p147 = por %p145, %p146
      %p148 = scmp.ne.s32.totalorder %s140, %s142
      %p149 = scmp.eq.s32.totalorder %s27, 1
      %p150 = por %p148, %p149
      %p151 = scmp.ne.s32.totalorder %s142, %s143
      %p152 = scmp.eq.s32.totalorder %s27, 0
      %p153 = por %p151, %p152
      %p154 = scmp.ne.s32.totalorder %s142, %s143
      %p155 = scmp.eq.s32.totalorder %s28, 1
      %p156 = por %p154, %p155
      %p158 = scmp.ne.s32.totalorder %s143, %s157
      %p159 = scmp.eq.s32.totalorder %s28, 0
      %p160 = por %p158, %p159
      %s162 = sadd.s32 %s161, 1
      %p165 = scmp.eq.s32.totalorder %s22, 1
      %p166 = scmp.ne.s32.totalorder %s161, %s163
      %p167 = scmp.eq.s32.totalorder %s22, 0
      %p168 = por %p166, %p167
      %p169 = scmp.ne.s32.totalorder %s161, %s163
      %p170 = scmp.eq.s32.totalorder %s27, 1
      %p171 = por %p169, %p170
      %p172 = scmp.ne.s32.totalorder %s163, %s164
      %p173 = scmp.eq.s32.totalorder %s27, 0
      %p174 = por %p172, %p173
      %p175 = scmp.ne.s32.totalorder %s163, %s164
      %p176 = scmp.eq.s32.totalorder %s28, 1
      %p177 = por %p175, %p176
      %p179 = scmp.ne.s32.totalorder %s164, %s178
      %p180 = scmp.eq.s32.totalorder %s28, 0
      %p181 = por %p179, %p180
      %s183 = sadd.s32 %s182, 1
      %p186 = scmp.eq.s32.totalorder %s22, 1
      %p187 = scmp.ne.s32.totalorder %s182, %s184
      %p188 = scmp.eq.s32.totalorder %s22, 0
      %p189 = por %p187, %p188
      %p190 = scmp.ne.s32.totalorder %s182, %s184
      %p191 = scmp.eq.s32.totalorder %s27, 1
      %p192 = por %p190, %p191
      %p193 = scmp.ne.s32.totalorder %s184, %s185
      %p194 = scmp.eq.s32.totalorder %s27, 0
      %p195 = por %p193, %p194
      %p196 = scmp.ne.s32.totalorder %s184, %s185
      %p197 = scmp.eq.s32.totalorder %s28, 1
      %p198 = por %p196, %p197
      %p200 = scmp.ne.s32.totalorder %s185, %s199
      %p201 = scmp.eq.s32.totalorder %s28, 0
      %p202 = por %p200, %p201
      %s204 = sadd.s32 %s203, 1
      %p207 = scmp.eq.s32.totalorder %s22, 1
      %p208 = scmp.ne.s32.totalorder %s203, %s205
      %p209 = scmp.eq.s32.totalorder %s22, 0
      %p210 = por %p208, %p209
      %p211 = scmp.ne.s32.totalorder %s203, %s205
      %p212 = scmp.eq.s32.totalorder %s27, 1
      %p213 = por %p211, %p212
      %p214 = scmp.ne.s32.totalorder %s205, %s206
      %p215 = scmp.eq.s32.totalorder %s27, 0
      %p216 = por %p214, %p215
      %p217 = scmp.ne.s32.totalorder %s205, %s206
      %p218 = scmp.eq.s32.totalorder %s28, 1
      %p219 = por %p217, %p218
      %p221 = scmp.ne.s32.totalorder %s206, %s220
      %p222 = scmp.eq.s32.totalorder %s28, 0
      %p223 = por %p221, %p222
      %s225 = sadd.s32 %s224, 1
      %p228 = scmp.eq.s32.totalorder %s22, 1
      %p229 = scmp.ne.s32.totalorder %s224, %s226
      %p230 = scmp.eq.s32.totalorder %s22, 0
      %p231 = por %p229, %p230
      %p232 = scmp.ne.s32.totalorder %s224, %s226
      %p233 = scmp.eq.s32.totalorder %s27, 1
      %p234 = por %p232, %p233
      %p235 = scmp.ne.s32.totalorder %s226, %s227
      %p236 = scmp.eq.s32.totalorder %s27, 0
      %p237 = por %p235, %p236
      %p238 = scmp.ne.s32.totalorder %s226, %s227
      %p239 = scmp.eq.s32.totalorder %s28, 1
      %p240 = por %p238, %p239
      %p242 = scmp.ne.s32.totalorder %s227, %s241
      %p243 = scmp.eq.s32.totalorder %s28, 0
      %p244 = por %p242, %p243
      %s246 = sadd.s32 %s245, 1
      %p249 = scmp.eq.s32.totalorder %s22, 1
      %p250 = scmp.ne.s32.totalorder %s245, %s247
      %p251 = scmp.eq.s32.totalorder %s22, 0
      %p252 = por %p250, %p251
      %p253 = scmp.ne.s32.totalorder %s245, %s247
      %p254 = scmp.eq.s32.totalorder %s27, 1
      %p255 = por %p253, %p254
      %p256 = scmp.ne.s32.totalorder %s247, %s248
      %p257 = scmp.eq.s32.totalorder %s27, 0
      %p258 = por %p256, %p257
      %p259 = scmp.ne.s32.totalorder %s247, %s248
      %p260 = scmp.eq.s32.totalorder %s28, 1
      %p261 = por %p259, %p260
      %p263 = scmp.ne.s32.totalorder %s248, %s262
      %p264 = scmp.eq.s32.totalorder %s28, 0
      %p265 = por %p263, %p264
      %s267 = sadd.s32 %s266, 1
      %p270 = scmp.eq.s32.totalorder %s22, 1
      %p271 = scmp.ne.s32.totalorder %s266, %s268
      %p272 = scmp.eq.s32.totalorder %s22, 0
      %p273 = por %p271, %p272
      %p274 = scmp.ne.s32.totalorder %s266, %s268
      %p275 = scmp.eq.s32.totalorder %s27, 1
      %p276 = por %p274, %p275
      %p277 = scmp.ne.s32.totalorder %s268, %s269
      %p278 = scmp.eq.s32.totalorder %s27, 0
      %p279 = por %p277, %p278
      %p280 = scmp.ne.s32.totalorder %s268, %s269
      %p281 = scmp.eq.s32.totalorder %s28, 1
      %p282 = por %p280, %p281
      %p284 = scmp.ne.s32.totalorder %s269, %s283
      %p285 = scmp.eq.s32.totalorder %s28, 0
      %p286 = por %p284, %p285
      %s288 = sadd.s32 %s287, 1
      %p291 = scmp.eq.s32.totalorder %s22, 1
      %p292 = scmp.ne.s32.totalorder %s287, %s289
      %p293 = scmp.eq.s32.totalorder %s22, 0
      %p294 = por %p292, %p293
      %p295 = scmp.ne.s32.totalorder %s287, %s289
      %p296 = scmp.eq.s32.totalorder %s27, 1
      %p297 = por %p295, %p296
      %p298 = scmp.ne.s32.totalorder %s289, %s290
      %p299 = scmp.eq.s32.totalorder %s27, 0
      %p300 = por %p298, %p299
      %p301 = scmp.ne.s32.totalorder %s289, %s290
      %p302 = scmp.eq.s32.totalorder %s28, 1
      %p303 = por %p301, %p302
      %p305 = scmp.ne.s32.totalorder %s290, %s304
      %p306 = scmp.eq.s32.totalorder %s28, 0
      %p307 = por %p305, %p306
      %s308 = ssub.s32 %s22, %s29
      %p309 = scmp.eq.s32.totalorder %s308, 0
      %s311 = sadd.s32 %s310, 1
      %s312 = scalar_select %p309, %s310, %s311
      %p315 = pneg %p309
      %p316 = scmp.eq.s32.totalorder %s22, 1
      %p317 = por %p315, %p316
      %p318 = scmp.ne.s32.totalorder %s310, %s313
      %p319 = scmp.eq.s32.totalorder %s22, 0
      %p320 = por %p318, %p319
      %p321 = scmp.ne.s32.totalorder %s310, %s313
      %p322 = scmp.eq.s32.totalorder %s27, 1
      %p323 = por %p321, %p322
      %p324 = scmp.ne.s32.totalorder %s313, %s314
      %p325 = scmp.eq.s32.totalorder %s27, 0
      %p326 = por %p324, %p325
      %p327 = scmp.ne.s32.totalorder %s313, %s314
      %p328 = scmp.eq.s32.totalorder %s28, 1
      %p329 = por %p327, %p328
      %p331 = scmp.ne.s32.totalorder %s314, %s330
      %p332 = scmp.eq.s32.totalorder %s28, 0
      %p333 = por %p331, %p332
      %p334 = scmp.le.s32.totalorder 1, %s22
      %p335 = scmp.lt.s32.totalorder %s22, 3
      %p336 = pnand %p334, %p335
      %p337 = pneg %p336
      // Predicated region
      $region9: #{lenet5_forward.1} parent=5 // pred_check
        _
      $region10: #{lenet5_forward.1} parent=5 // pred_check_branch
        %339 = sbr.rel (%p336) target = $region12
      $region11: #{lenet5_forward.1} parent=5 // pred_region
        %s340 = ssub.s32 %s22, 1
        // Predicated region
        $region13: #{lenet5_forward.1} parent=11 // pred_check
          %p341 = pneg %p69
        $region14: #{lenet5_forward.1} parent=11 // pred_check_branch
          %343 = sbr.rel (%p341) target = $region16
        $region15: #{lenet5_forward.1} parent=11 // pred_region
          _
        $region16: #{lenet5_forward.1} parent=11 // pred_fallthru
          _
        // Predicated region
        $region17: #{lenet5_forward.1} parent=11 // pred_check
          %p344 = pneg %p90
        $region18: #{lenet5_forward.1} parent=11 // pred_check_branch
          %346 = sbr.rel (%p344) target = $region20
        $region19: #{lenet5_forward.1} parent=11 // pred_region
          _
        $region20: #{lenet5_forward.1} parent=11 // pred_fallthru
          _
        // Predicated region
        $region21: #{lenet5_forward.1} parent=11 // pred_check
          %p347 = pneg %p111
        $region22: #{lenet5_forward.1} parent=11 // pred_check_branch
          %349 = sbr.rel (%p347) target = $region24
        $region23: #{lenet5_forward.1} parent=11 // pred_region
          _
        $region24: #{lenet5_forward.1} parent=11 // pred_fallthru
          _
        // Predicated region
        $region25: #{lenet5_forward.1} parent=11 // pred_check
          %p350 = pneg %p132
        $region26: #{lenet5_forward.1} parent=11 // pred_check_branch
          %352 = sbr.rel (%p350) target = $region28
        $region27: #{lenet5_forward.1} parent=11 // pred_region
          _
        $region28: #{lenet5_forward.1} parent=11 // pred_fallthru
          _
        // Predicated region
        $region29: #{lenet5_forward.1} parent=11 // pred_check
          %p353 = pneg %p153
        $region30: #{lenet5_forward.1} parent=11 // pred_check_branch
          %355 = sbr.rel (%p353) target = $region32
        $region31: #{lenet5_forward.1} parent=11 // pred_region
          _
        $region32: #{lenet5_forward.1} parent=11 // pred_fallthru
          _
        // Predicated region
        $region33: #{lenet5_forward.1} parent=11 // pred_check
          %p356 = pneg %p174
        $region34: #{lenet5_forward.1} parent=11 // pred_check_branch
          %358 = sbr.rel (%p356) target = $region36
        $region35: #{lenet5_forward.1} parent=11 // pred_region
          _
        $region36: #{lenet5_forward.1} parent=11 // pred_fallthru
          _
        // Predicated region
        $region37: #{lenet5_forward.1} parent=11 // pred_check
          %p359 = pneg %p195
        $region38: #{lenet5_forward.1} parent=11 // pred_check_branch
          %361 = sbr.rel (%p359) target = $region40
        $region39: #{lenet5_forward.1} parent=11 // pred_region
          _
        $region40: #{lenet5_forward.1} parent=11 // pred_fallthru
          _
        // Predicated region
        $region41: #{lenet5_forward.1} parent=11 // pred_check
          %p362 = pneg %p216
        $region42: #{lenet5_forward.1} parent=11 // pred_check_branch
          %364 = sbr.rel (%p362) target = $region44
        $region43: #{lenet5_forward.1} parent=11 // pred_region
          _
        $region44: #{lenet5_forward.1} parent=11 // pred_fallthru
          _
        // Predicated region
        $region45: #{lenet5_forward.1} parent=11 // pred_check
          %p365 = pneg %p237
        $region46: #{lenet5_forward.1} parent=11 // pred_check_branch
          %367 = sbr.rel (%p365) target = $region48
        $region47: #{lenet5_forward.1} parent=11 // pred_region
          _
        $region48: #{lenet5_forward.1} parent=11 // pred_fallthru
          _
        // Predicated region
        $region49: #{lenet5_forward.1} parent=11 // pred_check
          %p368 = pneg %p258
        $region50: #{lenet5_forward.1} parent=11 // pred_check_branch
          %370 = sbr.rel (%p368) target = $region52
        $region51: #{lenet5_forward.1} parent=11 // pred_region
          _
        $region52: #{lenet5_forward.1} parent=11 // pred_fallthru
          _
        // Predicated region
        $region53: #{lenet5_forward.1} parent=11 // pred_check
          %p371 = pneg %p279
        $region54: #{lenet5_forward.1} parent=11 // pred_check_branch
          %373 = sbr.rel (%p371) target = $region56
        $region55: #{lenet5_forward.1} parent=11 // pred_region
          _
        $region56: #{lenet5_forward.1} parent=11 // pred_fallthru
          _
        // Predicated region
        $region57: #{lenet5_forward.1} parent=11 // pred_check
          %p374 = pneg %p300
        $region58: #{lenet5_forward.1} parent=11 // pred_check_branch
          %376 = sbr.rel (%p374) target = $region60
        $region59: #{lenet5_forward.1} parent=11 // pred_region
          _
        $region60: #{lenet5_forward.1} parent=11 // pred_fallthru
          _
      $region12: #{lenet5_forward.1} parent=5 // pred_fallthru
        _
      %p377 = scmp.lt.s32.totalorder %s22, 2
      // Predicated region
      $region61: #{lenet5_forward.1} parent=5 // pred_check
        %p378 = pneg %p377
      $region62: #{lenet5_forward.1} parent=5 // pred_check_branch
        %380 = sbr.rel (%p378) target = $region64
      $region63: #{lenet5_forward.1} parent=5 // pred_region
        // Predicated region
        $region65: #{lenet5_forward.1} parent=63 // pred_check
          %p381 = pneg %p42
        $region66: #{lenet5_forward.1} parent=63 // pred_check_branch
          %383 = sbr.rel (%p381) target = $region68
        $region67: #{lenet5_forward.1} parent=63 // pred_region
          %p384 = scmp.lt.s32.totalorder %s22, 1
          %s385 = scalar_select %p384, %s22, 1
          %s386 = smul.addr %s385, 4
          %s387 = smul.addr %s386, 8
          %s388 = scalar_lea.vmem %s0, %s387
        $region68: #{lenet5_forward.1} parent=63 // pred_fallthru
          _
      $region64: #{lenet5_forward.1} parent=5 // pred_fallthru
        _
      %p389 = scmp.le.s32.totalorder 1, %s22
      %p390 = scmp.lt.s32.totalorder %s22, 3
      %p391 = pnand %p389, %p390
      %p392 = pneg %p391
      // Predicated region
      $region69: #{lenet5_forward.1} parent=5 // pred_check
        _
      $region70: #{lenet5_forward.1} parent=5 // pred_check_branch
        %394 = sbr.rel (%p391) target = $region72
      $region71: #{lenet5_forward.1} parent=5 // pred_region
        %s395 = ssub.s32 %s22, 1
        %p396 = scmp.lt.s32.totalorder %s27, 1
        %s397 = scalar_select %p396, %s27, 1
        %s398 = smul.addr %s397, 4
        %s399 = smul.addr %s398, 8
        %s400 = scalar_lea.vmem %s0, %s399
        %p401 = pneg %p48
        %p402 = pneg %p45
        %p403 = pneg %p69
        %p404 = pneg %p66
        %p405 = pneg %p90
        %p406 = pneg %p87
        %p407 = pneg %p111
        %p408 = pneg %p108
        %p409 = pneg %p132
        %p410 = pneg %p129
        %p411 = pneg %p153
        %p412 = pneg %p150
        %p413 = pneg %p174
        %p414 = pneg %p171
        %p415 = pneg %p195
        %p416 = pneg %p192
        %p417 = pneg %p216
        %p418 = pneg %p213
        %p419 = pneg %p237
        %p420 = pneg %p234
        %p421 = pneg %p258
        %p422 = pneg %p255
        %p423 = pneg %p279
        %p424 = pneg %p276
        %p425 = pneg %p300
        %p426 = pneg %p297
        %p427 = pneg %p326
        %p428 = pneg %p323
        %s429 = sand.u32 %s313, 1
        %s430 = scalar_lea.sflag [#allocation3], %s429
        %s431 = sand.u32 %s313, 1
        %s432 = scalar_lea.vmem [#allocation2], %s431
        %p433 = scmp.lt.s32.totalorder %s27, 1
        %s434 = scalar_select %p433, %s27, 1
        %s435 = smul.addr %s434, 4
        %s436 = smul.addr %s435, 8
        %s437 = scalar_lea.vmem %s0, %s436
        %v439 = vld [vmem:[%s437] sm:$0xff]
        %v440 = vld [vmem:[%s437 + $0x8] sm:$0xff]
        %v441 = vld [vmem:[%s437 + $0x10] sm:$0xff]
        %v442 = vld [vmem:[%s437 + $0x18] sm:$0xf]
        %v443 = vpack.c.bf16 %v440, %v439
        %v444 = vpack.c.bf16 %v442, %v441
        %v445 = vld [vmem:[%s437 + $0x1] sm:$0xff]
        %v446 = vld [vmem:[%s437 + $0x9] sm:$0xff]
        %v447 = vld [vmem:[%s437 + $0x11] sm:$0xff]
        %v448 = vld [vmem:[%s437 + $0x19] sm:$0xf]
        %v449 = vpack.c.bf16 %v446, %v445
        %v450 = vpack.c.bf16 %v448, %v447
        %v451 = vld [vmem:[%s437 + $0x2] sm:$0xff]
        %v452 = vld [vmem:[%s437 + $0xa] sm:$0xff]
        %v453 = vld [vmem:[%s437 + $0x12] sm:$0xff]
        %v454 = vld [vmem:[%s437 + $0x1a] sm:$0xf]
        %v455 = vpack.c.bf16 %v452, %v451
        %v456 = vpack.c.bf16 %v454, %v453
        %v457 = vld [vmem:[%s437 + $0x3] sm:$0xff]
        %v458 = vld [vmem:[%s437 + $0xb] sm:$0xff]
        %v459 = vld [vmem:[%s437 + $0x13] sm:$0xff]
        %v460 = vld [vmem:[%s437 + $0x1b] sm:$0xf]
        %v461 = vpack.c.bf16 %v458, %v457
        %v462 = vpack.c.bf16 %v460, %v459
        %v463 = vld [vmem:[%s437 + $0x4] sm:$0xff]
        %v464 = vld [vmem:[%s437 + $0xc] sm:$0xff]
        %v465 = vld [vmem:[%s437 + $0x14] sm:$0xff]
        %v466 = vld [vmem:[%s437 + $0x1c] sm:$0xf]
        %v467 = vpack.c.bf16 %v464, %v463
        %v468 = vpack.c.bf16 %v466, %v465
        %v469 = vld [vmem:[%s1] sm:$0xf]
        %v470 = vld [vmem:[%s1 + $0x4] sm:$0xf]
        %v471 = vld [vmem:[%s1 + $0x8] sm:$0xf]
        %v472 = vld [vmem:[%s1 + $0xc] sm:$0xf]
        %v473 = vld [vmem:[%s1 + $0x10] sm:$0xf]
        %v474 = vld [vmem:[%s1 + $0x14] sm:$0xf]
        %v475 = vld [vmem:[%s1 + $0x18] sm:$0xf]
        %v476 = vld [vmem:[%s1 + $0x1c] sm:$0xf]
        %v477 = vld [vmem:[%s1 + $0x20] sm:$0xf]
        %v478 = vld [vmem:[%s1 + $0x24] sm:$0xf]
        %v479 = vld [vmem:[%s1 + $0x28] sm:$0xf]
        %v480 = vld [vmem:[%s1 + $0x2c] sm:$0xf]
        %s481 = scalar_lea.vmem %s1, 96
        %v482 = vld [vmem:[%s481] sm:$0xf]
        %v483 = vld [vmem:[%s481 + $0x4] sm:$0xf]
        %v484 = vld [vmem:[%s481 + $0x8] sm:$0xf]
        %v485 = vld [vmem:[%s481 + $0xc] sm:$0xf]
        %v486 = vld [vmem:[%s481 + $0x10] sm:$0xf]
        %v487 = vld [vmem:[%s481 + $0x14] sm:$0xf]
        %v488 = vld [vmem:[%s481 + $0x18] sm:$0xf]
        %v489 = vld [vmem:[%s481 + $0x1c] sm:$0xf]
        %v490 = vld [vmem:[%s481 + $0x20] sm:$0xf]
        %v491 = vld [vmem:[%s481 + $0x24] sm:$0xf]
        %v492 = vld [vmem:[%s481 + $0x28] sm:$0xf]
        %v493 = vld [vmem:[%s481 + $0x2c] sm:$0xf]
        %v506 = vunpack.c.l.b16 %v482
        %v507 = vunpack.c.l.b16 %v483
        %v508 = vunpack.c.l.b16 %v484
        %v509 = vunpack.c.l.b16 %v485
        %v510 = vunpack.c.l.b16 %v486
        %v511 = vunpack.c.l.b16 %v487
        %v512 = vunpack.c.l.b16 %v488
        %v513 = vunpack.c.l.b16 %v489
        %v514 = vunpack.c.l.b16 %v490
        %v515 = vunpack.c.l.b16 %v491
        %v516 = vunpack.c.l.b16 %v492
        %v517 = vunpack.c.l.b16 %v493
        %v518 = vpack.c.b16 %v507, %v506
        %v519 = vpack.c.b16 %v509, %v508
        %v520 = vpack.c.b16 %v511, %v510
        %v521 = vpack.c.b16 %v513, %v512
        %v522 = vpack.c.b16 %v515, %v514
        %v523 = vpack.c.b16 %v517, %v516
        %vm530 = vcmask 785408
        %v532 = vsel %vm530, %v449, 0
        %v535 = vsel %vm530, %v450, 0
        %537 = vmatprep.subr.bf16.mxu0 0
        %538 = vmatpush1.bf16.msra.mxu0 0
        %539 = vmatprep.subr.bf16.mxu0 0
        %540 = vmatpush1.bf16.msra.mxu0 0
        %541 = vmatprep.subr.bf16.mxu0 0
        %542 = vmatpush1.bf16.msra.mxu0 %v523
        %543 = vmatprep.subr.bf16.mxu0 0
        %544 = vmatpush1.bf16.msra.mxu0 %v522
        %545 = vmatprep.subr.bf16.mxu0 0
        %546 = vmatpush1.bf16.msra.mxu0 %v521
        %547 = vmatprep.subr.bf16.mxu0 0
        %548 = vmatpush1.bf16.msra.mxu0 %v520
        %549 = vmatprep.subr.bf16.mxu0 0
        %550 = vmatpush1.bf16.msra.mxu0 %v519
        %551 = vmatprep.subr.bf16.mxu0 0
        %552 = vmatpush1.bf16.msra.mxu0 %v518
        %553 = vmatprep.subr.bf16.mxu0 0
        %554 = vmatpush2.bf16.msra.mxu0 0
        %555 = vmatprep.subr.bf16.mxu0 0
        %556 = vmatpush2.bf16.msra.mxu0 0
        %557 = vmatprep.subr.bf16.mxu0 0
        %558 = vmatpush2.bf16.msra.mxu0 0
        %559 = vmatprep.subr.bf16.mxu0 0
        %560 = vmatpush2.bf16.msra.mxu0 0
        %561 = vmatprep.subr.bf16.mxu0 0
        %562 = vmatpush2.bf16.msra.mxu0 0
        %563 = vmatprep.subr.bf16.mxu0 0
        %564 = vmatpush2.bf16.msra.mxu0 0
        %565 = vmatprep.subr.bf16.mxu0 0
        %566 = vmatpush2.bf16.msra.mxu0 0
        %567 = vmatprep.subr.bf16.mxu0 0
        %568 = vmatpush2.bf16.msra.mxu0 0
        %569 = vmatprep.mubr.bf16.mxu0 0
        %570 = vmatmul.mubr.bf16.gmra.mxu0 %v532
        %v571 = vpop.f32.mrf.mxu0
        %v572 = vadd.f32 0.0, %v571
        %v573 = vpop.f32.mrf.mxu0
        %v574 = vpop.f32.mrf.mxu0
        %v575 = vadd.f32 0.0, %v574
        %v576 = vpop.f32.mrf.mxu0
        %577 = vmatprep.mubr.bf16.mxu0 0
        %578 = vmatmul.mubr.bf16.gmra.mxu0 %v535
        %v579 = vpop.f32.mrf.mxu0
        %v580 = vadd.f32 0.0, %v579
        %v581 = vpop.f32.mrf.mxu0
        %v582 = vpop.f32.mrf.mxu0
        %v583 = vadd.f32 0.0, %v582
        %v584 = vpop.f32.mrf.mxu0
        %585 = vdwg.mxu0
        %v598 = vunpack.c.l.b16 %v469
        %v599 = vunpack.c.l.b16 %v470
        %v600 = vunpack.c.l.b16 %v471
        %v601 = vunpack.c.l.b16 %v472
        %v602 = vunpack.c.l.b16 %v473
        %v603 = vunpack.c.l.b16 %v474
        %v604 = vunpack.c.l.b16 %v475
        %v605 = vunpack.c.l.b16 %v476
        %v606 = vunpack.c.l.b16 %v477
        %v607 = vunpack.c.l.b16 %v478
        %v608 = vunpack.c.l.b16 %v479
        %v609 = vunpack.c.l.b16 %v480
        %v610 = vpack.c.b16 %v599, %v598
        %v611 = vpack.c.b16 %v601, %v600
        %v612 = vpack.c.b16 %v603, %v602
        %v613 = vpack.c.b16 %v605, %v604
        %v614 = vpack.c.b16 %v607, %v606
        %v615 = vpack.c.b16 %v609, %v608
        %v623 = vsel %vm530, %v443, 0
        %v626 = vsel %vm530, %v444, 0
        %628 = vmatprep.subr.bf16.mxu0 0
        %629 = vmatpush1.bf16.msra.mxu0 0
        %630 = vmatprep.subr.bf16.mxu0 0
        %631 = vmatpush1.bf16.msra.mxu0 0
        %632 = vmatprep.subr.bf16.mxu0 0
        %633 = vmatpush1.bf16.msra.mxu0 %v615
        %634 = vmatprep.subr.bf16.mxu0 0
        %635 = vmatpush1.bf16.msra.mxu0 %v614
        %636 = vmatprep.subr.bf16.mxu0 0
        %637 = vmatpush1.bf16.msra.mxu0 %v613
        %638 = vmatprep.subr.bf16.mxu0 0
        %639 = vmatpush1.bf16.msra.mxu0 %v612
        %640 = vmatprep.subr.bf16.mxu0 0
        %641 = vmatpush1.bf16.msra.mxu0 %v611
        %642 = vmatprep.subr.bf16.mxu0 0
        %643 = vmatpush1.bf16.msra.mxu0 %v610
        %644 = vmatprep.subr.bf16.mxu0 0
        %645 = vmatpush2.bf16.msra.mxu0 0
        %646 = vmatprep.subr.bf16.mxu0 0
        %647 = vmatpush2.bf16.msra.mxu0 0
        %648 = vmatprep.subr.bf16.mxu0 0
        %649 = vmatpush2.bf16.msra.mxu0 0
        %650 = vmatprep.subr.bf16.mxu0 0
        %651 = vmatpush2.bf16.msra.mxu0 0
        %652 = vmatprep.subr.bf16.mxu0 0
        %653 = vmatpush2.bf16.msra.mxu0 0
        %654 = vmatprep.subr.bf16.mxu0 0
        %655 = vmatpush2.bf16.msra.mxu0 0
        %656 = vmatprep.subr.bf16.mxu0 0
        %657 = vmatpush2.bf16.msra.mxu0 0
        %658 = vmatprep.subr.bf16.mxu0 0
        %659 = vmatpush2.bf16.msra.mxu0 0
        %660 = vmatprep.mubr.bf16.mxu0 0
        %661 = vmatmul.mubr.bf16.gmra.mxu0 %v623
        %v662 = vpop.f32.mrf.mxu0
        %v663 = vadd.f32 %v572, %v662
        %v664 = vpop.f32.mrf.mxu0
        %v665 = vpop.f32.mrf.mxu0
        %v666 = vadd.f32 %v575, %v665
        %v667 = vpop.f32.mrf.mxu0
        %668 = vmatprep.mubr.bf16.mxu0 0
        %669 = vmatmul.mubr.bf16.gmra.mxu0 %v626
        %v670 = vpop.f32.mrf.mxu0
        %v671 = vadd.f32 %v580, %v670
        %v672 = vpop.f32.mrf.mxu0
        %v673 = vpop.f32.mrf.mxu0
        %v674 = vadd.f32 %v583, %v673
        %v675 = vpop.f32.mrf.mxu0
        %676 = vdwg.mxu0
        %s677 = scalar_lea.vmem %s1, 192
        %v678 = vld [vmem:[%s677] sm:$0xf]
        %v679 = vld [vmem:[%s677 + $0x4] sm:$0xf]
        %v680 = vld [vmem:[%s677 + $0x8] sm:$0xf]
        %v681 = vld [vmem:[%s677 + $0xc] sm:$0xf]
        %v682 = vld [vmem:[%s677 + $0x10] sm:$0xf]
        %v683 = vld [vmem:[%s677 + $0x14] sm:$0xf]
        %v684 = vld [vmem:[%s677 + $0x18] sm:$0xf]
        %v685 = vld [vmem:[%s677 + $0x1c] sm:$0xf]
        %v686 = vld [vmem:[%s677 + $0x20] sm:$0xf]
        %v687 = vld [vmem:[%s677 + $0x24] sm:$0xf]
        %v688 = vld [vmem:[%s677 + $0x28] sm:$0xf]
        %v689 = vld [vmem:[%s677 + $0x2c] sm:$0xf]
        %v702 = vunpack.c.l.b16 %v678
        %v703 = vunpack.c.l.b16 %v679
        %v704 = vunpack.c.l.b16 %v680
        %v705 = vunpack.c.l.b16 %v681
        %v706 = vunpack.c.l.b16 %v682
        %v707 = vunpack.c.l.b16 %v683
        %v708 = vunpack.c.l.b16 %v684
        %v709 = vunpack.c.l.b16 %v685
        %v710 = vunpack.c.l.b16 %v686
        %v711 = vunpack.c.l.b16 %v687
        %v712 = vunpack.c.l.b16 %v688
        %v713 = vunpack.c.l.b16 %v689
        %v714 = vpack.c.b16 %v703, %v702
        %v715 = vpack.c.b16 %v705, %v704
        %v716 = vpack.c.b16 %v707, %v706
        %v717 = vpack.c.b16 %v709, %v708
        %v718 = vpack.c.b16 %v711, %v710
        %v719 = vpack.c.b16 %v713, %v712
        %v727 = vsel %vm530, %v455, 0
        %v730 = vsel %vm530, %v456, 0
        %732 = vmatprep.subr.bf16.mxu0 0
        %733 = vmatpush1.bf16.msra.mxu0 0
        %734 = vmatprep.subr.bf16.mxu0 0
        %735 = vmatpush1.bf16.msra.mxu0 0
        %736 = vmatprep.subr.bf16.mxu0 0
        %737 = vmatpush1.bf16.msra.mxu0 %v719
        %738 = vmatprep.subr.bf16.mxu0 0
        %739 = vmatpush1.bf16.msra.mxu0 %v718
        %740 = vmatprep.subr.bf16.mxu0 0
        %741 = vmatpush1.bf16.msra.mxu0 %v717
        %742 = vmatprep.subr.bf16.mxu0 0
        %743 = vmatpush1.bf16.msra.mxu0 %v716
        %744 = vmatprep.subr.bf16.mxu0 0
        %745 = vmatpush1.bf16.msra.mxu0 %v715
        %746 = vmatprep.subr.bf16.mxu0 0
        %747 = vmatpush1.bf16.msra.mxu0 %v714
        %748 = vmatprep.subr.bf16.mxu0 0
        %749 = vmatpush2.bf16.msra.mxu0 0
        %750 = vmatprep.subr.bf16.mxu0 0
        %751 = vmatpush2.bf16.msra.mxu0 0
        %752 = vmatprep.subr.bf16.mxu0 0
        %753 = vmatpush2.bf16.msra.mxu0 0
        %754 = vmatprep.subr.bf16.mxu0 0
        %755 = vmatpush2.bf16.msra.mxu0 0
        %756 = vmatprep.subr.bf16.mxu0 0
        %757 = vmatpush2.bf16.msra.mxu0 0
        %758 = vmatprep.subr.bf16.mxu0 0
        %759 = vmatpush2.bf16.msra.mxu0 0
        %760 = vmatprep.subr.bf16.mxu0 0
        %761 = vmatpush2.bf16.msra.mxu0 0
        %762 = vmatprep.subr.bf16.mxu0 0
        %763 = vmatpush2.bf16.msra.mxu0 0
        %764 = vmatprep.mubr.bf16.mxu0 0
        %765 = vmatmul.mubr.bf16.gmra.mxu0 %v727
        %v766 = vpop.f32.mrf.mxu0
        %v767 = vadd.f32 0.0, %v766
        %v768 = vpop.f32.mrf.mxu0
        %v769 = vpop.f32.mrf.mxu0
        %v770 = vadd.f32 0.0, %v769
        %v771 = vpop.f32.mrf.mxu0
        %772 = vmatprep.mubr.bf16.mxu0 0
        %773 = vmatmul.mubr.bf16.gmra.mxu0 %v730
        %v774 = vpop.f32.mrf.mxu0
        %v775 = vadd.f32 0.0, %v774
        %v776 = vpop.f32.mrf.mxu0
        %v777 = vpop.f32.mrf.mxu0
        %v778 = vadd.f32 0.0, %v777
        %v779 = vpop.f32.mrf.mxu0
        %780 = vdwg.mxu0
        %v781 = vadd.f32 %v663, %v767
        %v782 = vadd.f32 %v666, %v770
        %v783 = vadd.f32 %v671, %v775
        %v784 = vadd.f32 %v674, %v778
        %s785 = scalar_lea.vmem %s1, 288
        %v786 = vld [vmem:[%s785] sm:$0xf]
        %v787 = vld [vmem:[%s785 + $0x4] sm:$0xf]
        %v788 = vld [vmem:[%s785 + $0x8] sm:$0xf]
        %v789 = vld [vmem:[%s785 + $0xc] sm:$0xf]
        %v790 = vld [vmem:[%s785 + $0x10] sm:$0xf]
        %v791 = vld [vmem:[%s785 + $0x14] sm:$0xf]
        %v792 = vld [vmem:[%s785 + $0x18] sm:$0xf]
        %v793 = vld [vmem:[%s785 + $0x1c] sm:$0xf]
        %v794 = vld [vmem:[%s785 + $0x20] sm:$0xf]
        %v795 = vld [vmem:[%s785 + $0x24] sm:$0xf]
        %v796 = vld [vmem:[%s785 + $0x28] sm:$0xf]
        %v797 = vld [vmem:[%s785 + $0x2c] sm:$0xf]
        %v810 = vunpack.c.l.b16 %v786
        %v811 = vunpack.c.l.b16 %v787
        %v812 = vunpack.c.l.b16 %v788
        %v813 = vunpack.c.l.b16 %v789
        %v814 = vunpack.c.l.b16 %v790
        %v815 = vunpack.c.l.b16 %v791
        %v816 = vunpack.c.l.b16 %v792
        %v817 = vunpack.c.l.b16 %v793
        %v818 = vunpack.c.l.b16 %v794
        %v819 = vunpack.c.l.b16 %v795
        %v820 = vunpack.c.l.b16 %v796
        %v821 = vunpack.c.l.b16 %v797
        %v822 = vpack.c.b16 %v811, %v810
        %v823 = vpack.c.b16 %v813, %v812
        %v824 = vpack.c.b16 %v815, %v814
        %v825 = vpack.c.b16 %v817, %v816
        %v826 = vpack.c.b16 %v819, %v818
        %v827 = vpack.c.b16 %v821, %v820
        %v835 = vsel %vm530, %v461, 0
        %v838 = vsel %vm530, %v462, 0
        %840 = vmatprep.subr.bf16.mxu0 0
        %841 = vmatpush1.bf16.msra.mxu0 0
        %842 = vmatprep.subr.bf16.mxu0 0
        %843 = vmatpush1.bf16.msra.mxu0 0
        %844 = vmatprep.subr.bf16.mxu0 0
        %845 = vmatpush1.bf16.msra.mxu0 %v827
        %846 = vmatprep.subr.bf16.mxu0 0
        %847 = vmatpush1.bf16.msra.mxu0 %v826
        %848 = vmatprep.subr.bf16.mxu0 0
        %849 = vmatpush1.bf16.msra.mxu0 %v825
        %850 = vmatprep.subr.bf16.mxu0 0
        %851 = vmatpush1.bf16.msra.mxu0 %v824
        %852 = vmatprep.subr.bf16.mxu0 0
        %853 = vmatpush1.bf16.msra.mxu0 %v823
        %854 = vmatprep.subr.bf16.mxu0 0
        %855 = vmatpush1.bf16.msra.mxu0 %v822
        %856 = vmatprep.subr.bf16.mxu0 0
        %857 = vmatpush2.bf16.msra.mxu0 0
        %858 = vmatprep.subr.bf16.mxu0 0
        %859 = vmatpush2.bf16.msra.mxu0 0
        %860 = vmatprep.subr.bf16.mxu0 0
        %861 = vmatpush2.bf16.msra.mxu0 0
        %862 = vmatprep.subr.bf16.mxu0 0
        %863 = vmatpush2.bf16.msra.mxu0 0
        %864 = vmatprep.subr.bf16.mxu0 0
        %865 = vmatpush2.bf16.msra.mxu0 0
        %866 = vmatprep.subr.bf16.mxu0 0
        %867 = vmatpush2.bf16.msra.mxu0 0
        %868 = vmatprep.subr.bf16.mxu0 0
        %869 = vmatpush2.bf16.msra.mxu0 0
        %870 = vmatprep.subr.bf16.mxu0 0
        %871 = vmatpush2.bf16.msra.mxu0 0
        %872 = vmatprep.mubr.bf16.mxu0 0
        %873 = vmatmul.mubr.bf16.gmra.mxu0 %v835
        %v874 = vpop.f32.mrf.mxu0
        %v875 = vadd.f32 0.0, %v874
        %v876 = vpop.f32.mrf.mxu0
        %v877 = vpop.f32.mrf.mxu0
        %v878 = vadd.f32 0.0, %v877
        %v879 = vpop.f32.mrf.mxu0
        %880 = vmatprep.mubr.bf16.mxu0 0
        %881 = vmatmul.mubr.bf16.gmra.mxu0 %v838
        %v882 = vpop.f32.mrf.mxu0
        %v883 = vadd.f32 0.0, %v882
        %v884 = vpop.f32.mrf.mxu0
        %v885 = vpop.f32.mrf.mxu0
        %v886 = vadd.f32 0.0, %v885
        %v887 = vpop.f32.mrf.mxu0
        %888 = vdwg.mxu0
        %v889 = vadd.f32 %v781, %v875
        %v890 = vadd.f32 %v782, %v878
        %v891 = vadd.f32 %v783, %v883
        %v892 = vadd.f32 %v784, %v886
        %s893 = scalar_lea.vmem %s1, 384
        %v894 = vld [vmem:[%s893] sm:$0xf]
        %v895 = vld [vmem:[%s893 + $0x4] sm:$0xf]
        %v896 = vld [vmem:[%s893 + $0x8] sm:$0xf]
        %v897 = vld [vmem:[%s893 + $0xc] sm:$0xf]
        %v898 = vld [vmem:[%s893 + $0x10] sm:$0xf]
        %v899 = vld [vmem:[%s893 + $0x14] sm:$0xf]
        %v900 = vld [vmem:[%s893 + $0x18] sm:$0xf]
        %v901 = vld [vmem:[%s893 + $0x1c] sm:$0xf]
        %v902 = vld [vmem:[%s893 + $0x20] sm:$0xf]
        %v903 = vld [vmem:[%s893 + $0x24] sm:$0xf]
        %v904 = vld [vmem:[%s893 + $0x28] sm:$0xf]
        %v905 = vld [vmem:[%s893 + $0x2c] sm:$0xf]
        %v918 = vunpack.c.l.b16 %v894
        %v919 = vunpack.c.l.b16 %v895
        %v920 = vunpack.c.l.b16 %v896
        %v921 = vunpack.c.l.b16 %v897
        %v922 = vunpack.c.l.b16 %v898
        %v923 = vunpack.c.l.b16 %v899
        %v924 = vunpack.c.l.b16 %v900
        %v925 = vunpack.c.l.b16 %v901
        %v926 = vunpack.c.l.b16 %v902
        %v927 = vunpack.c.l.b16 %v903
        %v928 = vunpack.c.l.b16 %v904
        %v929 = vunpack.c.l.b16 %v905
        %v930 = vpack.c.b16 %v919, %v918
        %v931 = vpack.c.b16 %v921, %v920
        %v932 = vpack.c.b16 %v923, %v922
        %v933 = vpack.c.b16 %v925, %v924
        %v934 = vpack.c.b16 %v927, %v926
        %v935 = vpack.c.b16 %v929, %v928
        %v943 = vsel %vm530, %v467, 0
        %v946 = vsel %vm530, %v468, 0
        %948 = vmatprep.subr.bf16.mxu0 0
        %949 = vmatpush1.bf16.msra.mxu0 0
        %950 = vmatprep.subr.bf16.mxu0 0
        %951 = vmatpush1.bf16.msra.mxu0 0
        %952 = vmatprep.subr.bf16.mxu0 0
        %953 = vmatpush1.bf16.msra.mxu0 %v935
        %954 = vmatprep.subr.bf16.mxu0 0
        %955 = vmatpush1.bf16.msra.mxu0 %v934
        %956 = vmatprep.subr.bf16.mxu0 0
        %957 = vmatpush1.bf16.msra.mxu0 %v933
        %958 = vmatprep.subr.bf16.mxu0 0
        %959 = vmatpush1.bf16.msra.mxu0 %v932
        %960 = vmatprep.subr.bf16.mxu0 0
        %961 = vmatpush1.bf16.msra.mxu0 %v931
        %962 = vmatprep.subr.bf16.mxu0 0
        %963 = vmatpush1.bf16.msra.mxu0 %v930
        %964 = vmatprep.subr.bf16.mxu0 0
        %965 = vmatpush2.bf16.msra.mxu0 0
        %966 = vmatprep.subr.bf16.mxu0 0
        %967 = vmatpush2.bf16.msra.mxu0 0
        %968 = vmatprep.subr.bf16.mxu0 0
        %969 = vmatpush2.bf16.msra.mxu0 0
        %970 = vmatprep.subr.bf16.mxu0 0
        %971 = vmatpush2.bf16.msra.mxu0 0
        %972 = vmatprep.subr.bf16.mxu0 0
        %973 = vmatpush2.bf16.msra.mxu0 0
        %974 = vmatprep.subr.bf16.mxu0 0
        %975 = vmatpush2.bf16.msra.mxu0 0
        %976 = vmatprep.subr.bf16.mxu0 0
        %977 = vmatpush2.bf16.msra.mxu0 0
        %978 = vmatprep.subr.bf16.mxu0 0
        %979 = vmatpush2.bf16.msra.mxu0 0
        %980 = vmatprep.mubr.bf16.mxu0 0
        %981 = vmatmul.mubr.bf16.gmra.mxu0 %v943
        %v982 = vpop.f32.mrf.mxu0
        %v983 = vadd.f32 0.0, %v982
        %v984 = vpop.f32.mrf.mxu0
        %v985 = vpop.f32.mrf.mxu0
        %v986 = vadd.f32 0.0, %v985
        %v987 = vpop.f32.mrf.mxu0
        %988 = vmatprep.mubr.bf16.mxu0 0
        %989 = vmatmul.mubr.bf16.gmra.mxu0 %v946
        %v990 = vpop.f32.mrf.mxu0
        %v991 = vadd.f32 0.0, %v990
        %v992 = vpop.f32.mrf.mxu0
        %v993 = vpop.f32.mrf.mxu0
        %v994 = vadd.f32 0.0, %v993
        %v995 = vpop.f32.mrf.mxu0
        %996 = vdwg.mxu0
        %v997 = vadd.f32 %v889, %v983
        %v998 = vadd.f32 %v890, %v986
        %v999 = vadd.f32 %v891, %v991
        %v1000 = vadd.f32 %v892, %v994
        %v1001 = vld [vmem:[%s2] sm:$0x1]
        %v1003 = vlaneseq
        %v1004 = vshrl.u32 %v1003, 7
        %v1005 = vsub.s32 0, %v1004
        %v1006 = vrot.slane %v1001, %v1005
        %v1008 = vadd.f32 %v997, %v1006
        %v1009 = vadd.f32 %v998, %v1006
        %v1010 = vadd.f32 %v999, %v1006
        %v1011 = vadd.f32 %v1000, %v1006
        %v1012 = vmax.f32 %v1008, 0.0
        %v1013 = vmax.f32 %v1009, 0.0
        %v1014 = vmax.f32 %v1010, 0.0
        %v1015 = vmax.f32 %v1011, 0.0
        %s1016 = scalar_lea.vmem %s1, 48
        %v1017 = vld [vmem:[%s1016] sm:$0xf]
        %v1018 = vld [vmem:[%s1016 + $0x4] sm:$0xf]
        %v1019 = vld [vmem:[%s1016 + $0x8] sm:$0xf]
        %v1020 = vld [vmem:[%s1016 + $0xc] sm:$0xf]
        %v1021 = vld [vmem:[%s1016 + $0x10] sm:$0xf]
        %v1022 = vld [vmem:[%s1016 + $0x14] sm:$0xf]
        %v1023 = vld [vmem:[%s1016 + $0x18] sm:$0xf]
        %v1024 = vld [vmem:[%s1016 + $0x1c] sm:$0xf]
        %v1025 = vld [vmem:[%s1016 + $0x20] sm:$0xf]
        %v1026 = vld [vmem:[%s1016 + $0x24] sm:$0xf]
        %v1027 = vld [vmem:[%s1016 + $0x28] sm:$0xf]
        %v1028 = vld [vmem:[%s1016 + $0x2c] sm:$0xf]
        %s1029 = scalar_lea.vmem %s1, 144
        %v1030 = vld [vmem:[%s1029] sm:$0xf]
        %v1031 = vld [vmem:[%s1029 + $0x4] sm:$0xf]
        %v1032 = vld [vmem:[%s1029 + $0x8] sm:$0xf]
        %v1033 = vld [vmem:[%s1029 + $0xc] sm:$0xf]
        %v1034 = vld [vmem:[%s1029 + $0x10] sm:$0xf]
        %v1035 = vld [vmem:[%s1029 + $0x14] sm:$0xf]
        %v1036 = vld [vmem:[%s1029 + $0x18] sm:$0xf]
        %v1037 = vld [vmem:[%s1029 + $0x1c] sm:$0xf]
        %v1038 = vld [vmem:[%s1029 + $0x20] sm:$0xf]
        %v1039 = vld [vmem:[%s1029 + $0x24] sm:$0xf]
        %v1040 = vld [vmem:[%s1029 + $0x28] sm:$0xf]
        %v1041 = vld [vmem:[%s1029 + $0x2c] sm:$0xf]
        %v1054 = vunpack.c.l.b16 %v1030
        %v1055 = vunpack.c.l.b16 %v1031
        %v1056 = vunpack.c.l.b16 %v1032
        %v1057 = vunpack.c.l.b16 %v1033
        %v1058 = vunpack.c.l.b16 %v1034
        %v1059 = vunpack.c.l.b16 %v1035
        %v1060 = vunpack.c.l.b16 %v1036
        %v1061 = vunpack.c.l.b16 %v1037
        %v1062 = vunpack.c.l.b16 %v1038
        %v1063 = vunpack.c.l.b16 %v1039
        %v1064 = vunpack.c.l.b16 %v1040
        %v1065 = vunpack.c.l.b16 %v1041
        %v1066 = vpack.c.b16 %v1055, %v1054
        %v1067 = vpack.c.b16 %v1057, %v1056
        %v1068 = vpack.c.b16 %v1059, %v1058
        %v1069 = vpack.c.b16 %v1061, %v1060
        %v1070 = vpack.c.b16 %v1063, %v1062
        %v1071 = vpack.c.b16 %v1065, %v1064
        %1078 = vmatprep.subr.bf16.mxu0 0
        %1079 = vmatpush1.bf16.msra.mxu0 0
        %1080 = vmatprep.subr.bf16.mxu0 0
        %1081 = vmatpush1.bf16.msra.mxu0 0
        %1082 = vmatprep.subr.bf16.mxu0 0
        %1083 = vmatpush1.bf16.msra.mxu0 %v1071
        %1084 = vmatprep.subr.bf16.mxu0 0
        %1085 = vmatpush1.bf16.msra.mxu0 %v1070
        %1086 = vmatprep.subr.bf16.mxu0 0
        %1087 = vmatpush1.bf16.msra.mxu0 %v1069
        %1088 = vmatprep.subr.bf16.mxu0 0
        %1089 = vmatpush1.bf16.msra.mxu0 %v1068
        %1090 = vmatprep.subr.bf16.mxu0 0
        %1091 = vmatpush1.bf16.msra.mxu0 %v1067
        %1092 = vmatprep.subr.bf16.mxu0 0
        %1093 = vmatpush1.bf16.msra.mxu0 %v1066
        %1094 = vmatprep.subr.bf16.mxu0 0
        %1095 = vmatpush2.bf16.msra.mxu0 0
        %1096 = vmatprep.subr.bf16.mxu0 0
        %1097 = vmatpush2.bf16.msra.mxu0 0
        %1098 = vmatprep.subr.bf16.mxu0 0
        %1099 = vmatpush2.bf16.msra.mxu0 0
        %1100 = vmatprep.subr.bf16.mxu0 0
        %1101 = vmatpush2.bf16.msra.mxu0 0
        %1102 = vmatprep.subr.bf16.mxu0 0
        %1103 = vmatpush2.bf16.msra.mxu0 0
        %1104 = vmatprep.subr.bf16.mxu0 0
        %1105 = vmatpush2.bf16.msra.mxu0 0
        %1106 = vmatprep.subr.bf16.mxu0 0
        %1107 = vmatpush2.bf16.msra.mxu0 0
        %1108 = vmatprep.subr.bf16.mxu0 0
        %1109 = vmatpush2.bf16.msra.mxu0 0
        %1110 = vmatprep.mubr.bf16.mxu0 0
        %1111 = vmatmul.mubr.bf16.gmra.mxu0 %v532
        %v1112 = vpop.f32.mrf.mxu0
        %v1113 = vadd.f32 0.0, %v1112
        %v1114 = vpop.f32.mrf.mxu0
        %v1115 = vpop.f32.mrf.mxu0
        %v1116 = vadd.f32 0.0, %v1115
        %v1117 = vpop.f32.mrf.mxu0
        %1118 = vmatprep.mubr.bf16.mxu0 0
        %1119 = vmatmul.mubr.bf16.gmra.mxu0 %v535
        %v1120 = vpop.f32.mrf.mxu0
        %v1121 = vadd.f32 0.0, %v1120
        %v1122 = vpop.f32.mrf.mxu0
        %v1123 = vpop.f32.mrf.mxu0
        %v1124 = vadd.f32 0.0, %v1123
        %v1125 = vpop.f32.mrf.mxu0
        %1126 = vdwg.mxu0
        %v1139 = vunpack.c.l.b16 %v1017
        %v1140 = vunpack.c.l.b16 %v1018
        %v1141 = vunpack.c.l.b16 %v1019
        %v1142 = vunpack.c.l.b16 %v1020
        %v1143 = vunpack.c.l.b16 %v1021
        %v1144 = vunpack.c.l.b16 %v1022
        %v1145 = vunpack.c.l.b16 %v1023
        %v1146 = vunpack.c.l.b16 %v1024
        %v1147 = vunpack.c.l.b16 %v1025
        %v1148 = vunpack.c.l.b16 %v1026
        %v1149 = vunpack.c.l.b16 %v1027
        %v1150 = vunpack.c.l.b16 %v1028
        %v1151 = vpack.c.b16 %v1140, %v1139
        %v1152 = vpack.c.b16 %v1142, %v1141
        %v1153 = vpack.c.b16 %v1144, %v1143
        %v1154 = vpack.c.b16 %v1146, %v1145
        %v1155 = vpack.c.b16 %v1148, %v1147
        %v1156 = vpack.c.b16 %v1150, %v1149
        %1163 = vmatprep.subr.bf16.mxu0 0
        %1164 = vmatpush1.bf16.msra.mxu0 0
        %1165 = vmatprep.subr.bf16.mxu0 0
        %1166 = vmatpush1.bf16.msra.mxu0 0
        %1167 = vmatprep.subr.bf16.mxu0 0
        %1168 = vmatpush1.bf16.msra.mxu0 %v1156
        %1169 = vmatprep.subr.bf16.mxu0 0
        %1170 = vmatpush1.bf16.msra.mxu0 %v1155
        %1171 = vmatprep.subr.bf16.mxu0 0
        %1172 = vmatpush1.bf16.msra.mxu0 %v1154
        %1173 = vmatprep.subr.bf16.mxu0 0
        %1174 = vmatpush1.bf16.msra.mxu0 %v1153
        %1175 = vmatprep.subr.bf16.mxu0 0
        %1176 = vmatpush1.bf16.msra.mxu0 %v1152
        %1177 = vmatprep.subr.bf16.mxu0 0
        %1178 = vmatpush1.bf16.msra.mxu0 %v1151
        %1179 = vmatprep.subr.bf16.mxu0 0
        %1180 = vmatpush2.bf16.msra.mxu0 0
        %1181 = vmatprep.subr.bf16.mxu0 0
        %1182 = vmatpush2.bf16.msra.mxu0 0
        %1183 = vmatprep.subr.bf16.mxu0 0
        %1184 = vmatpush2.bf16.msra.mxu0 0
        %1185 = vmatprep.subr.bf16.mxu0 0
        %1186 = vmatpush2.bf16.msra.mxu0 0
        %1187 = vmatprep.subr.bf16.mxu0 0
        %1188 = vmatpush2.bf16.msra.mxu0 0
        %1189 = vmatprep.subr.bf16.mxu0 0
        %1190 = vmatpush2.bf16.msra.mxu0 0
        %1191 = vmatprep.subr.bf16.mxu0 0
        %1192 = vmatpush2.bf16.msra.mxu0 0
        %1193 = vmatprep.subr.bf16.mxu0 0
        %1194 = vmatpush2.bf16.msra.mxu0 0
        %1195 = vmatprep.mubr.bf16.mxu0 0
        %1196 = vmatmul.mubr.bf16.gmra.mxu0 %v623
        %v1197 = vpop.f32.mrf.mxu0
        %v1198 = vadd.f32 %v1113, %v1197
        %v1199 = vpop.f32.mrf.mxu0
        %v1200 = vpop.f32.mrf.mxu0
        %v1201 = vadd.f32 %v1116, %v1200
        %v1202 = vpop.f32.mrf.mxu0
        %1203 = vmatprep.mubr.bf16.mxu0 0
        %1204 = vmatmul.mubr.bf16.gmra.mxu0 %v626
        %v1205 = vpop.f32.mrf.mxu0
        %v1206 = vadd.f32 %v1121, %v1205
        %v1207 = vpop.f32.mrf.mxu0
        %v1208 = vpop.f32.mrf.mxu0
        %v1209 = vadd.f32 %v1124, %v1208
        %v1210 = vpop.f32.mrf.mxu0
        %1211 = vdwg.mxu0
        %s1212 = scalar_lea.vmem %s1, 240
        %v1213 = vld [vmem:[%s1212] sm:$0xf]
        %v1214 = vld [vmem:[%s1212 + $0x4] sm:$0xf]
        %v1215 = vld [vmem:[%s1212 + $0x8] sm:$0xf]
        %v1216 = vld [vmem:[%s1212 + $0xc] sm:$0xf]
        %v1217 = vld [vmem:[%s1212 + $0x10] sm:$0xf]
        %v1218 = vld [vmem:[%s1212 + $0x14] sm:$0xf]
        %v1219 = vld [vmem:[%s1212 + $0x18] sm:$0xf]
        %v1220 = vld [vmem:[%s1212 + $0x1c] sm:$0xf]
        %v1221 = vld [vmem:[%s1212 + $0x20] sm:$0xf]
        %v1222 = vld [vmem:[%s1212 + $0x24] sm:$0xf]
        %v1223 = vld [vmem:[%s1212 + $0x28] sm:$0xf]
        %v1224 = vld [vmem:[%s1212 + $0x2c] sm:$0xf]
        %v1237 = vunpack.c.l.b16 %v1213
        %v1238 = vunpack.c.l.b16 %v1214
        %v1239 = vunpack.c.l.b16 %v1215
        %v1240 = vunpack.c.l.b16 %v1216
        %v1241 = vunpack.c.l.b16 %v1217
        %v1242 = vunpack.c.l.b16 %v1218
        %v1243 = vunpack.c.l.b16 %v1219
        %v1244 = vunpack.c.l.b16 %v1220
        %v1245 = vunpack.c.l.b16 %v1221
        %v1246 = vunpack.c.l.b16 %v1222
        %v1247 = vunpack.c.l.b16 %v1223
        %v1248 = vunpack.c.l.b16 %v1224
        %v1249 = vpack.c.b16 %v1238, %v1237
        %v1250 = vpack.c.b16 %v1240, %v1239
        %v1251 = vpack.c.b16 %v1242, %v1241
        %v1252 = vpack.c.b16 %v1244, %v1243
        %v1253 = vpack.c.b16 %v1246, %v1245
        %v1254 = vpack.c.b16 %v1248, %v1247
        %1261 = vmatprep.subr.bf16.mxu0 0
        %1262 = vmatpush1.bf16.msra.mxu0 0
        %1263 = vmatprep.subr.bf16.mxu0 0
        %1264 = vmatpush1.bf16.msra.mxu0 0
        %1265 = vmatprep.subr.bf16.mxu0 0
        %1266 = vmatpush1.bf16.msra.mxu0 %v1254
        %1267 = vmatprep.subr.bf16.mxu0 0
        %1268 = vmatpush1.bf16.msra.mxu0 %v1253
        %1269 = vmatprep.subr.bf16.mxu0 0
        %1270 = vmatpush1.bf16.msra.mxu0 %v1252
        %1271 = vmatprep.subr.bf16.mxu0 0
        %1272 = vmatpush1.bf16.msra.mxu0 %v1251
        %1273 = vmatprep.subr.bf16.mxu0 0
        %1274 = vmatpush1.bf16.msra.mxu0 %v1250
        %1275 = vmatprep.subr.bf16.mxu0 0
        %1276 = vmatpush1.bf16.msra.mxu0 %v1249
        %1277 = vmatprep.subr.bf16.mxu0 0
        %1278 = vmatpush2.bf16.msra.mxu0 0
        %1279 = vmatprep.subr.bf16.mxu0 0
        %1280 = vmatpush2.bf16.msra.mxu0 0
        %1281 = vmatprep.subr.bf16.mxu0 0
        %1282 = vmatpush2.bf16.msra.mxu0 0
        %1283 = vmatprep.subr.bf16.mxu0 0
        %1284 = vmatpush2.bf16.msra.mxu0 0
        %1285 = vmatprep.subr.bf16.mxu0 0
        %1286 = vmatpush2.bf16.msra.mxu0 0
        %1287 = vmatprep.subr.bf16.mxu0 0
        %1288 = vmatpush2.bf16.msra.mxu0 0
        %1289 = vmatprep.subr.bf16.mxu0 0
        %1290 = vmatpush2.bf16.msra.mxu0 0
        %1291 = vmatprep.subr.bf16.mxu0 0
        %1292 = vmatpush2.bf16.msra.mxu0 0
        %1293 = vmatprep.mubr.bf16.mxu0 0
        %1294 = vmatmul.mubr.bf16.gmra.mxu0 %v727
        %v1295 = vpop.f32.mrf.mxu0
        %v1296 = vadd.f32 0.0, %v1295
        %v1297 = vpop.f32.mrf.mxu0
        %v1298 = vpop.f32.mrf.mxu0
        %v1299 = vadd.f32 0.0, %v1298
        %v1300 = vpop.f32.mrf.mxu0
        %1301 = vmatprep.mubr.bf16.mxu0 0
        %1302 = vmatmul.mubr.bf16.gmra.mxu0 %v730
        %v1303 = vpop.f32.mrf.mxu0
        %v1304 = vadd.f32 0.0, %v1303
        %v1305 = vpop.f32.mrf.mxu0
        %v1306 = vpop.f32.mrf.mxu0
        %v1307 = vadd.f32 0.0, %v1306
        %v1308 = vpop.f32.mrf.mxu0
        %1309 = vdwg.mxu0
        %v1310 = vadd.f32 %v1198, %v1296
        %v1311 = vadd.f32 %v1201, %v1299
        %v1312 = vadd.f32 %v1206, %v1304
        %v1313 = vadd.f32 %v1209, %v1307
        %s1314 = scalar_lea.vmem %s1, 336
        %v1315 = vld [vmem:[%s1314] sm:$0xf]
        %v1316 = vld [vmem:[%s1314 + $0x4] sm:$0xf]
        %v1317 = vld [vmem:[%s1314 + $0x8] sm:$0xf]
        %v1318 = vld [vmem:[%s1314 + $0xc] sm:$0xf]
        %v1319 = vld [vmem:[%s1314 + $0x10] sm:$0xf]
        %v1320 = vld [vmem:[%s1314 + $0x14] sm:$0xf]
        %v1321 = vld [vmem:[%s1314 + $0x18] sm:$0xf]
        %v1322 = vld [vmem:[%s1314 + $0x1c] sm:$0xf]
        %v1323 = vld [vmem:[%s1314 + $0x20] sm:$0xf]
        %v1324 = vld [vmem:[%s1314 + $0x24] sm:$0xf]
        %v1325 = vld [vmem:[%s1314 + $0x28] sm:$0xf]
        %v1326 = vld [vmem:[%s1314 + $0x2c] sm:$0xf]
        %v1339 = vunpack.c.l.b16 %v1315
        %v1340 = vunpack.c.l.b16 %v1316
        %v1341 = vunpack.c.l.b16 %v1317
        %v1342 = vunpack.c.l.b16 %v1318
        %v1343 = vunpack.c.l.b16 %v1319
        %v1344 = vunpack.c.l.b16 %v1320
        %v1345 = vunpack.c.l.b16 %v1321
        %v1346 = vunpack.c.l.b16 %v1322
        %v1347 = vunpack.c.l.b16 %v1323
        %v1348 = vunpack.c.l.b16 %v1324
        %v1349 = vunpack.c.l.b16 %v1325
        %v1350 = vunpack.c.l.b16 %v1326
        %v1351 = vpack.c.b16 %v1340, %v1339
        %v1352 = vpack.c.b16 %v1342, %v1341
        %v1353 = vpack.c.b16 %v1344, %v1343
        %v1354 = vpack.c.b16 %v1346, %v1345
        %v1355 = vpack.c.b16 %v1348, %v1347
        %v1356 = vpack.c.b16 %v1350, %v1349
        %1363 = vmatprep.subr.bf16.mxu0 0
        %1364 = vmatpush1.bf16.msra.mxu0 0
        %1365 = vmatprep.subr.bf16.mxu0 0
        %1366 = vmatpush1.bf16.msra.mxu0 0
        %1367 = vmatprep.subr.bf16.mxu0 0
        %1368 = vmatpush1.bf16.msra.mxu0 %v1356
        %1369 = vmatprep.subr.bf16.mxu0 0
        %1370 = vmatpush1.bf16.msra.mxu0 %v1355
        %1371 = vmatprep.subr.bf16.mxu0 0
        %1372 = vmatpush1.bf16.msra.mxu0 %v1354
        %1373 = vmatprep.subr.bf16.mxu0 0
        %1374 = vmatpush1.bf16.msra.mxu0 %v1353
        %1375 = vmatprep.subr.bf16.mxu0 0
        %1376 = vmatpush1.bf16.msra.mxu0 %v1352
        %1377 = vmatprep.subr.bf16.mxu0 0
        %1378 = vmatpush1.bf16.msra.mxu0 %v1351
        %1379 = vmatprep.subr.bf16.mxu0 0
        %1380 = vmatpush2.bf16.msra.mxu0 0
        %1381 = vmatprep.subr.bf16.mxu0 0
        %1382 = vmatpush2.bf16.msra.mxu0 0
        %1383 = vmatprep.subr.bf16.mxu0 0
        %1384 = vmatpush2.bf16.msra.mxu0 0
        %1385 = vmatprep.subr.bf16.mxu0 0
        %1386 = vmatpush2.bf16.msra.mxu0 0
        %1387 = vmatprep.subr.bf16.mxu0 0
        %1388 = vmatpush2.bf16.msra.mxu0 0
        %1389 = vmatprep.subr.bf16.mxu0 0
        %1390 = vmatpush2.bf16.msra.mxu0 0
        %1391 = vmatprep.subr.bf16.mxu0 0
        %1392 = vmatpush2.bf16.msra.mxu0 0
        %1393 = vmatprep.subr.bf16.mxu0 0
        %1394 = vmatpush2.bf16.msra.mxu0 0
        %1395 = vmatprep.mubr.bf16.mxu0 0
        %1396 = vmatmul.mubr.bf16.gmra.mxu0 %v835
        %v1397 = vpop.f32.mrf.mxu0
        %v1398 = vadd.f32 0.0, %v1397
        %v1399 = vpop.f32.mrf.mxu0
        %v1400 = vpop.f32.mrf.mxu0
        %v1401 = vadd.f32 0.0, %v1400
        %v1402 = vpop.f32.mrf.mxu0
        %1403 = vmatprep.mubr.bf16.mxu0 0
        %1404 = vmatmul.mubr.bf16.gmra.mxu0 %v838
        %v1405 = vpop.f32.mrf.mxu0
        %v1406 = vadd.f32 0.0, %v1405
        %v1407 = vpop.f32.mrf.mxu0
        %v1408 = vpop.f32.mrf.mxu0
        %v1409 = vadd.f32 0.0, %v1408
        %v1410 = vpop.f32.mrf.mxu0
        %1411 = vdwg.mxu0
        %v1412 = vadd.f32 %v1310, %v1398
        %v1413 = vadd.f32 %v1311, %v1401
        %v1414 = vadd.f32 %v1312, %v1406
        %v1415 = vadd.f32 %v1313, %v1409
        %s1416 = scalar_lea.vmem %s1, 432
        %v1417 = vld [vmem:[%s1416] sm:$0xf]
        %v1418 = vld [vmem:[%s1416 + $0x4] sm:$0xf]
        %v1419 = vld [vmem:[%s1416 + $0x8] sm:$0xf]
        %v1420 = vld [vmem:[%s1416 + $0xc] sm:$0xf]
        %v1421 = vld [vmem:[%s1416 + $0x10] sm:$0xf]
        %v1422 = vld [vmem:[%s1416 + $0x14] sm:$0xf]
        %v1423 = vld [vmem:[%s1416 + $0x18] sm:$0xf]
        %v1424 = vld [vmem:[%s1416 + $0x1c] sm:$0xf]
        %v1425 = vld [vmem:[%s1416 + $0x20] sm:$0xf]
        %v1426 = vld [vmem:[%s1416 + $0x24] sm:$0xf]
        %v1427 = vld [vmem:[%s1416 + $0x28] sm:$0xf]
        %v1428 = vld [vmem:[%s1416 + $0x2c] sm:$0xf]
        %v1441 = vunpack.c.l.b16 %v1417
        %v1442 = vunpack.c.l.b16 %v1418
        %v1443 = vunpack.c.l.b16 %v1419
        %v1444 = vunpack.c.l.b16 %v1420
        %v1445 = vunpack.c.l.b16 %v1421
        %v1446 = vunpack.c.l.b16 %v1422
        %v1447 = vunpack.c.l.b16 %v1423
        %v1448 = vunpack.c.l.b16 %v1424
        %v1449 = vunpack.c.l.b16 %v1425
        %v1450 = vunpack.c.l.b16 %v1426
        %v1451 = vunpack.c.l.b16 %v1427
        %v1452 = vunpack.c.l.b16 %v1428
        %v1453 = vpack.c.b16 %v1442, %v1441
        %v1454 = vpack.c.b16 %v1444, %v1443
        %v1455 = vpack.c.b16 %v1446, %v1445
        %v1456 = vpack.c.b16 %v1448, %v1447
        %v1457 = vpack.c.b16 %v1450, %v1449
        %v1458 = vpack.c.b16 %v1452, %v1451
        %1465 = vmatprep.subr.bf16.mxu0 0
        %1466 = vmatpush1.bf16.msra.mxu0 0
        %1467 = vmatprep.subr.bf16.mxu0 0
        %1468 = vmatpush1.bf16.msra.mxu0 0
        %1469 = vmatprep.subr.bf16.mxu0 0
        %1470 = vmatpush1.bf16.msra.mxu0 %v1458
        %1471 = vmatprep.subr.bf16.mxu0 0
        %1472 = vmatpush1.bf16.msra.mxu0 %v1457
        %1473 = vmatprep.subr.bf16.mxu0 0
        %1474 = vmatpush1.bf16.msra.mxu0 %v1456
        %1475 = vmatprep.subr.bf16.mxu0 0
        %1476 = vmatpush1.bf16.msra.mxu0 %v1455
        %1477 = vmatprep.subr.bf16.mxu0 0
        %1478 = vmatpush1.bf16.msra.mxu0 %v1454
        %1479 = vmatprep.subr.bf16.mxu0 0
        %1480 = vmatpush1.bf16.msra.mxu0 %v1453
        %1481 = vmatprep.subr.bf16.mxu0 0
        %1482 = vmatpush2.bf16.msra.mxu0 0
        %1483 = vmatprep.subr.bf16.mxu0 0
        %1484 = vmatpush2.bf16.msra.mxu0 0
        %1485 = vmatprep.subr.bf16.mxu0 0
        %1486 = vmatpush2.bf16.msra.mxu0 0
        %1487 = vmatprep.subr.bf16.mxu0 0
        %1488 = vmatpush2.bf16.msra.mxu0 0
        %1489 = vmatprep.subr.bf16.mxu0 0
        %1490 = vmatpush2.bf16.msra.mxu0 0
        %1491 = vmatprep.subr.bf16.mxu0 0
        %1492 = vmatpush2.bf16.msra.mxu0 0
        %1493 = vmatprep.subr.bf16.mxu0 0
        %1494 = vmatpush2.bf16.msra.mxu0 0
        %1495 = vmatprep.subr.bf16.mxu0 0
        %1496 = vmatpush2.bf16.msra.mxu0 0
        %1497 = vmatprep.mubr.bf16.mxu0 0
        %1498 = vmatmul.mubr.bf16.gmra.mxu0 %v943
        %v1499 = vpop.f32.mrf.mxu0
        %v1500 = vadd.f32 0.0, %v1499
        %v1501 = vpop.f32.mrf.mxu0
        %v1502 = vpop.f32.mrf.mxu0
        %v1503 = vadd.f32 0.0, %v1502
        %v1504 = vpop.f32.mrf.mxu0
        %1505 = vmatprep.mubr.bf16.mxu0 0
        %1506 = vmatmul.mubr.bf16.gmra.mxu0 %v946
        %v1507 = vpop.f32.mrf.mxu0
        %v1508 = vadd.f32 0.0, %v1507
        %v1509 = vpop.f32.mrf.mxu0
        %v1510 = vpop.f32.mrf.mxu0
        %v1511 = vadd.f32 0.0, %v1510
        %v1512 = vpop.f32.mrf.mxu0
        %1513 = vdwg.mxu0
        %v1514 = vadd.f32 %v1412, %v1500
        %v1515 = vadd.f32 %v1413, %v1503
        %v1516 = vadd.f32 %v1414, %v1508
        %v1517 = vadd.f32 %v1415, %v1511
        %v1518 = vadd.f32 %v1514, %v1006
        %v1519 = vadd.f32 %v1515, %v1006
        %v1520 = vadd.f32 %v1516, %v1006
        %v1521 = vadd.f32 %v1517, %v1006
        %v1522 = vmax.f32 %v1518, 0.0
        %v1523 = vmax.f32 %v1519, 0.0
        %v1524 = vmax.f32 %v1520, 0.0
        %v1525 = vmax.f32 %v1521, 0.0
        %v1526 = vadd.f32 %v1012, %v1522
        %v1527 = vadd.f32 %v1013, %v1523
        %v1528 = vadd.f32 %v1014, %v1524
        %v1529 = vadd.f32 %v1015, %v1525
        %v1530 = vmul.f32 %v1526, 0.25
        %v1531 = vmul.f32 %v1527, 0.25
        %v1532 = vmul.f32 %v1528, 0.25
        %v1533 = vmul.f32 %v1529, 0.25
        %v1534 = vld [vmem:[%s3] sm:$0xff]
        %v1535 = vld [vmem:[%s3 + $0x8] sm:$0x3f]
        %vm1536 = vcmask 228352
        %v1538 = vsel %vm1536, %v1534, 0
        %v1541 = vsel %vm1536, %v1535, 0
        %vm1543 = vcmask 1043456
        %v1545 = vsel %vm1543, %v1533, 0
        %1547 = vmatprep.subr.mxu0 0.0
        %1548 = vmatpush1.msra.mxu0 0.0
        %1549 = vmatprep.subr.mxu0 0.0
        %1550 = vmatpush1.msra.mxu0 0.0
        %1551 = vmatprep.subr.mxu0 0.0
        %1552 = vmatpush1.msra.mxu0 0.0
        %1553 = vmatprep.subr.mxu0 0.0
        %1554 = vmatpush1.msra.mxu0 0.0
        %1555 = vmatprep.subr.mxu0 0.0
        %1556 = vmatpush1.msra.mxu0 0.0
        %1557 = vmatprep.subr.mxu0 0.0
        %1558 = vmatpush1.msra.mxu0 0.0
        %1559 = vmatprep.subr.mxu0 0.0
        %1560 = vmatpush1.msra.mxu0 0.0
        %1561 = vmatprep.subr.mxu0 0.0
        %1562 = vmatpush1.msra.mxu0 0.0
        %1563 = vmatprep.subr.mxu0 0.0
        %1564 = vmatpush1.msra.mxu0 0.0
        %1565 = vmatprep.subr.mxu0 0.0
        %1566 = vmatpush1.msra.mxu0 0.0
        %1567 = vmatprep.subr.mxu0 0.0
        %1568 = vmatpush1.msra.mxu0 0.0
        %1569 = vmatprep.subr.mxu0 0.0
        %1570 = vmatpush1.msra.mxu0 0.0
        %1571 = vmatprep.subr.mxu0 0.0
        %1572 = vmatpush1.msra.mxu0 %v1545
        %1573 = vmatprep.subr.mxu0 0.0
        %1574 = vmatpush1.msra.mxu0 %v1532
        %1575 = vmatprep.subr.mxu0 0.0
        %1576 = vmatpush1.msra.mxu0 %v1531
        %1577 = vmatprep.subr.mxu0 0.0
        %1578 = vmatpush1.msra.mxu0 %v1530
        %1579 = vmatprep.subr.mxu0 0.0
        %1580 = vmatpush2.msra.mxu0 0.0
        %1581 = vmatprep.subr.mxu0 0.0
        %1582 = vmatpush2.msra.mxu0 0.0
        %1583 = vmatprep.subr.mxu0 0.0
        %1584 = vmatpush2.msra.mxu0 0.0
        %1585 = vmatprep.subr.mxu0 0.0
        %1586 = vmatpush2.msra.mxu0 0.0
        %1587 = vmatprep.subr.mxu0 0.0
        %1588 = vmatpush2.msra.mxu0 0.0
        %1589 = vmatprep.subr.mxu0 0.0
        %1590 = vmatpush2.msra.mxu0 0.0
        %1591 = vmatprep.subr.mxu0 0.0
        %1592 = vmatpush2.msra.mxu0 0.0
        %1593 = vmatprep.subr.mxu0 0.0
        %1594 = vmatpush2.msra.mxu0 0.0
        %1595 = vmatprep.subr.mxu0 0.0
        %1596 = vmatpush2.msra.mxu0 0.0
        %1597 = vmatprep.subr.mxu0 0.0
        %1598 = vmatpush2.msra.mxu0 0.0
        %1599 = vmatprep.subr.mxu0 0.0
        %1600 = vmatpush2.msra.mxu0 0.0
        %1601 = vmatprep.subr.mxu0 0.0
        %1602 = vmatpush2.msra.mxu0 0.0
        %1603 = vmatprep.subr.mxu0 0.0
        %1604 = vmatpush2.msra.mxu0 0.0
        %1605 = vmatprep.subr.mxu0 0.0
        %1606 = vmatpush2.msra.mxu0 0.0
        %1607 = vmatprep.subr.mxu0 0.0
        %1608 = vmatpush2.msra.mxu0 0.0
        %1609 = vmatprep.subr.mxu0 0.0
        %1610 = vmatpush2.msra.mxu0 0.0
        %1611 = vmatprep.mubr.f32.mxu0 0.0
        %1612 = vmatmul.mubr.f32.gmra.mxu0 %v1538
        %v1613 = vpop.f32.mrf.mxu0
        %v1614 = vadd.f32 0.0, %v1613
        %v1615 = vpop.f32.mrf.mxu0
        %1616 = vmatprep.mubr.f32.mxu0 0.0
        %1617 = vmatmul.mubr.f32.gmra.mxu0 %v1541
        %v1618 = vpop.f32.mrf.mxu0
        %v1619 = vadd.f32 0.0, %v1618
        %v1620 = vpop.f32.mrf.mxu0
        %1621 = vdwg.mxu0
        %v1622 = vpack.c.bf16 %v1619, %v1614
        %v1623 = vld [vmem:[%s4] sm:$0xf]
        %v1624 = vld [vmem:[%s4 + $0x4] sm:$0xf]
        %v1625 = vld [vmem:[%s4 + $0x8] sm:$0xf]
        %v1626 = vld [vmem:[%s4 + $0xc] sm:$0xf]
        %v1627 = vld [vmem:[%s4 + $0x10] sm:$0xf]
        %v1628 = vld [vmem:[%s4 + $0x14] sm:$0xf]
        %v1629 = vld [vmem:[%s4 + $0x18] sm:$0xf]
        %v1630 = vld [vmem:[%s4 + $0x1c] sm:$0xf]
        %v1631 = vld [vmem:[%s4 + $0x20] sm:$0xf]
        %v1632 = vld [vmem:[%s4 + $0x24] sm:$0xf]
        %v1633 = vld [vmem:[%s4 + $0x28] sm:$0x3]
        %s1634 = scalar_lea.vmem %s4, 88
        %v1635 = vld [vmem:[%s1634] sm:$0xf]
        %v1636 = vld [vmem:[%s1634 + $0x4] sm:$0xf]
        %v1637 = vld [vmem:[%s1634 + $0x8] sm:$0xf]
        %v1638 = vld [vmem:[%s1634 + $0xc] sm:$0xf]
        %v1639 = vld [vmem:[%s1634 + $0x10] sm:$0xf]
        %v1640 = vld [vmem:[%s1634 + $0x14] sm:$0xf]
        %v1641 = vld [vmem:[%s1634 + $0x18] sm:$0xf]
        %v1642 = vld [vmem:[%s1634 + $0x1c] sm:$0xf]
        %v1643 = vld [vmem:[%s1634 + $0x20] sm:$0xf]
        %v1644 = vld [vmem:[%s1634 + $0x24] sm:$0xf]
        %v1645 = vld [vmem:[%s1634 + $0x28] sm:$0x3]
        %v1647 = vshrl.u32 %v1622, 16
        %v1649 = vshll.u32 %v1622, 16
        %v1651 = vrot.slane %v1649, 1
        %v1652 = vor.u32 %v1647, %v1651
        %v1664 = vunpack.c.l.b16 %v1635
        %v1665 = vunpack.c.l.b16 %v1636
        %v1666 = vunpack.c.l.b16 %v1637
        %v1667 = vunpack.c.l.b16 %v1638
        %v1668 = vunpack.c.l.b16 %v1639
        %v1669 = vunpack.c.l.b16 %v1640
        %v1670 = vunpack.c.l.b16 %v1641
        %v1671 = vunpack.c.l.b16 %v1642
        %v1672 = vunpack.c.l.b16 %v1643
        %v1673 = vunpack.c.l.b16 %v1644
        %v1674 = vunpack.c.l.b16 %v1645
        %v1675 = vpack.c.b16 %v1665, %v1664
        %v1676 = vpack.c.b16 %v1667, %v1666
        %v1677 = vpack.c.b16 %v1669, %v1668
        %v1678 = vpack.c.b16 %v1671, %v1670
        %v1679 = vpack.c.b16 %v1673, %v1672
        %v1680 = vpack.c.b16 %v1674, %v1674
        %vm1686 = vcmask 687104
        %v1688 = vsel %vm1686, %v1652, 0
        %vm1690 = vcmask 1041408
        %v1692 = vsel %vm1690, %v1680, 0
        %1694 = vmatprep.subr.bf16.mxu0 0
        %1695 = vmatpush1.bf16.msra.mxu0 0
        %1696 = vmatprep.subr.bf16.mxu0 0
        %1697 = vmatpush1.bf16.msra.mxu0 0
        %1698 = vmatprep.subr.bf16.mxu0 0
        %1699 = vmatpush1.bf16.msra.mxu0 %v1692
        %1700 = vmatprep.subr.bf16.mxu0 0
        %1701 = vmatpush1.bf16.msra.mxu0 %v1679
        %1702 = vmatprep.subr.bf16.mxu0 0
        %1703 = vmatpush1.bf16.msra.mxu0 %v1678
        %1704 = vmatprep.subr.bf16.mxu0 0
        %1705 = vmatpush1.bf16.msra.mxu0 %v1677
        %1706 = vmatprep.subr.bf16.mxu0 0
        %1707 = vmatpush1.bf16.msra.mxu0 %v1676
        %1708 = vmatprep.subr.bf16.mxu0 0
        %1709 = vmatpush1.bf16.msra.mxu0 %v1675
        %1710 = vmatprep.subr.bf16.mxu0 0
        %1711 = vmatpush2.bf16.msra.mxu0 0
        %1712 = vmatprep.subr.bf16.mxu0 0
        %1713 = vmatpush2.bf16.msra.mxu0 0
        %1714 = vmatprep.subr.bf16.mxu0 0
        %1715 = vmatpush2.bf16.msra.mxu0 0
        %1716 = vmatprep.subr.bf16.mxu0 0
        %1717 = vmatpush2.bf16.msra.mxu0 0
        %1718 = vmatprep.subr.bf16.mxu0 0
        %1719 = vmatpush2.bf16.msra.mxu0 0
        %1720 = vmatprep.subr.bf16.mxu0 0
        %1721 = vmatpush2.bf16.msra.mxu0 0
        %1722 = vmatprep.subr.bf16.mxu0 0
        %1723 = vmatpush2.bf16.msra.mxu0 0
        %1724 = vmatprep.subr.bf16.mxu0 0
        %1725 = vmatpush2.bf16.msra.mxu0 0
        %1726 = vmatprep.mubr.bf16.mxu0 0
        %1727 = vmatmul.mubr.bf16.gmra.mxu0 %v1688
        %v1728 = vpop.f32.mrf.mxu0
        %v1729 = vadd.f32 0.0, %v1728
        %v1730 = vpop.f32.mrf.mxu0
        %v1731 = vpop.f32.mrf.mxu0
        %v1732 = vadd.f32 0.0, %v1731
        %v1733 = vpop.f32.mrf.mxu0
        %1734 = vdwg.mxu0
        %v1746 = vunpack.c.l.b16 %v1623
        %v1747 = vunpack.c.l.b16 %v1624
        %v1748 = vunpack.c.l.b16 %v1625
        %v1749 = vunpack.c.l.b16 %v1626
        %v1750 = vunpack.c.l.b16 %v1627
        %v1751 = vunpack.c.l.b16 %v1628
        %v1752 = vunpack.c.l.b16 %v1629
        %v1753 = vunpack.c.l.b16 %v1630
        %v1754 = vunpack.c.l.b16 %v1631
        %v1755 = vunpack.c.l.b16 %v1632
        %v1756 = vunpack.c.l.b16 %v1633
        %v1757 = vpack.c.b16 %v1747, %v1746
        %v1758 = vpack.c.b16 %v1749, %v1748
        %v1759 = vpack.c.b16 %v1751, %v1750
        %v1760 = vpack.c.b16 %v1753, %v1752
        %v1761 = vpack.c.b16 %v1755, %v1754
        %v1762 = vpack.c.b16 %v1756, %v1756
        %v1768 = vsel %vm1686, %v1622, 0
        %v1771 = vsel %vm1690, %v1762, 0
        %1773 = vmatprep.subr.bf16.mxu0 0
        %1774 = vmatpush1.bf16.msra.mxu0 0
        %1775 = vmatprep.subr.bf16.mxu0 0
        %1776 = vmatpush1.bf16.msra.mxu0 0
        %1777 = vmatprep.subr.bf16.mxu0 0
        %1778 = vmatpush1.bf16.msra.mxu0 %v1771
        %1779 = vmatprep.subr.bf16.mxu0 0
        %1780 = vmatpush1.bf16.msra.mxu0 %v1761
        %1781 = vmatprep.subr.bf16.mxu0 0
        %1782 = vmatpush1.bf16.msra.mxu0 %v1760
        %1783 = vmatprep.subr.bf16.mxu0 0
        %1784 = vmatpush1.bf16.msra.mxu0 %v1759
        %1785 = vmatprep.subr.bf16.mxu0 0
        %1786 = vmatpush1.bf16.msra.mxu0 %v1758
        %1787 = vmatprep.subr.bf16.mxu0 0
        %1788 = vmatpush1.bf16.msra.mxu0 %v1757
        %1789 = vmatprep.subr.bf16.mxu0 0
        %1790 = vmatpush2.bf16.msra.mxu0 0
        %1791 = vmatprep.subr.bf16.mxu0 0
        %1792 = vmatpush2.bf16.msra.mxu0 0
        %1793 = vmatprep.subr.bf16.mxu0 0
        %1794 = vmatpush2.bf16.msra.mxu0 0
        %1795 = vmatprep.subr.bf16.mxu0 0
        %1796 = vmatpush2.bf16.msra.mxu0 0
        %1797 = vmatprep.subr.bf16.mxu0 0
        %1798 = vmatpush2.bf16.msra.mxu0 0
        %1799 = vmatprep.subr.bf16.mxu0 0
        %1800 = vmatpush2.bf16.msra.mxu0 0
        %1801 = vmatprep.subr.bf16.mxu0 0
        %1802 = vmatpush2.bf16.msra.mxu0 0
        %1803 = vmatprep.subr.bf16.mxu0 0
        %1804 = vmatpush2.bf16.msra.mxu0 0
        %1805 = vmatprep.mubr.bf16.mxu0 0
        %1806 = vmatmul.mubr.bf16.gmra.mxu0 %v1768
        %v1807 = vpop.f32.mrf.mxu0
        %v1808 = vadd.f32 %v1729, %v1807
        %v1809 = vpop.f32.mrf.mxu0
        %v1810 = vpop.f32.mrf.mxu0
        %v1811 = vadd.f32 %v1732, %v1810
        %v1812 = vpop.f32.mrf.mxu0
        %1813 = vdwg.mxu0
        %s1814 = scalar_lea.vmem %s4, 176
        %v1815 = vld [vmem:[%s1814] sm:$0xf]
        %v1816 = vld [vmem:[%s1814 + $0x4] sm:$0xf]
        %v1817 = vld [vmem:[%s1814 + $0x8] sm:$0xf]
        %v1818 = vld [vmem:[%s1814 + $0xc] sm:$0xf]
        %v1819 = vld [vmem:[%s1814 + $0x10] sm:$0xf]
        %v1820 = vld [vmem:[%s1814 + $0x14] sm:$0xf]
        %v1821 = vld [vmem:[%s1814 + $0x18] sm:$0xf]
        %v1822 = vld [vmem:[%s1814 + $0x1c] sm:$0xf]
        %v1823 = vld [vmem:[%s1814 + $0x20] sm:$0xf]
        %v1824 = vld [vmem:[%s1814 + $0x24] sm:$0xf]
        %v1825 = vld [vmem:[%s1814 + $0x28] sm:$0x3]
        %v1827 = vrot.slane %v1622, 1
        %v1839 = vunpack.c.l.b16 %v1815
        %v1840 = vunpack.c.l.b16 %v1816
        %v1841 = vunpack.c.l.b16 %v1817
        %v1842 = vunpack.c.l.b16 %v1818
        %v1843 = vunpack.c.l.b16 %v1819
        %v1844 = vunpack.c.l.b16 %v1820
        %v1845 = vunpack.c.l.b16 %v1821
        %v1846 = vunpack.c.l.b16 %v1822
        %v1847 = vunpack.c.l.b16 %v1823
        %v1848 = vunpack.c.l.b16 %v1824
        %v1849 = vunpack.c.l.b16 %v1825
        %v1850 = vpack.c.b16 %v1840, %v1839
        %v1851 = vpack.c.b16 %v1842, %v1841
        %v1852 = vpack.c.b16 %v1844, %v1843
        %v1853 = vpack.c.b16 %v1846, %v1845
        %v1854 = vpack.c.b16 %v1848, %v1847
        %v1855 = vpack.c.b16 %v1849, %v1849
        %v1862 = vsel %vm1686, %v1827, 0
        %v1865 = vsel %vm1690, %v1855, 0
        %1867 = vmatprep.subr.bf16.mxu0 0
        %1868 = vmatpush1.bf16.msra.mxu0 0
        %1869 = vmatprep.subr.bf16.mxu0 0
        %1870 = vmatpush1.bf16.msra.mxu0 0
        %1871 = vmatprep.subr.bf16.mxu0 0
        %1872 = vmatpush1.bf16.msra.mxu0 %v1865
        %1873 = vmatprep.subr.bf16.mxu0 0
        %1874 = vmatpush1.bf16.msra.mxu0 %v1854
        %1875 = vmatprep.subr.bf16.mxu0 0
        %1876 = vmatpush1.bf16.msra.mxu0 %v1853
        %1877 = vmatprep.subr.bf16.mxu0 0
        %1878 = vmatpush1.bf16.msra.mxu0 %v1852
        %1879 = vmatprep.subr.bf16.mxu0 0
        %1880 = vmatpush1.bf16.msra.mxu0 %v1851
        %1881 = vmatprep.subr.bf16.mxu0 0
        %1882 = vmatpush1.bf16.msra.mxu0 %v1850
        %1883 = vmatprep.subr.bf16.mxu0 0
        %1884 = vmatpush2.bf16.msra.mxu0 0
        %1885 = vmatprep.subr.bf16.mxu0 0
        %1886 = vmatpush2.bf16.msra.mxu0 0
        %1887 = vmatprep.subr.bf16.mxu0 0
        %1888 = vmatpush2.bf16.msra.mxu0 0
        %1889 = vmatprep.subr.bf16.mxu0 0
        %1890 = vmatpush2.bf16.msra.mxu0 0
        %1891 = vmatprep.subr.bf16.mxu0 0
        %1892 = vmatpush2.bf16.msra.mxu0 0
        %1893 = vmatprep.subr.bf16.mxu0 0
        %1894 = vmatpush2.bf16.msra.mxu0 0
        %1895 = vmatprep.subr.bf16.mxu0 0
        %1896 = vmatpush2.bf16.msra.mxu0 0
        %1897 = vmatprep.subr.bf16.mxu0 0
        %1898 = vmatpush2.bf16.msra.mxu0 0
        %1899 = vmatprep.mubr.bf16.mxu0 0
        %1900 = vmatmul.mubr.bf16.gmra.mxu0 %v1862
        %v1901 = vpop.f32.mrf.mxu0
        %v1902 = vadd.f32 0.0, %v1901
        %v1903 = vpop.f32.mrf.mxu0
        %v1904 = vpop.f32.mrf.mxu0
        %v1905 = vadd.f32 0.0, %v1904
        %v1906 = vpop.f32.mrf.mxu0
        %1907 = vdwg.mxu0
        %v1908 = vadd.f32 %v1808, %v1902
        %v1909 = vadd.f32 %v1811, %v1905
        %s1910 = scalar_lea.vmem %s4, 264
        %v1911 = vld [vmem:[%s1910] sm:$0xf]
        %v1912 = vld [vmem:[%s1910 + $0x4] sm:$0xf]
        %v1913 = vld [vmem:[%s1910 + $0x8] sm:$0xf]
        %v1914 = vld [vmem:[%s1910 + $0xc] sm:$0xf]
        %v1915 = vld [vmem:[%s1910 + $0x10] sm:$0xf]
        %v1916 = vld [vmem:[%s1910 + $0x14] sm:$0xf]
        %v1917 = vld [vmem:[%s1910 + $0x18] sm:$0xf]
        %v1918 = vld [vmem:[%s1910 + $0x1c] sm:$0xf]
        %v1919 = vld [vmem:[%s1910 + $0x20] sm:$0xf]
        %v1920 = vld [vmem:[%s1910 + $0x24] sm:$0xf]
        %v1921 = vld [vmem:[%s1910 + $0x28] sm:$0x3]
        %v1922 = vrot.slane %v1647, 1
        %v1923 = vrot.slane %v1649, 2
        %v1924 = vor.u32 %v1922, %v1923
        %v1936 = vunpack.c.l.b16 %v1911
        %v1937 = vunpack.c.l.b16 %v1912
        %v1938 = vunpack.c.l.b16 %v1913
        %v1939 = vunpack.c.l.b16 %v1914
        %v1940 = vunpack.c.l.b16 %v1915
        %v1941 = vunpack.c.l.b16 %v1916
        %v1942 = vunpack.c.l.b16 %v1917
        %v1943 = vunpack.c.l.b16 %v1918
        %v1944 = vunpack.c.l.b16 %v1919
        %v1945 = vunpack.c.l.b16 %v1920
        %v1946 = vunpack.c.l.b16 %v1921
        %v1947 = vpack.c.b16 %v1937, %v1936
        %v1948 = vpack.c.b16 %v1939, %v1938
        %v1949 = vpack.c.b16 %v1941, %v1940
        %v1950 = vpack.c.b16 %v1943, %v1942
        %v1951 = vpack.c.b16 %v1945, %v1944
        %v1952 = vpack.c.b16 %v1946, %v1946
        %v1959 = vsel %vm1686, %v1924, 0
        %v1962 = vsel %vm1690, %v1952, 0
        %1964 = vmatprep.subr.bf16.mxu0 0
        %1965 = vmatpush1.bf16.msra.mxu0 0
        %1966 = vmatprep.subr.bf16.mxu0 0
        %1967 = vmatpush1.bf16.msra.mxu0 0
        %1968 = vmatprep.subr.bf16.mxu0 0
        %1969 = vmatpush1.bf16.msra.mxu0 %v1962
        %1970 = vmatprep.subr.bf16.mxu0 0
        %1971 = vmatpush1.bf16.msra.mxu0 %v1951
        %1972 = vmatprep.subr.bf16.mxu0 0
        %1973 = vmatpush1.bf16.msra.mxu0 %v1950
        %1974 = vmatprep.subr.bf16.mxu0 0
        %1975 = vmatpush1.bf16.msra.mxu0 %v1949
        %1976 = vmatprep.subr.bf16.mxu0 0
        %1977 = vmatpush1.bf16.msra.mxu0 %v1948
        %1978 = vmatprep.subr.bf16.mxu0 0
        %1979 = vmatpush1.bf16.msra.mxu0 %v1947
        %1980 = vmatprep.subr.bf16.mxu0 0
        %1981 = vmatpush2.bf16.msra.mxu0 0
        %1982 = vmatprep.subr.bf16.mxu0 0
        %1983 = vmatpush2.bf16.msra.mxu0 0
        %1984 = vmatprep.subr.bf16.mxu0 0
        %1985 = vmatpush2.bf16.msra.mxu0 0
        %1986 = vmatprep.subr.bf16.mxu0 0
        %1987 = vmatpush2.bf16.msra.mxu0 0
        %1988 = vmatprep.subr.bf16.mxu0 0
        %1989 = vmatpush2.bf16.msra.mxu0 0
        %1990 = vmatprep.subr.bf16.mxu0 0
        %1991 = vmatpush2.bf16.msra.mxu0 0
        %1992 = vmatprep.subr.bf16.mxu0 0
        %1993 = vmatpush2.bf16.msra.mxu0 0
        %1994 = vmatprep.subr.bf16.mxu0 0
        %1995 = vmatpush2.bf16.msra.mxu0 0
        %1996 = vmatprep.mubr.bf16.mxu0 0
        %1997 = vmatmul.mubr.bf16.gmra.mxu0 %v1959
        %v1998 = vpop.f32.mrf.mxu0
        %v1999 = vadd.f32 0.0, %v1998
        %v2000 = vpop.f32.mrf.mxu0
        %v2001 = vpop.f32.mrf.mxu0
        %v2002 = vadd.f32 0.0, %v2001
        %v2003 = vpop.f32.mrf.mxu0
        %2004 = vdwg.mxu0
        %v2005 = vadd.f32 %v1908, %v1999
        %v2006 = vadd.f32 %v1909, %v2002
        %s2007 = scalar_lea.vmem %s4, 352
        %v2008 = vld [vmem:[%s2007] sm:$0xf]
        %v2009 = vld [vmem:[%s2007 + $0x4] sm:$0xf]
        %v2010 = vld [vmem:[%s2007 + $0x8] sm:$0xf]
        %v2011 = vld [vmem:[%s2007 + $0xc] sm:$0xf]
        %v2012 = vld [vmem:[%s2007 + $0x10] sm:$0xf]
        %v2013 = vld [vmem:[%s2007 + $0x14] sm:$0xf]
        %v2014 = vld [vmem:[%s2007 + $0x18] sm:$0xf]
        %v2015 = vld [vmem:[%s2007 + $0x1c] sm:$0xf]
        %v2016 = vld [vmem:[%s2007 + $0x20] sm:$0xf]
        %v2017 = vld [vmem:[%s2007 + $0x24] sm:$0xf]
        %v2018 = vld [vmem:[%s2007 + $0x28] sm:$0x3]
        %v2019 = vrot.slane %v1622, 2
        %v2031 = vunpack.c.l.b16 %v2008
        %v2032 = vunpack.c.l.b16 %v2009
        %v2033 = vunpack.c.l.b16 %v2010
        %v2034 = vunpack.c.l.b16 %v2011
        %v2035 = vunpack.c.l.b16 %v2012
        %v2036 = vunpack.c.l.b16 %v2013
        %v2037 = vunpack.c.l.b16 %v2014
        %v2038 = vunpack.c.l.b16 %v2015
        %v2039 = vunpack.c.l.b16 %v2016
        %v2040 = vunpack.c.l.b16 %v2017
        %v2041 = vunpack.c.l.b16 %v2018
        %v2042 = vpack.c.b16 %v2032, %v2031
        %v2043 = vpack.c.b16 %v2034, %v2033
        %v2044 = vpack.c.b16 %v2036, %v2035
        %v2045 = vpack.c.b16 %v2038, %v2037
        %v2046 = vpack.c.b16 %v2040, %v2039
        %v2047 = vpack.c.b16 %v2041, %v2041
        %v2054 = vsel %vm1686, %v2019, 0
        %v2057 = vsel %vm1690, %v2047, 0
        %2059 = vmatprep.subr.bf16.mxu0 0
        %2060 = vmatpush1.bf16.msra.mxu0 0
        %2061 = vmatprep.subr.bf16.mxu0 0
        %2062 = vmatpush1.bf16.msra.mxu0 0
        %2063 = vmatprep.subr.bf16.mxu0 0
        %2064 = vmatpush1.bf16.msra.mxu0 %v2057
        %2065 = vmatprep.subr.bf16.mxu0 0
        %2066 = vmatpush1.bf16.msra.mxu0 %v2046
        %2067 = vmatprep.subr.bf16.mxu0 0
        %2068 = vmatpush1.bf16.msra.mxu0 %v2045
        %2069 = vmatprep.subr.bf16.mxu0 0
        %2070 = vmatpush1.bf16.msra.mxu0 %v2044
        %2071 = vmatprep.subr.bf16.mxu0 0
        %2072 = vmatpush1.bf16.msra.mxu0 %v2043
        %2073 = vmatprep.subr.bf16.mxu0 0
        %2074 = vmatpush1.bf16.msra.mxu0 %v2042
        %2075 = vmatprep.subr.bf16.mxu0 0
        %2076 = vmatpush2.bf16.msra.mxu0 0
        %2077 = vmatprep.subr.bf16.mxu0 0
        %2078 = vmatpush2.bf16.msra.mxu0 0
        %2079 = vmatprep.subr.bf16.mxu0 0
        %2080 = vmatpush2.bf16.msra.mxu0 0
        %2081 = vmatprep.subr.bf16.mxu0 0
        %2082 = vmatpush2.bf16.msra.mxu0 0
        %2083 = vmatprep.subr.bf16.mxu0 0
        %2084 = vmatpush2.bf16.msra.mxu0 0
        %2085 = vmatprep.subr.bf16.mxu0 0
        %2086 = vmatpush2.bf16.msra.mxu0 0
        %2087 = vmatprep.subr.bf16.mxu0 0
        %2088 = vmatpush2.bf16.msra.mxu0 0
        %2089 = vmatprep.subr.bf16.mxu0 0
        %2090 = vmatpush2.bf16.msra.mxu0 0
        %2091 = vmatprep.mubr.bf16.mxu0 0
        %2092 = vmatmul.mubr.bf16.gmra.mxu0 %v2054
        %v2093 = vpop.f32.mrf.mxu0
        %v2094 = vadd.f32 0.0, %v2093
        %v2095 = vpop.f32.mrf.mxu0
        %v2096 = vpop.f32.mrf.mxu0
        %v2097 = vadd.f32 0.0, %v2096
        %v2098 = vpop.f32.mrf.mxu0
        %2099 = vdwg.mxu0
        %v2100 = vadd.f32 %v2005, %v2094
        %v2101 = vadd.f32 %v2006, %v2097
        %v2102 = vld [vmem:[%s5] sm:$0x1]
        %v2104 = vlaneseq
        %v2105 = vshrl.u32 %v2104, 7
        %v2106 = vsub.s32 0, %v2105
        %v2107 = vrot.slane %v2102, %v2106
        %v2109 = vadd.f32 %v2100, %v2107
        %v2110 = vadd.f32 %v2101, %v2107
        %v2111 = vmax.f32 %v2109, 0.0
        %v2112 = vmax.f32 %v2110, 0.0
        %s2113 = scalar_lea.vmem %s4, 44
        %v2114 = vld [vmem:[%s2113] sm:$0xf]
        %v2115 = vld [vmem:[%s2113 + $0x4] sm:$0xf]
        %v2116 = vld [vmem:[%s2113 + $0x8] sm:$0xf]
        %v2117 = vld [vmem:[%s2113 + $0xc] sm:$0xf]
        %v2118 = vld [vmem:[%s2113 + $0x10] sm:$0xf]
        %v2119 = vld [vmem:[%s2113 + $0x14] sm:$0xf]
        %v2120 = vld [vmem:[%s2113 + $0x18] sm:$0xf]
        %v2121 = vld [vmem:[%s2113 + $0x1c] sm:$0xf]
        %v2122 = vld [vmem:[%s2113 + $0x20] sm:$0xf]
        %v2123 = vld [vmem:[%s2113 + $0x24] sm:$0xf]
        %v2124 = vld [vmem:[%s2113 + $0x28] sm:$0x3]
        %s2125 = scalar_lea.vmem %s4, 132
        %v2126 = vld [vmem:[%s2125] sm:$0xf]
        %v2127 = vld [vmem:[%s2125 + $0x4] sm:$0xf]
        %v2128 = vld [vmem:[%s2125 + $0x8] sm:$0xf]
        %v2129 = vld [vmem:[%s2125 + $0xc] sm:$0xf]
        %v2130 = vld [vmem:[%s2125 + $0x10] sm:$0xf]
        %v2131 = vld [vmem:[%s2125 + $0x14] sm:$0xf]
        %v2132 = vld [vmem:[%s2125 + $0x18] sm:$0xf]
        %v2133 = vld [vmem:[%s2125 + $0x1c] sm:$0xf]
        %v2134 = vld [vmem:[%s2125 + $0x20] sm:$0xf]
        %v2135 = vld [vmem:[%s2125 + $0x24] sm:$0xf]
        %v2136 = vld [vmem:[%s2125 + $0x28] sm:$0x3]
        %v2148 = vunpack.c.l.b16 %v2126
        %v2149 = vunpack.c.l.b16 %v2127
        %v2150 = vunpack.c.l.b16 %v2128
        %v2151 = vunpack.c.l.b16 %v2129
        %v2152 = vunpack.c.l.b16 %v2130
        %v2153 = vunpack.c.l.b16 %v2131
        %v2154 = vunpack.c.l.b16 %v2132
        %v2155 = vunpack.c.l.b16 %v2133
        %v2156 = vunpack.c.l.b16 %v2134
        %v2157 = vunpack.c.l.b16 %v2135
        %v2158 = vunpack.c.l.b16 %v2136
        %v2159 = vpack.c.b16 %v2149, %v2148
        %v2160 = vpack.c.b16 %v2151, %v2150
        %v2161 = vpack.c.b16 %v2153, %v2152
        %v2162 = vpack.c.b16 %v2155, %v2154
        %v2163 = vpack.c.b16 %v2157, %v2156
        %v2164 = vpack.c.b16 %v2158, %v2158
        %v2171 = vsel %vm1690, %v2164, 0
        %2173 = vmatprep.subr.bf16.mxu0 0
        %2174 = vmatpush1.bf16.msra.mxu0 0
        %2175 = vmatprep.subr.bf16.mxu0 0
        %2176 = vmatpush1.bf16.msra.mxu0 0
        %2177 = vmatprep.subr.bf16.mxu0 0
        %2178 = vmatpush1.bf16.msra.mxu0 %v2171
        %2179 = vmatprep.subr.bf16.mxu0 0
        %2180 = vmatpush1.bf16.msra.mxu0 %v2163
        %2181 = vmatprep.subr.bf16.mxu0 0
        %2182 = vmatpush1.bf16.msra.mxu0 %v2162
        %2183 = vmatprep.subr.bf16.mxu0 0
        %2184 = vmatpush1.bf16.msra.mxu0 %v2161
        %2185 = vmatprep.subr.bf16.mxu0 0
        %2186 = vmatpush1.bf16.msra.mxu0 %v2160
        %2187 = vmatprep.subr.bf16.mxu0 0
        %2188 = vmatpush1.bf16.msra.mxu0 %v2159
        %2189 = vmatprep.subr.bf16.mxu0 0
        %2190 = vmatpush2.bf16.msra.mxu0 0
        %2191 = vmatprep.subr.bf16.mxu0 0
        %2192 = vmatpush2.bf16.msra.mxu0 0
        %2193 = vmatprep.subr.bf16.mxu0 0
        %2194 = vmatpush2.bf16.msra.mxu0 0
        %2195 = vmatprep.subr.bf16.mxu0 0
        %2196 = vmatpush2.bf16.msra.mxu0 0
        %2197 = vmatprep.subr.bf16.mxu0 0
        %2198 = vmatpush2.bf16.msra.mxu0 0
        %2199 = vmatprep.subr.bf16.mxu0 0
        %2200 = vmatpush2.bf16.msra.mxu0 0
        %2201 = vmatprep.subr.bf16.mxu0 0
        %2202 = vmatpush2.bf16.msra.mxu0 0
        %2203 = vmatprep.subr.bf16.mxu0 0
        %2204 = vmatpush2.bf16.msra.mxu0 0
        %2205 = vmatprep.mubr.bf16.mxu0 0
        %2206 = vmatmul.mubr.bf16.gmra.mxu0 %v1688
        %v2207 = vpop.f32.mrf.mxu0
        %v2208 = vadd.f32 0.0, %v2207
        %v2209 = vpop.f32.mrf.mxu0
        %v2210 = vpop.f32.mrf.mxu0
        %v2211 = vadd.f32 0.0, %v2210
        %v2212 = vpop.f32.mrf.mxu0
        %2213 = vdwg.mxu0
        %v2225 = vunpack.c.l.b16 %v2114
        %v2226 = vunpack.c.l.b16 %v2115
        %v2227 = vunpack.c.l.b16 %v2116
        %v2228 = vunpack.c.l.b16 %v2117
        %v2229 = vunpack.c.l.b16 %v2118
        %v2230 = vunpack.c.l.b16 %v2119
        %v2231 = vunpack.c.l.b16 %v2120
        %v2232 = vunpack.c.l.b16 %v2121
        %v2233 = vunpack.c.l.b16 %v2122
        %v2234 = vunpack.c.l.b16 %v2123
        %v2235 = vunpack.c.l.b16 %v2124
        %v2236 = vpack.c.b16 %v2226, %v2225
        %v2237 = vpack.c.b16 %v2228, %v2227
        %v2238 = vpack.c.b16 %v2230, %v2229
        %v2239 = vpack.c.b16 %v2232, %v2231
        %v2240 = vpack.c.b16 %v2234, %v2233
        %v2241 = vpack.c.b16 %v2235, %v2235
        %v2248 = vsel %vm1690, %v2241, 0
        %2250 = vmatprep.subr.bf16.mxu0 0
        %2251 = vmatpush1.bf16.msra.mxu0 0
        %2252 = vmatprep.subr.bf16.mxu0 0
        %2253 = vmatpush1.bf16.msra.mxu0 0
        %2254 = vmatprep.subr.bf16.mxu0 0
        %2255 = vmatpush1.bf16.msra.mxu0 %v2248
        %2256 = vmatprep.subr.bf16.mxu0 0
        %2257 = vmatpush1.bf16.msra.mxu0 %v2240
        %2258 = vmatprep.subr.bf16.mxu0 0
        %2259 = vmatpush1.bf16.msra.mxu0 %v2239
        %2260 = vmatprep.subr.bf16.mxu0 0
        %2261 = vmatpush1.bf16.msra.mxu0 %v2238
        %2262 = vmatprep.subr.bf16.mxu0 0
        %2263 = vmatpush1.bf16.msra.mxu0 %v2237
        %2264 = vmatprep.subr.bf16.mxu0 0
        %2265 = vmatpush1.bf16.msra.mxu0 %v2236
        %2266 = vmatprep.subr.bf16.mxu0 0
        %2267 = vmatpush2.bf16.msra.mxu0 0
        %2268 = vmatprep.subr.bf16.mxu0 0
        %2269 = vmatpush2.bf16.msra.mxu0 0
        %2270 = vmatprep.subr.bf16.mxu0 0
        %2271 = vmatpush2.bf16.msra.mxu0 0
        %2272 = vmatprep.subr.bf16.mxu0 0
        %2273 = vmatpush2.bf16.msra.mxu0 0
        %2274 = vmatprep.subr.bf16.mxu0 0
        %2275 = vmatpush2.bf16.msra.mxu0 0
        %2276 = vmatprep.subr.bf16.mxu0 0
        %2277 = vmatpush2.bf16.msra.mxu0 0
        %2278 = vmatprep.subr.bf16.mxu0 0
        %2279 = vmatpush2.bf16.msra.mxu0 0
        %2280 = vmatprep.subr.bf16.mxu0 0
        %2281 = vmatpush2.bf16.msra.mxu0 0
        %2282 = vmatprep.mubr.bf16.mxu0 0
        %2283 = vmatmul.mubr.bf16.gmra.mxu0 %v1768
        %v2284 = vpop.f32.mrf.mxu0
        %v2285 = vadd.f32 %v2208, %v2284
        %v2286 = vpop.f32.mrf.mxu0
        %v2287 = vpop.f32.mrf.mxu0
        %v2288 = vadd.f32 %v2211, %v2287
        %v2289 = vpop.f32.mrf.mxu0
        %2290 = vdwg.mxu0
        %s2291 = scalar_lea.vmem %s4, 220
        %v2292 = vld [vmem:[%s2291] sm:$0xf]
        %v2293 = vld [vmem:[%s2291 + $0x4] sm:$0xf]
        %v2294 = vld [vmem:[%s2291 + $0x8] sm:$0xf]
        %v2295 = vld [vmem:[%s2291 + $0xc] sm:$0xf]
        %v2296 = vld [vmem:[%s2291 + $0x10] sm:$0xf]
        %v2297 = vld [vmem:[%s2291 + $0x14] sm:$0xf]
        %v2298 = vld [vmem:[%s2291 + $0x18] sm:$0xf]
        %v2299 = vld [vmem:[%s2291 + $0x1c] sm:$0xf]
        %v2300 = vld [vmem:[%s2291 + $0x20] sm:$0xf]
        %v2301 = vld [vmem:[%s2291 + $0x24] sm:$0xf]
        %v2302 = vld [vmem:[%s2291 + $0x28] sm:$0x3]
        %v2314 = vunpack.c.l.b16 %v2292
        %v2315 = vunpack.c.l.b16 %v2293
        %v2316 = vunpack.c.l.b16 %v2294
        %v2317 = vunpack.c.l.b16 %v2295
        %v2318 = vunpack.c.l.b16 %v2296
        %v2319 = vunpack.c.l.b16 %v2297
        %v2320 = vunpack.c.l.b16 %v2298
        %v2321 = vunpack.c.l.b16 %v2299
        %v2322 = vunpack.c.l.b16 %v2300
        %v2323 = vunpack.c.l.b16 %v2301
        %v2324 = vunpack.c.l.b16 %v2302
        %v2325 = vpack.c.b16 %v2315, %v2314
        %v2326 = vpack.c.b16 %v2317, %v2316
        %v2327 = vpack.c.b16 %v2319, %v2318
        %v2328 = vpack.c.b16 %v2321, %v2320
        %v2329 = vpack.c.b16 %v2323, %v2322
        %v2330 = vpack.c.b16 %v2324, %v2324
        %v2337 = vsel %vm1690, %v2330, 0
        %2339 = vmatprep.subr.bf16.mxu0 0
        %2340 = vmatpush1.bf16.msra.mxu0 0
        %2341 = vmatprep.subr.bf16.mxu0 0
        %2342 = vmatpush1.bf16.msra.mxu0 0
        %2343 = vmatprep.subr.bf16.mxu0 0
        %2344 = vmatpush1.bf16.msra.mxu0 %v2337
        %2345 = vmatprep.subr.bf16.mxu0 0
        %2346 = vmatpush1.bf16.msra.mxu0 %v2329
        %2347 = vmatprep.subr.bf16.mxu0 0
        %2348 = vmatpush1.bf16.msra.mxu0 %v2328
        %2349 = vmatprep.subr.bf16.mxu0 0
        %2350 = vmatpush1.bf16.msra.mxu0 %v2327
        %2351 = vmatprep.subr.bf16.mxu0 0
        %2352 = vmatpush1.bf16.msra.mxu0 %v2326
        %2353 = vmatprep.subr.bf16.mxu0 0
        %2354 = vmatpush1.bf16.msra.mxu0 %v2325
        %2355 = vmatprep.subr.bf16.mxu0 0
        %2356 = vmatpush2.bf16.msra.mxu0 0
        %2357 = vmatprep.subr.bf16.mxu0 0
        %2358 = vmatpush2.bf16.msra.mxu0 0
        %2359 = vmatprep.subr.bf16.mxu0 0
        %2360 = vmatpush2.bf16.msra.mxu0 0
        %2361 = vmatprep.subr.bf16.mxu0 0
        %2362 = vmatpush2.bf16.msra.mxu0 0
        %2363 = vmatprep.subr.bf16.mxu0 0
        %2364 = vmatpush2.bf16.msra.mxu0 0
        %2365 = vmatprep.subr.bf16.mxu0 0
        %2366 = vmatpush2.bf16.msra.mxu0 0
        %2367 = vmatprep.subr.bf16.mxu0 0
        %2368 = vmatpush2.bf16.msra.mxu0 0
        %2369 = vmatprep.subr.bf16.mxu0 0
        %2370 = vmatpush2.bf16.msra.mxu0 0
        %2371 = vmatprep.mubr.bf16.mxu0 0
        %2372 = vmatmul.mubr.bf16.gmra.mxu0 %v1862
        %v2373 = vpop.f32.mrf.mxu0
        %v2374 = vadd.f32 0.0, %v2373
        %v2375 = vpop.f32.mrf.mxu0
        %v2376 = vpop.f32.mrf.mxu0
        %v2377 = vadd.f32 0.0, %v2376
        %v2378 = vpop.f32.mrf.mxu0
        %2379 = vdwg.mxu0
        %v2380 = vadd.f32 %v2285, %v2374
        %v2381 = vadd.f32 %v2288, %v2377
        %s2382 = scalar_lea.vmem %s4, 308
        %v2383 = vld [vmem:[%s2382] sm:$0xf]
        %v2384 = vld [vmem:[%s2382 + $0x4] sm:$0xf]
        %v2385 = vld [vmem:[%s2382 + $0x8] sm:$0xf]
        %v2386 = vld [vmem:[%s2382 + $0xc] sm:$0xf]
        %v2387 = vld [vmem:[%s2382 + $0x10] sm:$0xf]
        %v2388 = vld [vmem:[%s2382 + $0x14] sm:$0xf]
        %v2389 = vld [vmem:[%s2382 + $0x18] sm:$0xf]
        %v2390 = vld [vmem:[%s2382 + $0x1c] sm:$0xf]
        %v2391 = vld [vmem:[%s2382 + $0x20] sm:$0xf]
        %v2392 = vld [vmem:[%s2382 + $0x24] sm:$0xf]
        %v2393 = vld [vmem:[%s2382 + $0x28] sm:$0x3]
        %v2405 = vunpack.c.l.b16 %v2383
        %v2406 = vunpack.c.l.b16 %v2384
        %v2407 = vunpack.c.l.b16 %v2385
        %v2408 = vunpack.c.l.b16 %v2386
        %v2409 = vunpack.c.l.b16 %v2387
        %v2410 = vunpack.c.l.b16 %v2388
        %v2411 = vunpack.c.l.b16 %v2389
        %v2412 = vunpack.c.l.b16 %v2390
        %v2413 = vunpack.c.l.b16 %v2391
        %v2414 = vunpack.c.l.b16 %v2392
        %v2415 = vunpack.c.l.b16 %v2393
        %v2416 = vpack.c.b16 %v2406, %v2405
        %v2417 = vpack.c.b16 %v2408, %v2407
        %v2418 = vpack.c.b16 %v2410, %v2409
        %v2419 = vpack.c.b16 %v2412, %v2411
        %v2420 = vpack.c.b16 %v2414, %v2413
        %v2421 = vpack.c.b16 %v2415, %v2415
        %v2428 = vsel %vm1690, %v2421, 0
        %2430 = vmatprep.subr.bf16.mxu0 0
        %2431 = vmatpush1.bf16.msra.mxu0 0
        %2432 = vmatprep.subr.bf16.mxu0 0
        %2433 = vmatpush1.bf16.msra.mxu0 0
        %2434 = vmatprep.subr.bf16.mxu0 0
        %2435 = vmatpush1.bf16.msra.mxu0 %v2428
        %2436 = vmatprep.subr.bf16.mxu0 0
        %2437 = vmatpush1.bf16.msra.mxu0 %v2420
        %2438 = vmatprep.subr.bf16.mxu0 0
        %2439 = vmatpush1.bf16.msra.mxu0 %v2419
        %2440 = vmatprep.subr.bf16.mxu0 0
        %2441 = vmatpush1.bf16.msra.mxu0 %v2418
        %2442 = vmatprep.subr.bf16.mxu0 0
        %2443 = vmatpush1.bf16.msra.mxu0 %v2417
        %2444 = vmatprep.subr.bf16.mxu0 0
        %2445 = vmatpush1.bf16.msra.mxu0 %v2416
        %2446 = vmatprep.subr.bf16.mxu0 0
        %2447 = vmatpush2.bf16.msra.mxu0 0
        %2448 = vmatprep.subr.bf16.mxu0 0
        %2449 = vmatpush2.bf16.msra.mxu0 0
        %2450 = vmatprep.subr.bf16.mxu0 0
        %2451 = vmatpush2.bf16.msra.mxu0 0
        %2452 = vmatprep.subr.bf16.mxu0 0
        %2453 = vmatpush2.bf16.msra.mxu0 0
        %2454 = vmatprep.subr.bf16.mxu0 0
        %2455 = vmatpush2.bf16.msra.mxu0 0
        %2456 = vmatprep.subr.bf16.mxu0 0
        %2457 = vmatpush2.bf16.msra.mxu0 0
        %2458 = vmatprep.subr.bf16.mxu0 0
        %2459 = vmatpush2.bf16.msra.mxu0 0
        %2460 = vmatprep.subr.bf16.mxu0 0
        %2461 = vmatpush2.bf16.msra.mxu0 0
        %2462 = vmatprep.mubr.bf16.mxu0 0
        %2463 = vmatmul.mubr.bf16.gmra.mxu0 %v1959
        %v2464 = vpop.f32.mrf.mxu0
        %v2465 = vadd.f32 0.0, %v2464
        %v2466 = vpop.f32.mrf.mxu0
        %v2467 = vpop.f32.mrf.mxu0
        %v2468 = vadd.f32 0.0, %v2467
        %v2469 = vpop.f32.mrf.mxu0
        %2470 = vdwg.mxu0
        %v2471 = vadd.f32 %v2380, %v2465
        %v2472 = vadd.f32 %v2381, %v2468
        %s2473 = scalar_lea.vmem %s4, 396
        %v2474 = vld [vmem:[%s2473] sm:$0xf]
        %v2475 = vld [vmem:[%s2473 + $0x4] sm:$0xf]
        %v2476 = vld [vmem:[%s2473 + $0x8] sm:$0xf]
        %v2477 = vld [vmem:[%s2473 + $0xc] sm:$0xf]
        %v2478 = vld [vmem:[%s2473 + $0x10] sm:$0xf]
        %v2479 = vld [vmem:[%s2473 + $0x14] sm:$0xf]
        %v2480 = vld [vmem:[%s2473 + $0x18] sm:$0xf]
        %v2481 = vld [vmem:[%s2473 + $0x1c] sm:$0xf]
        %v2482 = vld [vmem:[%s2473 + $0x20] sm:$0xf]
        %v2483 = vld [vmem:[%s2473 + $0x24] sm:$0xf]
        %v2484 = vld [vmem:[%s2473 + $0x28] sm:$0x3]
        %v2496 = vunpack.c.l.b16 %v2474
        %v2497 = vunpack.c.l.b16 %v2475
        %v2498 = vunpack.c.l.b16 %v2476
        %v2499 = vunpack.c.l.b16 %v2477
        %v2500 = vunpack.c.l.b16 %v2478
        %v2501 = vunpack.c.l.b16 %v2479
        %v2502 = vunpack.c.l.b16 %v2480
        %v2503 = vunpack.c.l.b16 %v2481
        %v2504 = vunpack.c.l.b16 %v2482
        %v2505 = vunpack.c.l.b16 %v2483
        %v2506 = vunpack.c.l.b16 %v2484
        %v2507 = vpack.c.b16 %v2497, %v2496
        %v2508 = vpack.c.b16 %v2499, %v2498
        %v2509 = vpack.c.b16 %v2501, %v2500
        %v2510 = vpack.c.b16 %v2503, %v2502
        %v2511 = vpack.c.b16 %v2505, %v2504
        %v2512 = vpack.c.b16 %v2506, %v2506
        %v2519 = vsel %vm1690, %v2512, 0
        %2521 = vmatprep.subr.bf16.mxu0 0
        %2522 = vmatpush1.bf16.msra.mxu0 0
        %2523 = vmatprep.subr.bf16.mxu0 0
        %2524 = vmatpush1.bf16.msra.mxu0 0
        %2525 = vmatprep.subr.bf16.mxu0 0
        %2526 = vmatpush1.bf16.msra.mxu0 %v2519
        %2527 = vmatprep.subr.bf16.mxu0 0
        %2528 = vmatpush1.bf16.msra.mxu0 %v2511
        %2529 = vmatprep.subr.bf16.mxu0 0
        %2530 = vmatpush1.bf16.msra.mxu0 %v2510
        %2531 = vmatprep.subr.bf16.mxu0 0
        %2532 = vmatpush1.bf16.msra.mxu0 %v2509
        %2533 = vmatprep.subr.bf16.mxu0 0
        %2534 = vmatpush1.bf16.msra.mxu0 %v2508
        %2535 = vmatprep.subr.bf16.mxu0 0
        %2536 = vmatpush1.bf16.msra.mxu0 %v2507
        %2537 = vmatprep.subr.bf16.mxu0 0
        %2538 = vmatpush2.bf16.msra.mxu0 0
        %2539 = vmatprep.subr.bf16.mxu0 0
        %2540 = vmatpush2.bf16.msra.mxu0 0
        %2541 = vmatprep.subr.bf16.mxu0 0
        %2542 = vmatpush2.bf16.msra.mxu0 0
        %2543 = vmatprep.subr.bf16.mxu0 0
        %2544 = vmatpush2.bf16.msra.mxu0 0
        %2545 = vmatprep.subr.bf16.mxu0 0
        %2546 = vmatpush2.bf16.msra.mxu0 0
        %2547 = vmatprep.subr.bf16.mxu0 0
        %2548 = vmatpush2.bf16.msra.mxu0 0
        %2549 = vmatprep.subr.bf16.mxu0 0
        %2550 = vmatpush2.bf16.msra.mxu0 0
        %2551 = vmatprep.subr.bf16.mxu0 0
        %2552 = vmatpush2.bf16.msra.mxu0 0
        %2553 = vmatprep.mubr.bf16.mxu0 0
        %2554 = vmatmul.mubr.bf16.gmra.mxu0 %v2054
        %v2555 = vpop.f32.mrf.mxu0
        %v2556 = vadd.f32 0.0, %v2555
        %v2557 = vpop.f32.mrf.mxu0
        %v2558 = vpop.f32.mrf.mxu0
        %v2559 = vadd.f32 0.0, %v2558
        %v2560 = vpop.f32.mrf.mxu0
        %2561 = vdwg.mxu0
        %v2562 = vadd.f32 %v2471, %v2556
        %v2563 = vadd.f32 %v2472, %v2559
        %v2564 = vadd.f32 %v2562, %v2107
        %v2565 = vadd.f32 %v2563, %v2107
        %v2566 = vmax.f32 %v2564, 0.0
        %v2567 = vmax.f32 %v2565, 0.0
        %v2568 = vadd.f32 %v2111, %v2566
        %v2569 = vadd.f32 %v2112, %v2567
        %v2570 = vmul.f32 %v2568, 0.25
        %v2571 = vmul.f32 %v2569, 0.25
        %v2572 = vld [vmem:[%s6] sm:$0x1f]
        %vm2573 = vcmask 80896
        %v2575 = vsel %vm2573, %v2572, 0
        %v2578 = vsel %vm1690, %v2571, 0
        %2580 = vmatprep.subr.mxu0 0.0
        %2581 = vmatpush1.msra.mxu0 0.0
        %2582 = vmatprep.subr.mxu0 0.0
        %2583 = vmatpush1.msra.mxu0 0.0
        %2584 = vmatprep.subr.mxu0 0.0
        %2585 = vmatpush1.msra.mxu0 0.0
        %2586 = vmatprep.subr.mxu0 0.0
        %2587 = vmatpush1.msra.mxu0 0.0
        %2588 = vmatprep.subr.mxu0 0.0
        %2589 = vmatpush1.msra.mxu0 0.0
        %2590 = vmatprep.subr.mxu0 0.0
        %2591 = vmatpush1.msra.mxu0 0.0
        %2592 = vmatprep.subr.mxu0 0.0
        %2593 = vmatpush1.msra.mxu0 0.0
        %2594 = vmatprep.subr.mxu0 0.0
        %2595 = vmatpush1.msra.mxu0 0.0
        %2596 = vmatprep.subr.mxu0 0.0
        %2597 = vmatpush1.msra.mxu0 0.0
        %2598 = vmatprep.subr.mxu0 0.0
        %2599 = vmatpush1.msra.mxu0 0.0
        %2600 = vmatprep.subr.mxu0 0.0
        %2601 = vmatpush1.msra.mxu0 0.0
        %2602 = vmatprep.subr.mxu0 0.0
        %2603 = vmatpush1.msra.mxu0 0.0
        %2604 = vmatprep.subr.mxu0 0.0
        %2605 = vmatpush1.msra.mxu0 0.0
        %2606 = vmatprep.subr.mxu0 0.0
        %2607 = vmatpush1.msra.mxu0 0.0
        %2608 = vmatprep.subr.mxu0 0.0
        %2609 = vmatpush1.msra.mxu0 %v2578
        %2610 = vmatprep.subr.mxu0 0.0
        %2611 = vmatpush1.msra.mxu0 %v2570
        %2612 = vmatprep.subr.mxu0 0.0
        %2613 = vmatpush2.msra.mxu0 0.0
        %2614 = vmatprep.subr.mxu0 0.0
        %2615 = vmatpush2.msra.mxu0 0.0
        %2616 = vmatprep.subr.mxu0 0.0
        %2617 = vmatpush2.msra.mxu0 0.0
        %2618 = vmatprep.subr.mxu0 0.0
        %2619 = vmatpush2.msra.mxu0 0.0
        %2620 = vmatprep.subr.mxu0 0.0
        %2621 = vmatpush2.msra.mxu0 0.0
        %2622 = vmatprep.subr.mxu0 0.0
        %2623 = vmatpush2.msra.mxu0 0.0
        %2624 = vmatprep.subr.mxu0 0.0
        %2625 = vmatpush2.msra.mxu0 0.0
        %2626 = vmatprep.subr.mxu0 0.0
        %2627 = vmatpush2.msra.mxu0 0.0
        %2628 = vmatprep.subr.mxu0 0.0
        %2629 = vmatpush2.msra.mxu0 0.0
        %2630 = vmatprep.subr.mxu0 0.0
        %2631 = vmatpush2.msra.mxu0 0.0
        %2632 = vmatprep.subr.mxu0 0.0
        %2633 = vmatpush2.msra.mxu0 0.0
        %2634 = vmatprep.subr.mxu0 0.0
        %2635 = vmatpush2.msra.mxu0 0.0
        %2636 = vmatprep.subr.mxu0 0.0
        %2637 = vmatpush2.msra.mxu0 0.0
        %2638 = vmatprep.subr.mxu0 0.0
        %2639 = vmatpush2.msra.mxu0 0.0
        %2640 = vmatprep.subr.mxu0 0.0
        %2641 = vmatpush2.msra.mxu0 0.0
        %2642 = vmatprep.subr.mxu0 0.0
        %2643 = vmatpush2.msra.mxu0 0.0
        %2644 = vmatprep.mubr.f32.mxu0 0.0
        %2645 = vmatmul.mubr.f32.gmra.mxu0 %v2575
        %v2646 = vpop.f32.mrf.mxu0
        %v2647 = vadd.f32 0.0, %v2646
        %v2648 = vpop.f32.mrf.mxu0
        %2649 = vdwg.mxu0
        %v2650 = vpack.c.bf16 %v2647, %v2647
        %v2651 = vld [vmem:[%s7] sm:$0xf]
        %v2652 = vld [vmem:[%s7 + $0x4] sm:$0xf]
        %v2653 = vld [vmem:[%s7 + $0x8] sm:$0xf]
        %v2654 = vld [vmem:[%s7 + $0xc] sm:$0xf]
        %v2655 = vld [vmem:[%s7 + $0x10] sm:$0xf]
        %v2656 = vld [vmem:[%s7 + $0x14] sm:$0xf]
        %v2657 = vld [vmem:[%s7 + $0x18] sm:$0xf]
        %v2658 = vld [vmem:[%s7 + $0x1c] sm:$0xf]
        %v2659 = vld [vmem:[%s7 + $0x20] sm:$0xf]
        %v2660 = vld [vmem:[%s7 + $0x24] sm:$0xf]
        %s2661 = scalar_lea.vmem %s7, 40
        %v2662 = vld [vmem:[%s2661] sm:$0xf]
        %v2663 = vld [vmem:[%s2661 + $0x4] sm:$0xf]
        %v2664 = vld [vmem:[%s2661 + $0x8] sm:$0xf]
        %v2665 = vld [vmem:[%s2661 + $0xc] sm:$0xf]
        %v2666 = vld [vmem:[%s2661 + $0x10] sm:$0xf]
        %v2667 = vld [vmem:[%s2661 + $0x14] sm:$0xf]
        %v2668 = vld [vmem:[%s2661 + $0x18] sm:$0xf]
        %v2669 = vld [vmem:[%s2661 + $0x1c] sm:$0xf]
        %v2670 = vld [vmem:[%s2661 + $0x20] sm:$0xf]
        %v2671 = vld [vmem:[%s2661 + $0x24] sm:$0xf]
        %v2673 = vshrl.u32 %v2650, 16
        %v2685 = vunpack.c.l.b16 %v2662
        %v2686 = vunpack.c.l.b16 %v2663
        %v2687 = vunpack.c.l.b16 %v2664
        %v2688 = vunpack.c.l.b16 %v2665
        %v2689 = vunpack.c.l.b16 %v2666
        %v2690 = vunpack.c.l.b16 %v2667
        %v2691 = vunpack.c.l.b16 %v2668
        %v2692 = vunpack.c.l.b16 %v2669
        %v2693 = vunpack.c.l.b16 %v2670
        %v2694 = vunpack.c.l.b16 %v2671
        %v2695 = vpack.c.b16 %v2686, %v2685
        %v2696 = vpack.c.b16 %v2688, %v2687
        %v2697 = vpack.c.b16 %v2690, %v2689
        %v2698 = vpack.c.b16 %v2692, %v2691
        %v2699 = vpack.c.b16 %v2694, %v2693
        %vm2705 = vcmask 654336
        %v2707 = vsel %vm2705, %v2673, 0
        %2709 = vmatprep.subr.bf16.mxu0 0
        %2710 = vmatpush1.bf16.msra.mxu0 0
        %2711 = vmatprep.subr.bf16.mxu0 0
        %2712 = vmatpush1.bf16.msra.mxu0 0
        %2713 = vmatprep.subr.bf16.mxu0 0
        %2714 = vmatpush1.bf16.msra.mxu0 0
        %2715 = vmatprep.subr.bf16.mxu0 0
        %2716 = vmatpush1.bf16.msra.mxu0 %v2699
        %2717 = vmatprep.subr.bf16.mxu0 0
        %2718 = vmatpush1.bf16.msra.mxu0 %v2698
        %2719 = vmatprep.subr.bf16.mxu0 0
        %2720 = vmatpush1.bf16.msra.mxu0 %v2697
        %2721 = vmatprep.subr.bf16.mxu0 0
        %2722 = vmatpush1.bf16.msra.mxu0 %v2696
        %2723 = vmatprep.subr.bf16.mxu0 0
        %2724 = vmatpush1.bf16.msra.mxu0 %v2695
        %2725 = vmatprep.subr.bf16.mxu0 0
        %2726 = vmatpush2.bf16.msra.mxu0 0
        %2727 = vmatprep.subr.bf16.mxu0 0
        %2728 = vmatpush2.bf16.msra.mxu0 0
        %2729 = vmatprep.subr.bf16.mxu0 0
        %2730 = vmatpush2.bf16.msra.mxu0 0
        %2731 = vmatprep.subr.bf16.mxu0 0
        %2732 = vmatpush2.bf16.msra.mxu0 0
        %2733 = vmatprep.subr.bf16.mxu0 0
        %2734 = vmatpush2.bf16.msra.mxu0 0
        %2735 = vmatprep.subr.bf16.mxu0 0
        %2736 = vmatpush2.bf16.msra.mxu0 0
        %2737 = vmatprep.subr.bf16.mxu0 0
        %2738 = vmatpush2.bf16.msra.mxu0 0
        %2739 = vmatprep.subr.bf16.mxu0 0
        %2740 = vmatpush2.bf16.msra.mxu0 0
        %2741 = vmatprep.mubr.bf16.mxu0 0
        %2742 = vmatmul.mubr.bf16.gmra.mxu0 %v2707
        %v2743 = vpop.f32.mrf.mxu0
        %v2744 = vadd.f32 0.0, %v2743
        %v2745 = vpop.f32.mrf.mxu0
        %v2746 = vpop.f32.mrf.mxu0
        %v2747 = vpop.f32.mrf.mxu0
        %2748 = vdwg.mxu0
        %v2759 = vunpack.c.l.b16 %v2651
        %v2760 = vunpack.c.l.b16 %v2652
        %v2761 = vunpack.c.l.b16 %v2653
        %v2762 = vunpack.c.l.b16 %v2654
        %v2763 = vunpack.c.l.b16 %v2655
        %v2764 = vunpack.c.l.b16 %v2656
        %v2765 = vunpack.c.l.b16 %v2657
        %v2766 = vunpack.c.l.b16 %v2658
        %v2767 = vunpack.c.l.b16 %v2659
        %v2768 = vunpack.c.l.b16 %v2660
        %v2769 = vpack.c.b16 %v2760, %v2759
        %v2770 = vpack.c.b16 %v2762, %v2761
        %v2771 = vpack.c.b16 %v2764, %v2763
        %v2772 = vpack.c.b16 %v2766, %v2765
        %v2773 = vpack.c.b16 %v2768, %v2767
        %v2779 = vsel %vm2705, %v2650, 0
        %2781 = vmatprep.subr.bf16.mxu0 0
        %2782 = vmatpush1.bf16.msra.mxu0 0
        %2783 = vmatprep.subr.bf16.mxu0 0
        %2784 = vmatpush1.bf16.msra.mxu0 0
        %2785 = vmatprep.subr.bf16.mxu0 0
        %2786 = vmatpush1.bf16.msra.mxu0 0
        %2787 = vmatprep.subr.bf16.mxu0 0
        %2788 = vmatpush1.bf16.msra.mxu0 %v2773
        %2789 = vmatprep.subr.bf16.mxu0 0
        %2790 = vmatpush1.bf16.msra.mxu0 %v2772
        %2791 = vmatprep.subr.bf16.mxu0 0
        %2792 = vmatpush1.bf16.msra.mxu0 %v2771
        %2793 = vmatprep.subr.bf16.mxu0 0
        %2794 = vmatpush1.bf16.msra.mxu0 %v2770
        %2795 = vmatprep.subr.bf16.mxu0 0
        %2796 = vmatpush1.bf16.msra.mxu0 %v2769
        %2797 = vmatprep.subr.bf16.mxu0 0
        %2798 = vmatpush2.bf16.msra.mxu0 0
        %2799 = vmatprep.subr.bf16.mxu0 0
        %2800 = vmatpush2.bf16.msra.mxu0 0
        %2801 = vmatprep.subr.bf16.mxu0 0
        %2802 = vmatpush2.bf16.msra.mxu0 0
        %2803 = vmatprep.subr.bf16.mxu0 0
        %2804 = vmatpush2.bf16.msra.mxu0 0
        %2805 = vmatprep.subr.bf16.mxu0 0
        %2806 = vmatpush2.bf16.msra.mxu0 0
        %2807 = vmatprep.subr.bf16.mxu0 0
        %2808 = vmatpush2.bf16.msra.mxu0 0
        %2809 = vmatprep.subr.bf16.mxu0 0
        %2810 = vmatpush2.bf16.msra.mxu0 0
        %2811 = vmatprep.subr.bf16.mxu0 0
        %2812 = vmatpush2.bf16.msra.mxu0 0
        %2813 = vmatprep.mubr.bf16.mxu0 0
        %2814 = vmatmul.mubr.bf16.gmra.mxu0 %v2779
        %v2815 = vpop.f32.mrf.mxu0
        %v2816 = vadd.f32 %v2744, %v2815
        %v2817 = vpop.f32.mrf.mxu0
        %v2818 = vpop.f32.mrf.mxu0
        %v2819 = vpop.f32.mrf.mxu0
        %2820 = vdwg.mxu0
        %s2821 = scalar_lea.vmem %s7, 80
        %v2822 = vld [vmem:[%s2821] sm:$0xf]
        %v2823 = vld [vmem:[%s2821 + $0x4] sm:$0xf]
        %v2824 = vld [vmem:[%s2821 + $0x8] sm:$0xf]
        %v2825 = vld [vmem:[%s2821 + $0xc] sm:$0xf]
        %v2826 = vld [vmem:[%s2821 + $0x10] sm:$0xf]
        %v2827 = vld [vmem:[%s2821 + $0x14] sm:$0xf]
        %v2828 = vld [vmem:[%s2821 + $0x18] sm:$0xf]
        %v2829 = vld [vmem:[%s2821 + $0x1c] sm:$0xf]
        %v2830 = vld [vmem:[%s2821 + $0x20] sm:$0xf]
        %v2831 = vld [vmem:[%s2821 + $0x24] sm:$0xf]
        %v2833 = vrot.slane %v2650, 1
        %v2844 = vunpack.c.l.b16 %v2822
        %v2845 = vunpack.c.l.b16 %v2823
        %v2846 = vunpack.c.l.b16 %v2824
        %v2847 = vunpack.c.l.b16 %v2825
        %v2848 = vunpack.c.l.b16 %v2826
        %v2849 = vunpack.c.l.b16 %v2827
        %v2850 = vunpack.c.l.b16 %v2828
        %v2851 = vunpack.c.l.b16 %v2829
        %v2852 = vunpack.c.l.b16 %v2830
        %v2853 = vunpack.c.l.b16 %v2831
        %v2854 = vpack.c.b16 %v2845, %v2844
        %v2855 = vpack.c.b16 %v2847, %v2846
        %v2856 = vpack.c.b16 %v2849, %v2848
        %v2857 = vpack.c.b16 %v2851, %v2850
        %v2858 = vpack.c.b16 %v2853, %v2852
        %v2865 = vsel %vm2705, %v2833, 0
        %2867 = vmatprep.subr.bf16.mxu0 0
        %2868 = vmatpush1.bf16.msra.mxu0 0
        %2869 = vmatprep.subr.bf16.mxu0 0
        %2870 = vmatpush1.bf16.msra.mxu0 0
        %2871 = vmatprep.subr.bf16.mxu0 0
        %2872 = vmatpush1.bf16.msra.mxu0 0
        %2873 = vmatprep.subr.bf16.mxu0 0
        %2874 = vmatpush1.bf16.msra.mxu0 %v2858
        %2875 = vmatprep.subr.bf16.mxu0 0
        %2876 = vmatpush1.bf16.msra.mxu0 %v2857
        %2877 = vmatprep.subr.bf16.mxu0 0
        %2878 = vmatpush1.bf16.msra.mxu0 %v2856
        %2879 = vmatprep.subr.bf16.mxu0 0
        %2880 = vmatpush1.bf16.msra.mxu0 %v2855
        %2881 = vmatprep.subr.bf16.mxu0 0
        %2882 = vmatpush1.bf16.msra.mxu0 %v2854
        %2883 = vmatprep.subr.bf16.mxu0 0
        %2884 = vmatpush2.bf16.msra.mxu0 0
        %2885 = vmatprep.subr.bf16.mxu0 0
        %2886 = vmatpush2.bf16.msra.mxu0 0
        %2887 = vmatprep.subr.bf16.mxu0 0
        %2888 = vmatpush2.bf16.msra.mxu0 0
        %2889 = vmatprep.subr.bf16.mxu0 0
        %2890 = vmatpush2.bf16.msra.mxu0 0
        %2891 = vmatprep.subr.bf16.mxu0 0
        %2892 = vmatpush2.bf16.msra.mxu0 0
        %2893 = vmatprep.subr.bf16.mxu0 0
        %2894 = vmatpush2.bf16.msra.mxu0 0
        %2895 = vmatprep.subr.bf16.mxu0 0
        %2896 = vmatpush2.bf16.msra.mxu0 0
        %2897 = vmatprep.subr.bf16.mxu0 0
        %2898 = vmatpush2.bf16.msra.mxu0 0
        %2899 = vmatprep.mubr.bf16.mxu0 0
        %2900 = vmatmul.mubr.bf16.gmra.mxu0 %v2865
        %v2901 = vpop.f32.mrf.mxu0
        %v2902 = vadd.f32 0.0, %v2901
        %v2903 = vpop.f32.mrf.mxu0
        %v2904 = vpop.f32.mrf.mxu0
        %v2905 = vpop.f32.mrf.mxu0
        %2906 = vdwg.mxu0
        %v2907 = vadd.f32 %v2816, %v2902
        %s2908 = scalar_lea.vmem %s7, 120
        %v2909 = vld [vmem:[%s2908] sm:$0xf]
        %v2910 = vld [vmem:[%s2908 + $0x4] sm:$0xf]
        %v2911 = vld [vmem:[%s2908 + $0x8] sm:$0xf]
        %v2912 = vld [vmem:[%s2908 + $0xc] sm:$0xf]
        %v2913 = vld [vmem:[%s2908 + $0x10] sm:$0xf]
        %v2914 = vld [vmem:[%s2908 + $0x14] sm:$0xf]
        %v2915 = vld [vmem:[%s2908 + $0x18] sm:$0xf]
        %v2916 = vld [vmem:[%s2908 + $0x1c] sm:$0xf]
        %v2917 = vld [vmem:[%s2908 + $0x20] sm:$0xf]
        %v2918 = vld [vmem:[%s2908 + $0x24] sm:$0xf]
        %v2919 = vrot.slane %v2673, 1
        %v2930 = vunpack.c.l.b16 %v2909
        %v2931 = vunpack.c.l.b16 %v2910
        %v2932 = vunpack.c.l.b16 %v2911
        %v2933 = vunpack.c.l.b16 %v2912
        %v2934 = vunpack.c.l.b16 %v2913
        %v2935 = vunpack.c.l.b16 %v2914
        %v2936 = vunpack.c.l.b16 %v2915
        %v2937 = vunpack.c.l.b16 %v2916
        %v2938 = vunpack.c.l.b16 %v2917
        %v2939 = vunpack.c.l.b16 %v2918
        %v2940 = vpack.c.b16 %v2931, %v2930
        %v2941 = vpack.c.b16 %v2933, %v2932
        %v2942 = vpack.c.b16 %v2935, %v2934
        %v2943 = vpack.c.b16 %v2937, %v2936
        %v2944 = vpack.c.b16 %v2939, %v2938
        %v2951 = vsel %vm2705, %v2919, 0
        %2953 = vmatprep.subr.bf16.mxu0 0
        %2954 = vmatpush1.bf16.msra.mxu0 0
        %2955 = vmatprep.subr.bf16.mxu0 0
        %2956 = vmatpush1.bf16.msra.mxu0 0
        %2957 = vmatprep.subr.bf16.mxu0 0
        %2958 = vmatpush1.bf16.msra.mxu0 0
        %2959 = vmatprep.subr.bf16.mxu0 0
        %2960 = vmatpush1.bf16.msra.mxu0 %v2944
        %2961 = vmatprep.subr.bf16.mxu0 0
        %2962 = vmatpush1.bf16.msra.mxu0 %v2943
        %2963 = vmatprep.subr.bf16.mxu0 0
        %2964 = vmatpush1.bf16.msra.mxu0 %v2942
        %2965 = vmatprep.subr.bf16.mxu0 0
        %2966 = vmatpush1.bf16.msra.mxu0 %v2941
        %2967 = vmatprep.subr.bf16.mxu0 0
        %2968 = vmatpush1.bf16.msra.mxu0 %v2940
        %2969 = vmatprep.subr.bf16.mxu0 0
        %2970 = vmatpush2.bf16.msra.mxu0 0
        %2971 = vmatprep.subr.bf16.mxu0 0
        %2972 = vmatpush2.bf16.msra.mxu0 0
        %2973 = vmatprep.subr.bf16.mxu0 0
        %2974 = vmatpush2.bf16.msra.mxu0 0
        %2975 = vmatprep.subr.bf16.mxu0 0
        %2976 = vmatpush2.bf16.msra.mxu0 0
        %2977 = vmatprep.subr.bf16.mxu0 0
        %2978 = vmatpush2.bf16.msra.mxu0 0
        %2979 = vmatprep.subr.bf16.mxu0 0
        %2980 = vmatpush2.bf16.msra.mxu0 0
        %2981 = vmatprep.subr.bf16.mxu0 0
        %2982 = vmatpush2.bf16.msra.mxu0 0
        %2983 = vmatprep.subr.bf16.mxu0 0
        %2984 = vmatpush2.bf16.msra.mxu0 0
        %2985 = vmatprep.mubr.bf16.mxu0 0
        %2986 = vmatmul.mubr.bf16.gmra.mxu0 %v2951
        %v2987 = vpop.f32.mrf.mxu0
        %v2988 = vadd.f32 0.0, %v2987
        %v2989 = vpop.f32.mrf.mxu0
        %v2990 = vpop.f32.mrf.mxu0
        %v2991 = vpop.f32.mrf.mxu0
        %2992 = vdwg.mxu0
        %v2993 = vadd.f32 %v2907, %v2988
        %s2994 = scalar_lea.vmem %s7, 160
        %v2995 = vld [vmem:[%s2994] sm:$0xf]
        %v2996 = vld [vmem:[%s2994 + $0x4] sm:$0xf]
        %v2997 = vld [vmem:[%s2994 + $0x8] sm:$0xf]
        %v2998 = vld [vmem:[%s2994 + $0xc] sm:$0xf]
        %v2999 = vld [vmem:[%s2994 + $0x10] sm:$0xf]
        %v3000 = vld [vmem:[%s2994 + $0x14] sm:$0xf]
        %v3001 = vld [vmem:[%s2994 + $0x18] sm:$0xf]
        %v3002 = vld [vmem:[%s2994 + $0x1c] sm:$0xf]
        %v3003 = vld [vmem:[%s2994 + $0x20] sm:$0xf]
        %v3004 = vld [vmem:[%s2994 + $0x24] sm:$0xf]
        %v3005 = vrot.slane %v2650, 2
        %v3016 = vunpack.c.l.b16 %v2995
        %v3017 = vunpack.c.l.b16 %v2996
        %v3018 = vunpack.c.l.b16 %v2997
        %v3019 = vunpack.c.l.b16 %v2998
        %v3020 = vunpack.c.l.b16 %v2999
        %v3021 = vunpack.c.l.b16 %v3000
        %v3022 = vunpack.c.l.b16 %v3001
        %v3023 = vunpack.c.l.b16 %v3002
        %v3024 = vunpack.c.l.b16 %v3003
        %v3025 = vunpack.c.l.b16 %v3004
        %v3026 = vpack.c.b16 %v3017, %v3016
        %v3027 = vpack.c.b16 %v3019, %v3018
        %v3028 = vpack.c.b16 %v3021, %v3020
        %v3029 = vpack.c.b16 %v3023, %v3022
        %v3030 = vpack.c.b16 %v3025, %v3024
        %v3037 = vsel %vm2705, %v3005, 0
        %3039 = vmatprep.subr.bf16.mxu0 0
        %3040 = vmatpush1.bf16.msra.mxu0 0
        %3041 = vmatprep.subr.bf16.mxu0 0
        %3042 = vmatpush1.bf16.msra.mxu0 0
        %3043 = vmatprep.subr.bf16.mxu0 0
        %3044 = vmatpush1.bf16.msra.mxu0 0
        %3045 = vmatprep.subr.bf16.mxu0 0
        %3046 = vmatpush1.bf16.msra.mxu0 %v3030
        %3047 = vmatprep.subr.bf16.mxu0 0
        %3048 = vmatpush1.bf16.msra.mxu0 %v3029
        %3049 = vmatprep.subr.bf16.mxu0 0
        %3050 = vmatpush1.bf16.msra.mxu0 %v3028
        %3051 = vmatprep.subr.bf16.mxu0 0
        %3052 = vmatpush1.bf16.msra.mxu0 %v3027
        %3053 = vmatprep.subr.bf16.mxu0 0
        %3054 = vmatpush1.bf16.msra.mxu0 %v3026
        %3055 = vmatprep.subr.bf16.mxu0 0
        %3056 = vmatpush2.bf16.msra.mxu0 0
        %3057 = vmatprep.subr.bf16.mxu0 0
        %3058 = vmatpush2.bf16.msra.mxu0 0
        %3059 = vmatprep.subr.bf16.mxu0 0
        %3060 = vmatpush2.bf16.msra.mxu0 0
        %3061 = vmatprep.subr.bf16.mxu0 0
        %3062 = vmatpush2.bf16.msra.mxu0 0
        %3063 = vmatprep.subr.bf16.mxu0 0
        %3064 = vmatpush2.bf16.msra.mxu0 0
        %3065 = vmatprep.subr.bf16.mxu0 0
        %3066 = vmatpush2.bf16.msra.mxu0 0
        %3067 = vmatprep.subr.bf16.mxu0 0
        %3068 = vmatpush2.bf16.msra.mxu0 0
        %3069 = vmatprep.subr.bf16.mxu0 0
        %3070 = vmatpush2.bf16.msra.mxu0 0
        %3071 = vmatprep.mubr.bf16.mxu0 0
        %3072 = vmatmul.mubr.bf16.gmra.mxu0 %v3037
        %v3073 = vpop.f32.mrf.mxu0
        %v3074 = vadd.f32 0.0, %v3073
        %v3075 = vpop.f32.mrf.mxu0
        %v3076 = vpop.f32.mrf.mxu0
        %v3077 = vpop.f32.mrf.mxu0
        %3078 = vdwg.mxu0
        %v3079 = vadd.f32 %v2993, %v3074
        %v3080 = vld [vmem:[%s8] sm:$0x1]
        %v3081 = vadd.f32 %v3079, %v3080
        %v3082 = vmax.f32 %v3081, 0.0
        %v3083 = vpack.c.bf16 %v3082, %v3082
        %v3084 = vld [vmem:[%s9] sm:$0xf]
        %v3085 = vld [vmem:[%s9 + $0x4] sm:$0xf]
        %v3086 = vld [vmem:[%s9 + $0x8] sm:$0xf]
        %v3087 = vld [vmem:[%s9 + $0xc] sm:$0xf]
        %v3088 = vld [vmem:[%s9 + $0x10] sm:$0xf]
        %v3089 = vld [vmem:[%s9 + $0x14] sm:$0xf]
        %v3090 = vld [vmem:[%s9 + $0x18] sm:$0xf]
        %v3091 = vld [vmem:[%s9 + $0x1c] sm:$0xf]
        %v3092 = vld [vmem:[%s9 + $0x20] sm:$0xf]
        %v3093 = vld [vmem:[%s9 + $0x24] sm:$0xf]
        %v3094 = vld [vmem:[%s9 + $0x28] sm:$0xf]
        %v3095 = vld [vmem:[%s9 + $0x2c] sm:$0xf]
        %v3096 = vld [vmem:[%s9 + $0x30] sm:$0xf]
        %v3097 = vld [vmem:[%s9 + $0x34] sm:$0xf]
        %v3098 = vld [vmem:[%s9 + $0x38] sm:$0xf]
        %v3099 = vld [vmem:[%s10] sm:$0x1]
        %v3115 = vunpack.c.l.b16 %v3084
        %v3116 = vunpack.c.l.b16 %v3085
        %v3117 = vunpack.c.l.b16 %v3086
        %v3118 = vunpack.c.l.b16 %v3087
        %v3119 = vunpack.c.l.b16 %v3088
        %v3120 = vunpack.c.l.b16 %v3089
        %v3121 = vunpack.c.l.b16 %v3090
        %v3122 = vunpack.c.l.b16 %v3091
        %v3123 = vunpack.c.l.b16 %v3092
        %v3124 = vunpack.c.l.b16 %v3093
        %v3125 = vunpack.c.l.b16 %v3094
        %v3126 = vunpack.c.l.b16 %v3095
        %v3127 = vunpack.c.l.b16 %v3096
        %v3128 = vunpack.c.l.b16 %v3097
        %v3129 = vunpack.c.l.b16 %v3098
        %v3130 = vpack.c.b16 %v3116, %v3115
        %v3131 = vpack.c.b16 %v3118, %v3117
        %v3132 = vpack.c.b16 %v3120, %v3119
        %v3133 = vpack.c.b16 %v3122, %v3121
        %v3134 = vpack.c.b16 %v3124, %v3123
        %v3135 = vpack.c.b16 %v3126, %v3125
        %v3136 = vpack.c.b16 %v3128, %v3127
        %v3137 = vpack.c.b16 %v3129, %v3129
        %vm3145 = vcmask 982016
        %v3147 = vsel %vm3145, %v3083, 0
        %v3150 = vsel %vm1543, %v3137, 0
        %3152 = vmatprep.subr.bf16.mxu0 0
        %3153 = vmatpush1.bf16.msra.mxu0 %v3150
        %3154 = vmatprep.subr.bf16.mxu0 0
        %3155 = vmatpush1.bf16.msra.mxu0 %v3136
        %3156 = vmatprep.subr.bf16.mxu0 0
        %3157 = vmatpush1.bf16.msra.mxu0 %v3135
        %3158 = vmatprep.subr.bf16.mxu0 0
        %3159 = vmatpush1.bf16.msra.mxu0 %v3134
        %3160 = vmatprep.subr.bf16.mxu0 0
        %3161 = vmatpush1.bf16.msra.mxu0 %v3133
        %3162 = vmatprep.subr.bf16.mxu0 0
        %3163 = vmatpush1.bf16.msra.mxu0 %v3132
        %3164 = vmatprep.subr.bf16.mxu0 0
        %3165 = vmatpush1.bf16.msra.mxu0 %v3131
        %3166 = vmatprep.subr.bf16.mxu0 0
        %3167 = vmatpush1.bf16.msra.mxu0 %v3130
        %3168 = vmatprep.subr.bf16.mxu0 0
        %3169 = vmatpush2.bf16.msra.mxu0 0
        %3170 = vmatprep.subr.bf16.mxu0 0
        %3171 = vmatpush2.bf16.msra.mxu0 0
        %3172 = vmatprep.subr.bf16.mxu0 0
        %3173 = vmatpush2.bf16.msra.mxu0 0
        %3174 = vmatprep.subr.bf16.mxu0 0
        %3175 = vmatpush2.bf16.msra.mxu0 0
        %3176 = vmatprep.subr.bf16.mxu0 0
        %3177 = vmatpush2.bf16.msra.mxu0 0
        %3178 = vmatprep.subr.bf16.mxu0 0
        %3179 = vmatpush2.bf16.msra.mxu0 0
        %3180 = vmatprep.subr.bf16.mxu0 0
        %3181 = vmatpush2.bf16.msra.mxu0 0
        %3182 = vmatprep.subr.bf16.mxu0 0
        %3183 = vmatpush2.bf16.msra.mxu0 0
        %3184 = vmatprep.mubr.bf16.mxu0 0
        %3185 = vmatmul.mubr.bf16.gmra.mxu0 %v3147
        %v3186 = vpop.f32.mrf.mxu0
        %v3187 = vadd.f32 %v3099, %v3186
        %v3188 = vpop.f32.mrf.mxu0
        %v3189 = vpop.f32.mrf.mxu0
        %v3190 = vpop.f32.mrf.mxu0
        %3191 = vdwg.mxu0
        %v3192 = vmax.f32 %v3187, 0.0
        %v3193 = vpack.c.bf16 %v3192, %v3192
        %v3194 = vld [vmem:[%s11] sm:$0xf]
        %v3195 = vld [vmem:[%s11 + $0x4] sm:$0xf]
        %v3196 = vld [vmem:[%s11 + $0x8] sm:$0xf]
        %v3197 = vld [vmem:[%s11 + $0xc] sm:$0xf]
        %v3198 = vld [vmem:[%s11 + $0x10] sm:$0xf]
        %v3199 = vld [vmem:[%s11 + $0x14] sm:$0xf]
        %v3200 = vld [vmem:[%s11 + $0x18] sm:$0xf]
        %v3201 = vld [vmem:[%s11 + $0x1c] sm:$0xf]
        %v3202 = vld [vmem:[%s11 + $0x20] sm:$0xf]
        %v3203 = vld [vmem:[%s11 + $0x24] sm:$0xf]
        %v3204 = vld [vmem:[%s11 + $0x28] sm:$0x3]
        %v3205 = vld [vmem:[%s12] sm:$0x1]
        %v3217 = vunpack.c.l.b16 %v3194
        %v3218 = vunpack.c.l.b16 %v3195
        %v3219 = vunpack.c.l.b16 %v3196
        %v3220 = vunpack.c.l.b16 %v3197
        %v3221 = vunpack.c.l.b16 %v3198
        %v3222 = vunpack.c.l.b16 %v3199
        %v3223 = vunpack.c.l.b16 %v3200
        %v3224 = vunpack.c.l.b16 %v3201
        %v3225 = vunpack.c.l.b16 %v3202
        %v3226 = vunpack.c.l.b16 %v3203
        %v3227 = vunpack.c.l.b16 %v3204
        %v3228 = vpack.c.b16 %v3218, %v3217
        %v3229 = vpack.c.b16 %v3220, %v3219
        %v3230 = vpack.c.b16 %v3222, %v3221
        %v3231 = vpack.c.b16 %v3224, %v3223
        %v3232 = vpack.c.b16 %v3226, %v3225
        %v3233 = vpack.c.b16 %v3227, %v3227
        %v3240 = vsel %vm1686, %v3193, 0
        %v3243 = vsel %vm1690, %v3233, 0
        %3245 = vmatprep.subr.bf16.mxu0 0
        %3246 = vmatpush1.bf16.msra.mxu0 0
        %3247 = vmatprep.subr.bf16.mxu0 0
        %3248 = vmatpush1.bf16.msra.mxu0 0
        %3249 = vmatprep.subr.bf16.mxu0 0
        %3250 = vmatpush1.bf16.msra.mxu0 %v3243
        %3251 = vmatprep.subr.bf16.mxu0 0
        %3252 = vmatpush1.bf16.msra.mxu0 %v3232
        %3253 = vmatprep.subr.bf16.mxu0 0
        %3254 = vmatpush1.bf16.msra.mxu0 %v3231
        %3255 = vmatprep.subr.bf16.mxu0 0
        %3256 = vmatpush1.bf16.msra.mxu0 %v3230
        %3257 = vmatprep.subr.bf16.mxu0 0
        %3258 = vmatpush1.bf16.msra.mxu0 %v3229
        %3259 = vmatprep.subr.bf16.mxu0 0
        %3260 = vmatpush1.bf16.msra.mxu0 %v3228
        %3261 = vmatprep.subr.bf16.mxu0 0
        %3262 = vmatpush2.bf16.msra.mxu0 0
        %3263 = vmatprep.subr.bf16.mxu0 0
        %3264 = vmatpush2.bf16.msra.mxu0 0
        %3265 = vmatprep.subr.bf16.mxu0 0
        %3266 = vmatpush2.bf16.msra.mxu0 0
        %3267 = vmatprep.subr.bf16.mxu0 0
        %3268 = vmatpush2.bf16.msra.mxu0 0
        %3269 = vmatprep.subr.bf16.mxu0 0
        %3270 = vmatpush2.bf16.msra.mxu0 0
        %3271 = vmatprep.subr.bf16.mxu0 0
        %3272 = vmatpush2.bf16.msra.mxu0 0
        %3273 = vmatprep.subr.bf16.mxu0 0
        %3274 = vmatpush2.bf16.msra.mxu0 0
        %3275 = vmatprep.subr.bf16.mxu0 0
        %3276 = vmatpush2.bf16.msra.mxu0 0
        %3277 = vmatprep.mubr.bf16.mxu0 0
        %3278 = vmatmul.mubr.bf16.gmra.mxu0 %v3240
        %v3279 = vpop.f32.mrf.mxu0
        %v3280 = vadd.f32 %v3205, %v3279
        %v3281 = vpop.f32.mrf.mxu0
        %v3282 = vpop.f32.mrf.mxu0
        %v3283 = vpop.f32.mrf.mxu0
        %3284 = vdwg.mxu0
        %3285 = vst [vmem:[%s432] sm:$0x1] %v3280
        %s3286 = sand.u32 %s313, 1
        %s3287 = scalar_lea.sflag [#allocation3], %s3286
        %s3288 = sand.u32 %s313, 1
        %s3289 = scalar_lea.vmem [#allocation2], %s3288
        // Predicated region
        $region73: #{lenet5_forward.1} parent=71 // pred_check
          %p3290 = pneg %p323
        $region74: #{lenet5_forward.1} parent=71 // pred_check_branch
          %3292 = sbr.rel (%p3290) target = $region76
        $region75: #{lenet5_forward.1} parent=71 // pred_region
          %s3294 = ssub.s32 16, 16
          %3295 = vsyncadd %s3287, %s3294
          %s3296 = smul.addr %s27, 16
          %s3297 = scalar_lea.hbm %s13, %s3296
          %s3299 = sshll.u32 %s3289, 4
          %s3300 = int_to_ptr.vmem [resolvable:$true] %s3299
          %3302 = dma.vmem_to_hbm [thread:$0]  %s3300, 16, %s3297, %s3287
        $region76: #{lenet5_forward.1} parent=71 // pred_fallthru
          _
      $region72: #{lenet5_forward.1} parent=5 // pred_fallthru
        _
      %p3303 = scmp.le.s32.totalorder 2, %s22
      // Predicated region
      $region77: #{lenet5_forward.1} parent=5 // pred_check
        %p3304 = pneg %p3303
      $region78: #{lenet5_forward.1} parent=5 // pred_check_branch
        %3306 = sbr.rel (%p3304) target = $region80
      $region79: #{lenet5_forward.1} parent=5 // pred_region
        %s3307 = ssub.s32 %s22, 2
        // Predicated region
        $region81: #{lenet5_forward.1} parent=79 // pred_check
          %p3308 = pneg %p329
        $region82: #{lenet5_forward.1} parent=79 // pred_check_branch
          %3310 = sbr.rel (%p3308) target = $region84
        $region83: #{lenet5_forward.1} parent=79 // pred_region
          %s3311 = sand.u32 %s314, 1
          %s3312 = scalar_lea.sflag [#allocation3], %s3311
          %s3313 = sand.u32 %s314, 1
          %s3314 = scalar_lea.vmem [#allocation2], %s3313
          %3315 = dma.done %s3312, 16
        $region84: #{lenet5_forward.1} parent=79 // pred_fallthru
          _
      $region80: #{lenet5_forward.1} parent=5 // pred_fallthru
        _
    $region6: #{lenet5_forward.1} parent=1 // loop_footer
      %s26 = sadd.s32 1, %s22
    $region7: #{lenet5_forward.1} parent=1 // loop_footer_branch
      %21 = sbr.rel target = $region3
    $region8: #{lenet5_forward.1} parent=1 // loop_exit
      _
    %3316 = vsyncpa [#allocation3], 1
    %s3317 = scalar_lea.sflag [#allocation3], 1
    %3318 = vsyncpa %s3317, 1

</llo_original>
